<compile_context>
chip_gen: v7x
topology: tpu7x:2x2x1
jax: 0.10.0
libtpu: 0.0.40
codegen_flags: <defaults>
</compile_context>

<pallas_src>
import functools

import jax
import jax.numpy as jnp
from jax.experimental import pallas as pl
from jax.experimental.pallas import tpu as pltpu


def _round_up(n, m):
    return (n + m - 1) // m * m


def _pick_h_chunk(Hp, h_chunk):
    """Largest multiple of 128 that divides Hp and is <= h_chunk (floor 128)."""
    hc = max(128, min(_round_up(h_chunk, 128), Hp))
    hc = (hc // 128) * 128
    while Hp % hc != 0:
        hc -= 128
    return hc


def _vmem_limit_bytes():
    try:
        cap = int(pltpu.get_tpu_info().vmem_capacity_bytes)
    except Exception:
        cap = 64 * 1024 * 1024          # safe on every generation (v7x per-TC VMEM)
    return min(int(cap * 0.85), 110 * 1024 * 1024)


def _layer_norm_store(y, g_ref, beta_ref, o_ref, *, eps, d_true):
    # Padded feature columns of y are exactly zero by construction, so plain sums
    # divided by the *true* D give the correct moments; one reduction pass via
    # E[y^2] - mean^2 (no lane mask).  gamma/beta padding is zero, so padded output
    # columns come out zero and are sliced off by the wrapper.
    inv_d = 1.0 / d_true
    mean = jnp.sum(y, axis=-1, keepdims=True) * inv_d
    mean_sq = jnp.sum(y * y, axis=-1, keepdims=True) * inv_d
    var = jnp.maximum(mean_sq - mean * mean, 0.0)
    out = (y - mean) * jax.lax.rsqrt(var + eps)
    out = out * g_ref[...].astype(jnp.float32) + beta_ref[...].astype(jnp.float32)
    o_ref[...] = out.astype(o_ref.dtype)


def _ffn_resident_kernel(x_ref, w1_ref, b1_ref, w2_ref, b2_ref, g_ref, beta_ref,
                         o_ref, acc_ref, *, eps, d_true, h_chunk, n_chunks, precision):
    # x_ref: (tm, Dp)   w1: (Dp, Hp)   b1: (1, Hp)   w2: (Hp, Dp)
    # b2 / gamma / beta: (1, Dp)       acc_ref: (tm, Dp) f32 scratch.
    x = x_ref[...]                                   # native dtype -> MXU operand
    # Fold residual + fc2 bias into the accumulator init (dropout p=0.0 is identity).
    acc_ref[...] = x.astype(jnp.float32) + b2_ref[...].astype(jnp.float32)

    if n_chunks == 1:
        h = jnp.dot(x, w1_ref[...], preferred_element_type=jnp.float32,
                    precision=precision)
        h = jnp.maximum(h + b1_ref[...].astype(jnp.float32), 0.0)
        acc_ref[...] += jnp.dot(h.astype(w2_ref.dtype), w2_ref[...],
                                preferred_element_type=jnp.float32,
                                precision=precision)
    else:
        def chunk(c, carry):
            lo = pl.multiple_of(c * h_chunk, 128)
            h = jnp.dot(x, w1_ref[:, pl.ds(lo, h_chunk)],
                        preferred_element_type=jnp.float32, precision=precision)
            h = jnp.maximum(h + b1_ref[:, pl.ds(lo, h_chunk)].astype(jnp.float32), 0.0)
            acc_ref[...] += jnp.dot(h.astype(w2_ref.dtype),
                                    w2_ref[pl.ds(lo, h_chunk), :],
                                    preferred_element_type=jnp.float32,
                                    precision=precision)
            return carry

        jax.lax.fori_loop(0, n_chunks, chunk, 0, unroll=n_chunks <= 4)

    _layer_norm_store(acc_ref[...], g_ref, beta_ref, o_ref, eps=eps, d_true=d_true)


def _ffn_stream_kernel(x_ref, w1_ref, b1_ref, w2_ref, b2_ref, g_ref, beta_ref,
                       o_ref, acc_ref, *, eps, d_true, precision):
    # Weight-streaming path: grid = (M tiles, H chunks); W1/W2 chunks are pipelined
    # over the inner ("arbitrary") H axis, output/accumulator resident across it.
    h_idx = pl.program_id(1)
    x = x_ref[...]

    @pl.when(h_idx == 0)
    def _():
        acc_ref[...] = x.astype(jnp.float32) + b2_ref[...].astype(jnp.float32)

    h = jnp.dot(x, w1_ref[...], preferred_element_type=jnp.float32, precision=precision)
    h = jnp.maximum(h + b1_ref[...].astype(jnp.float32), 0.0)
    acc_ref[...] += jnp.dot(h.astype(w2_ref.dtype), w2_ref[...],
                            preferred_element_type=jnp.float32, precision=precision)

    @pl.when(h_idx == pl.num_programs(1) - 1)
    def _():
        _layer_norm_store(acc_ref[...], g_ref, beta_ref, o_ref, eps=eps, d_true=d_true)


def position_wise_feed_forward(x, w1, b1, w2, b2, gamma, beta, *,
                               eps=1e-5, tile_m=512, h_chunk=1024,
                               precision=None, force_stream=False):
    """x: (B, S, D). w1: (D, H), b1: (H,), w2: (H, D), b2/gamma/beta: (D,) -> (B, S, D)."""
    B, S, D = x.shape
    H = w1.shape[1]
    M = B * S
    dtype = x.dtype
    itemsize = dtype.itemsize
    w_itemsize = w1.dtype.itemsize

    # Lane-dense feature dims.
    Dp = _round_up(D, 128)
    Hp = _round_up(H, 128)

    vmem_limit = _vmem_limit_bytes()

    # Padded weight footprint (single buffer) decides resident vs. streaming.
    wbytes = (Dp * Hp + Hp * Dp) * w_itemsize
    use_stream = force_stream or wbytes > int(0.55 * vmem_limit)

    hc = _pick_h_chunk(Hp, h_chunk)

    # Row tile: big for amortization, but keep >= 2 grid steps so the "parallel"
    # M axis can be split across TensorCores (v7x megacore) on small inputs.
    tm = _round_up(min(tile_m, _round_up(M, 8)), 8)
    if M > 8 and _round_up(M, tm) // tm < 2:
        tm = _round_up(pl.cdiv(M, 2), 8)

    def footprint(tm_, hc_):
        io = 2 * 2 * tm_ * Dp * itemsize            # x + out tiles, double-buffered
        scratch = tm_ * Dp * 4 + tm_ * hc_ * 4      # f32 accumulator + live hidden chunk
        if use_stream:
            w_res = 2 * 2 * Dp * hc_ * w_itemsize   # streamed W1/W2 chunks, double-buffered
        else:
            w_res = wbytes                          # whole weights, single-buffered
        return io + scratch + w_res

    while tm > 8 and footprint(tm, hc) > int(0.9 * vmem_limit):
        tm = _round_up(tm // 2, 8)
    while use_stream and hc > 128 and footprint(tm, hc) > int(0.9 * vmem_limit):
        hc = _pick_h_chunk(Hp, hc - 128)

    Mp = _round_up(M, tm)

    # Zero-pad only when actually needed (pads are extra HBM traffic outside the kernel).
    x2 = x.reshape(M, D)
    if Mp != M or Dp != D:
        x2 = jnp.pad(x2, ((0, Mp - M), (0, Dp - D)))
    w1p = w1 if (Dp == D and Hp == H) else jnp.pad(w1, ((0, Dp - D), (0, Hp - H)))
    w2p = w2 if (Dp == D and Hp == H) else jnp.pad(w2, ((0, Hp - H), (0, Dp - D)))
    b1p = (b1 if Hp == H else jnp.pad(b1, (0, Hp - H))).reshape(1, Hp)
    b2p = (b2 if Dp == D else jnp.pad(b2, (0, Dp - D))).reshape(1, Dp)
    gp = (gamma if Dp == D else jnp.pad(gamma, (0, Dp - D))).reshape(1, Dp)
    bp = (beta if Dp == D else jnp.pad(beta, (0, Dp - D))).reshape(1, Dp)

    cost = pl.CostEstimate(
        flops=int(4 * M * D * H + 10 * M * D),
        transcendentals=int(M),
        bytes_accessed=int(2 * M * D * itemsize + 2 * D * H * w_itemsize
                           + (H + 3 * D) * itemsize))

    out_shape = jax.ShapeDtypeStruct((Mp, Dp), dtype)

    def call_resident(single_buffer_weights):
        def cspec(shape):
            # Constant index_map across the grid: single buffer is enough.
            if single_buffer_weights:
                return pl.BlockSpec(shape, lambda i: (0,) * len(shape),
                                    pipeline_mode=pl.Buffered(1))
            return pl.BlockSpec(shape, lambda i: (0,) * len(shape))

        kernel = functools.partial(_ffn_resident_kernel, eps=eps, d_true=D,
                                   h_chunk=hc, n_chunks=Hp // hc, precision=precision)
        return pl.pallas_call(
            kernel,
            out_shape=out_shape,
            grid_spec=pltpu.PrefetchScalarGridSpec(
                num_scalar_prefetch=0,
                grid=(Mp // tm,),
                in_specs=[
                    pl.BlockSpec((tm, Dp), lambda i: (i, 0)),   # x rows (pipelined)
                    cspec((Dp, Hp)),                            # W1 (VMEM-resident)
                    cspec((1, Hp)),                             # b1
                    cspec((Hp, Dp)),                            # W2 (VMEM-resident)
                    cspec((1, Dp)),                             # b2
                    cspec((1, Dp)),                             # gamma
                    cspec((1, Dp)),                             # beta
                ],
                out_specs=pl.BlockSpec((tm, Dp), lambda i: (i, 0)),
                scratch_shapes=[pltpu.VMEM((tm, Dp), jnp.float32)],
            ),
            compiler_params=pltpu.CompilerParams(
                dimension_semantics=("parallel",),
                vmem_limit_bytes=vmem_limit),
            cost_estimate=cost,
        )(x2, w1p, b1p, w2p, b2p, gp, bp)

    def call_stream():
        kernel = functools.partial(_ffn_stream_kernel, eps=eps, d_true=D,
                                   precision=precision)
        return pl.pallas_call(
            kernel,
            out_shape=out_shape,
            grid_spec=pltpu.PrefetchScalarGridSpec(
                num_scalar_prefetch=0,
                grid=(Mp // tm, Hp // hc),
                in_specs=[
                    pl.BlockSpec((tm, Dp), lambda i, h: (i, 0)),   # x rows
                    pl.BlockSpec((Dp, hc), lambda i, h: (0, h)),   # W1 chunk (streamed)
                    pl.BlockSpec((1, hc), lambda i, h: (0, h)),    # b1 chunk
                    pl.BlockSpec((hc, Dp), lambda i, h: (h, 0)),   # W2 chunk (streamed)
                    pl.BlockSpec((1, Dp), lambda i, h: (0, 0)),    # b2
                    pl.BlockSpec((1, Dp), lambda i, h: (0, 0)),    # gamma
                    pl.BlockSpec((1, Dp), lambda i, h: (0, 0)),    # beta
                ],
                out_specs=pl.BlockSpec((tm, Dp), lambda i, h: (i, 0)),
                scratch_shapes=[pltpu.VMEM((tm, Dp), jnp.float32)],
            ),
            compiler_params=pltpu.CompilerParams(
                dimension_semantics=("parallel", "arbitrary"),
                vmem_limit_bytes=vmem_limit),
            cost_estimate=cost,
        )(x2, w1p, b1p, w2p, b2p, gp, bp)

    if use_stream:
        out2 = call_stream()
    else:
        try:
            out2 = call_resident(single_buffer_weights=True)
        except Exception:
            # pl.Buffered(1) not accepted by this JAX build: fall back to the
            # default (double-buffered) resident-weight specs.
            out2 = call_resident(single_buffer_weights=False)

    if Mp != M or Dp != D:
        out2 = out2[:M, :D]
    return out2.reshape(B, S, D)


def _reference(x, w1, b1, w2, b2, gamma, beta, eps=1e-5, precision=None):
    h = jnp.maximum(jnp.dot(x, w1, precision=precision) + b1, 0.0)
    y = jnp.dot(h, w2, precision=precision) + b2 + x
    mean = jnp.mean(y, axis=-1, keepdims=True)
    var = jnp.mean((y - mean) ** 2, axis=-1, keepdims=True)
    return (y - mean) / jnp.sqrt(var + eps) * gamma + beta


if __name__ == "__main__":
    hi = jax.lax.Precision.HIGHEST   # strict f32 MXU passes for the numeric check

    # --- Test 1: module-sized shapes (resident-weight path + forced streaming path) ---
    B, S, D, H = 2, 8, 32, 64        # batch, seq_len, dim_model, hidden
    key = jax.random.PRNGKey(0)
    kx, k1, k2, k3, k4 = jax.random.split(key, 5)

    x = jax.random.normal(kx, (B, S, D), dtype=jnp.float32)
    # nn.Linear stores W as (out, in); we pass W^T so the kernel computes x @ W^T + b.
    w1 = jax.random.normal(k1, (D, H), dtype=jnp.float32) * 0.1
    b1 = jax.random.normal(k2, (H,), dtype=jnp.float32) * 0.1
    w2 = jax.random.normal(k3, (H, D), dtype=jnp.float32) * 0.1
    b2 = jax.random.normal(k4, (D,), dtype=jnp.float32) * 0.1
    gamma = jnp.ones((D,), dtype=jnp.float32)    # nn.LayerNorm default init
    beta = jnp.zeros((D,), dtype=jnp.float32)

    ref = _reference(x, w1, b1, w2, b2, gamma, beta, precision=hi)

    out = jax.block_until_ready(
        position_wise_feed_forward(x, w1, b1, w2, b2, gamma, beta, precision=hi))
    assert out.shape == (B, S, D)
    assert jnp.allclose(out, ref, atol=2e-3, rtol=2e-3), "resident path mismatch"

    out_s = jax.block_until_ready(
        position_wise_feed_forward(x, w1, b1, w2, b2, gamma, beta, precision=hi,
                                   force_stream=True, h_chunk=128))
    assert jnp.allclose(out_s, ref, atol=2e-3, rtol=2e-3), "streaming path mismatch"

    # --- Test 2: larger hidden dim exercises multi-chunk fori_loop / multi-step H axis ---
    D2, H2 = 64, 384
    kk = jax.random.split(jax.random.PRNGKey(1), 5)
    x2i = jax.random.normal(kk[0], (B, S, D2), dtype=jnp.float32)
    w1b = jax.random.normal(kk[1], (D2, H2), dtype=jnp.float32) * 0.05
    b1b = jax.random.normal(kk[2], (H2,), dtype=jnp.float32) * 0.05
    w2b = jax.random.normal(kk[3], (H2, D2), dtype=jnp.float32) * 0.05
    b2b = jax.random.normal(kk[4], (D2,), dtype=jnp.float32) * 0.05
    g2 = jnp.ones((D2,), dtype=jnp.float32)
    be2 = jnp.zeros((D2,), dtype=jnp.float32)

    ref2 = _reference(x2i, w1b, b1b, w2b, b2b, g2, be2, precision=hi)

    out2 = jax.block_until_ready(
        position_wise_feed_forward(x2i, w1b, b1b, w2b, b2b, g2, be2,
                                   precision=hi, h_chunk=128))
    assert jnp.allclose(out2, ref2, atol=2e-3, rtol=2e-3), "multi-chunk resident mismatch"

    out2s = jax.block_until_ready(
        position_wise_feed_forward(x2i, w1b, b1b, w2b, b2b, g2, be2,
                                   precision=hi, h_chunk=128, force_stream=True))
    assert jnp.allclose(out2s, ref2, atol=2e-3, rtol=2e-3), "multi-step streaming mismatch"

    print("KERNEL_OK")
</pallas_src>

<mosaic_0001>
module attributes {stable_mosaic.version = 11 : i64} {
  func.func @_ffn_resident_kernel(%arg0: i32, %arg1: memref<8x128xf32, #tpu.memory_space<vmem>>, %arg2: memref<128x128xf32, #tpu.memory_space<vmem>>, %arg3: memref<1x128xf32, #tpu.memory_space<vmem>>, %arg4: memref<128x128xf32, #tpu.memory_space<vmem>>, %arg5: memref<1x128xf32, #tpu.memory_space<vmem>>, %arg6: memref<1x128xf32, #tpu.memory_space<vmem>>, %arg7: memref<1x128xf32, #tpu.memory_space<vmem>>, %arg8: memref<8x128xf32, #tpu.memory_space<vmem>>, %arg9: memref<8x128xf32, #tpu.memory_space<vmem>>) attributes {dimension_semantics = [#tpu.dimension_semantics<parallel>], iteration_bounds = array<i64: 2>, scalar_prefetch = 0 : i64, scratch_operands = 1 : i64, tpu.core_type = #tpu.core_type<tc>, window_params = [{transform_indices = @transform_0, window_bounds = array<i64: 8, 128>}, {pipeline_mode = #tpu.pipeline_mode<synchronous>, transform_indices = @transform_1, window_bounds = array<i64: 128, 128>}, {pipeline_mode = #tpu.pipeline_mode<synchronous>, transform_indices = @transform_2, window_bounds = array<i64: 1, 128>}, {pipeline_mode = #tpu.pipeline_mode<synchronous>, transform_indices = @transform_3, window_bounds = array<i64: 128, 128>}, {pipeline_mode = #tpu.pipeline_mode<synchronous>, transform_indices = @transform_4, window_bounds = array<i64: 1, 128>}, {pipeline_mode = #tpu.pipeline_mode<synchronous>, transform_indices = @transform_5, window_bounds = array<i64: 1, 128>}, {pipeline_mode = #tpu.pipeline_mode<synchronous>, transform_indices = @transform_6, window_bounds = array<i64: 1, 128>}, {transform_indices = @transform_7, window_bounds = array<i64: 8, 128>}]} {
    %c0 = arith.constant 0 : index
    %c0_0 = arith.constant 0 : index
    %0 = vector.load %arg1[%c0, %c0_0] : memref<8x128xf32, #tpu.memory_space<vmem>>, vector<8x128xf32>
    %c0_1 = arith.constant 0 : index
    %c0_2 = arith.constant 0 : index
    %1 = vector.load %arg5[%c0_1, %c0_2] : memref<1x128xf32, #tpu.memory_space<vmem>>, vector<1x128xf32>
    %2 = vector.broadcast %1 : vector<1x128xf32> to vector<8x128xf32>
    %3 = arith.addf %0, %2 : vector<8x128xf32>
    %c0_3 = arith.constant 0 : index
    %c0_4 = arith.constant 0 : index
    %4 = vector.load %arg9[%c0_3, %c0_4] : memref<8x128xf32, #tpu.memory_space<vmem>>, vector<8x128xf32>
    tpu.vector_store %arg9[%c0_3, %c0_4], %3 {strides = array<i32>} : memref<8x128xf32, #tpu.memory_space<vmem>>, vector<8x128xf32>,
    %c0_5 = arith.constant 0 : index
    %c0_6 = arith.constant 0 : index
    %5 = vector.load %arg2[%c0_5, %c0_6] : memref<128x128xf32, #tpu.memory_space<vmem>>, vector<128x128xf32>
    %cst = arith.constant dense<0.000000e+00> : vector<8x128xf32>
    %6 = tpu.matmul %0, %5, %cst {dimension_numbers = #tpu.dot_dimension_numbers<[1], [0], [0], [1], [0, 0, 1, 1], [], []>, precision = #tpu.contract_precision<fp32>} : vector<8x128xf32>, vector<128x128xf32>, vector<8x128xf32> -> vector<8x128xf32>
    %c0_7 = arith.constant 0 : index
    %c0_8 = arith.constant 0 : index
    %7 = vector.load %arg3[%c0_7, %c0_8] : memref<1x128xf32, #tpu.memory_space<vmem>>, vector<1x128xf32>
    %8 = vector.broadcast %7 : vector<1x128xf32> to vector<8x128xf32>
    %9 = arith.addf %6, %8 : vector<8x128xf32>
    %cst_9 = arith.constant 0.000000e+00 : f32
    %10 = vector.broadcast %cst_9 : f32 to vector<8x128xf32>
    %11 = arith.maximumf %9, %10 : vector<8x128xf32>
    %c0_10 = arith.constant 0 : index
    %c0_11 = arith.constant 0 : index
    %12 = vector.load %arg9[%c0_10, %c0_11] : memref<8x128xf32, #tpu.memory_space<vmem>>, vector<8x128xf32>
    %c0_12 = arith.constant 0 : index
    %c0_13 = arith.constant 0 : index
    %13 = vector.load %arg4[%c0_12, %c0_13] : memref<128x128xf32, #tpu.memory_space<vmem>>, vector<128x128xf32>
    %cst_14 = arith.constant dense<0.000000e+00> : vector<8x128xf32>
    %14 = tpu.matmul %11, %13, %cst_14 {dimension_numbers = #tpu.dot_dimension_numbers<[1], [0], [0], [1], [0, 0, 1, 1], [], []>, precision = #tpu.contract_precision<fp32>} : vector<8x128xf32>, vector<128x128xf32>, vector<8x128xf32> -> vector<8x128xf32>
    %15 = arith.addf %12, %14 : vector<8x128xf32>
    %c0_15 = arith.constant 0 : index
    %c0_16 = arith.constant 0 : index
    %16 = vector.load %arg9[%c0_15, %c0_16] : memref<8x128xf32, #tpu.memory_space<vmem>>, vector<8x128xf32>
    tpu.vector_store %arg9[%c0_15, %c0_16], %15 {strides = array<i32>} : memref<8x128xf32, #tpu.memory_space<vmem>>, vector<8x128xf32>,
    %c0_17 = arith.constant 0 : index
    %c0_18 = arith.constant 0 : index
    %17 = vector.load %arg9[%c0_17, %c0_18] : memref<8x128xf32, #tpu.memory_space<vmem>>, vector<8x128xf32>
    %cst_19 = arith.constant dense<0.000000e+00> : vector<8xf32>
    %18 = vector.multi_reduction <add>, %17, %cst_19 [1] : vector<8x128xf32> to vector<8xf32>
    %19 = vector.shape_cast %18 : vector<8xf32> to vector<8x1xf32>
    %cst_20 = arith.constant 3.125000e-02 : f32
    %20 = vector.broadcast %cst_20 : f32 to vector<8x1xf32>
    %21 = arith.mulf %19, %20 : vector<8x1xf32>
    %22 = arith.mulf %17, %17 : vector<8x128xf32>
    %cst_21 = arith.constant dense<0.000000e+00> : vector<8xf32>
    %23 = vector.multi_reduction <add>, %22, %cst_21 [1] : vector<8x128xf32> to vector<8xf32>
    %24 = vector.shape_cast %23 : vector<8xf32> to vector<8x1xf32>
    %cst_22 = arith.constant 3.125000e-02 : f32
    %25 = vector.broadcast %cst_22 : f32 to vector<8x1xf32>
    %26 = arith.mulf %24, %25 : vector<8x1xf32>
    %27 = arith.mulf %21, %21 : vector<8x1xf32>
    %28 = arith.subf %26, %27 : vector<8x1xf32>
    %cst_23 = arith.constant 0.000000e+00 : f32
    %29 = vector.broadcast %cst_23 : f32 to vector<8x1xf32>
    %30 = arith.maximumf %28, %29 : vector<8x1xf32>
    %31 = vector.broadcast %21 : vector<8x1xf32> to vector<8x128xf32>
    %32 = arith.subf %17, %31 : vector<8x128xf32>
    %cst_24 = arith.constant 9.99999974E-6 : f32
    %33 = vector.broadcast %cst_24 : f32 to vector<8x1xf32>
    %34 = arith.addf %30, %33 : vector<8x1xf32>
    %35 = math.rsqrt %34 : vector<8x1xf32>
    %36 = vector.broadcast %35 : vector<8x1xf32> to vector<8x128xf32>
    %37 = arith.mulf %32, %36 : vector<8x128xf32>
    %c0_25 = arith.constant 0 : index
    %c0_26 = arith.constant 0 : index
    %38 = vector.load %arg6[%c0_25, %c0_26] : memref<1x128xf32, #tpu.memory_space<vmem>>, vector<1x128xf32>
    %39 = vector.broadcast %38 : vector<1x128xf32> to vector<8x128xf32>
    %40 = arith.mulf %37, %39 : vector<8x128xf32>
    %c0_27 = arith.constant 0 : index
    %c0_28 = arith.constant 0 : index
    %41 = vector.load %arg7[%c0_27, %c0_28] : memref<1x128xf32, #tpu.memory_space<vmem>>, vector<1x128xf32>
    %42 = vector.broadcast %41 : vector<1x128xf32> to vector<8x128xf32>
    %43 = arith.addf %40, %42 : vector<8x128xf32>
    %c0_29 = arith.constant 0 : index
    %c0_30 = arith.constant 0 : index
    %44 = vector.load %arg8[%c0_29, %c0_30] : memref<8x128xf32, #tpu.memory_space<vmem>>, vector<8x128xf32>
    tpu.vector_store %arg8[%c0_29, %c0_30], %43 {strides = array<i32>} : memref<8x128xf32, #tpu.memory_space<vmem>>, vector<8x128xf32>,
    return
  }
  func.func @transform_0(%arg0: i32) -> (i32, i32) {
    %c0_i32 = arith.constant 0 : i32
    %c0_i32_0 = arith.constant 0 : i32
    return %arg0, %c0_i32 : i32, i32
  }
  func.func @transform_1(%arg0: i32) -> (i32, i32) {
    %c0_i32 = arith.constant 0 : i32
    %c0_i32_0 = arith.constant 0 : i32
    %c0_i32_1 = arith.constant 0 : i32
    return %c0_i32, %c0_i32_0 : i32, i32
  }
  func.func @transform_2(%arg0: i32) -> (i32, i32) {
    %c0_i32 = arith.constant 0 : i32
    %c0_i32_0 = arith.constant 0 : i32
    %c0_i32_1 = arith.constant 0 : i32
    return %c0_i32, %c0_i32_0 : i32, i32
  }
  func.func @transform_3(%arg0: i32) -> (i32, i32) {
    %c0_i32 = arith.constant 0 : i32
    %c0_i32_0 = arith.constant 0 : i32
    %c0_i32_1 = arith.constant 0 : i32
    return %c0_i32, %c0_i32_0 : i32, i32
  }
  func.func @transform_4(%arg0: i32) -> (i32, i32) {
    %c0_i32 = arith.constant 0 : i32
    %c0_i32_0 = arith.constant 0 : i32
    %c0_i32_1 = arith.constant 0 : i32
    return %c0_i32, %c0_i32_0 : i32, i32
  }
  func.func @transform_5(%arg0: i32) -> (i32, i32) {
    %c0_i32 = arith.constant 0 : i32
    %c0_i32_0 = arith.constant 0 : i32
    %c0_i32_1 = arith.constant 0 : i32
    return %c0_i32, %c0_i32_0 : i32, i32
  }
  func.func @transform_6(%arg0: i32) -> (i32, i32) {
    %c0_i32 = arith.constant 0 : i32
    %c0_i32_0 = arith.constant 0 : i32
    %c0_i32_1 = arith.constant 0 : i32
    return %c0_i32, %c0_i32_0 : i32, i32
  }
  func.func @transform_7(%arg0: i32) -> (i32, i32) {
    %c0_i32 = arith.constant 0 : i32
    %c0_i32_0 = arith.constant 0 : i32
    return %arg0, %c0_i32 : i32, i32
  }
}

module attributes {stable_mosaic.version = 11 : i64} {
  func.func @_ffn_resident_kernel(%arg0: i32, %arg1: memref<8x128xf32, #tpu.memory_space<vmem>>, %arg2: memref<128x128xf32, #tpu.memory_space<vmem>>, %arg3: memref<1x128xf32, #tpu.memory_space<vmem>>, %arg4: memref<128x128xf32, #tpu.memory_space<vmem>>, %arg5: memref<1x128xf32, #tpu.memory_space<vmem>>, %arg6: memref<1x128xf32, #tpu.memory_space<vmem>>, %arg7: memref<1x128xf32, #tpu.memory_space<vmem>>, %arg8: memref<8x128xf32, #tpu.memory_space<vmem>>, %arg9: memref<8x128xf32, #tpu.memory_space<vmem>>) attributes {dimension_semantics = [#tpu.dimension_semantics<parallel>], iteration_bounds = array<i64: 2>, scalar_prefetch = 0 : i64, scratch_operands = 1 : i64, tpu.core_type = #tpu.core_type<tc>, window_params = [{transform_indices = @transform_0, window_bounds = array<i64: 8, 128>}, {pipeline_mode = #tpu.pipeline_mode<synchronous>, transform_indices = @transform_1, window_bounds = array<i64: 128, 128>}, {pipeline_mode = #tpu.pipeline_mode<synchronous>, transform_indices = @transform_2, window_bounds = array<i64: 1, 128>}, {pipeline_mode = #tpu.pipeline_mode<synchronous>, transform_indices = @transform_3, window_bounds = array<i64: 128, 128>}, {pipeline_mode = #tpu.pipeline_mode<synchronous>, transform_indices = @transform_4, window_bounds = array<i64: 1, 128>}, {pipeline_mode = #tpu.pipeline_mode<synchronous>, transform_indices = @transform_5, window_bounds = array<i64: 1, 128>}, {pipeline_mode = #tpu.pipeline_mode<synchronous>, transform_indices = @transform_6, window_bounds = array<i64: 1, 128>}, {transform_indices = @transform_7, window_bounds = array<i64: 8, 128>}]} {
    %c0 = arith.constant 0 : index
    %c0_0 = arith.constant 0 : index
    %0 = vector.load %arg1[%c0, %c0_0] : memref<8x128xf32, #tpu.memory_space<vmem>>, vector<8x128xf32>
    %c0_1 = arith.constant 0 : index
    %c0_2 = arith.constant 0 : index
    %1 = vector.load %arg5[%c0_1, %c0_2] : memref<1x128xf32, #tpu.memory_space<vmem>>, vector<1x128xf32>
    %2 = vector.broadcast %1 : vector<1x128xf32> to vector<8x128xf32>
    %3 = arith.addf %0, %2 : vector<8x128xf32>
    %c0_3 = arith.constant 0 : index
    %c0_4 = arith.constant 0 : index
    %4 = vector.load %arg9[%c0_3, %c0_4] : memref<8x128xf32, #tpu.memory_space<vmem>>, vector<8x128xf32>
    tpu.vector_store %arg9[%c0_3, %c0_4], %3 {strides = array<i32>} : memref<8x128xf32, #tpu.memory_space<vmem>>, vector<8x128xf32>,
    %c0_5 = arith.constant 0 : index
    %c0_6 = arith.constant 0 : index
    %5 = vector.load %arg2[%c0_5, %c0_6] : memref<128x128xf32, #tpu.memory_space<vmem>>, vector<128x128xf32>
    %cst = arith.constant dense<0.000000e+00> : vector<8x128xf32>
    %6 = tpu.matmul %0, %5, %cst {dimension_numbers = #tpu.dot_dimension_numbers<[1], [0], [0], [1], [0, 0, 1, 1], [], []>, precision = #tpu.contract_precision<fp32>} : vector<8x128xf32>, vector<128x128xf32>, vector<8x128xf32> -> vector<8x128xf32>
    %c0_7 = arith.constant 0 : index
    %c0_8 = arith.constant 0 : index
    %7 = vector.load %arg3[%c0_7, %c0_8] : memref<1x128xf32, #tpu.memory_space<vmem>>, vector<1x128xf32>
    %8 = vector.broadcast %7 : vector<1x128xf32> to vector<8x128xf32>
    %9 = arith.addf %6, %8 : vector<8x128xf32>
    %cst_9 = arith.constant 0.000000e+00 : f32
    %10 = vector.broadcast %cst_9 : f32 to vector<8x128xf32>
    %11 = arith.maximumf %9, %10 : vector<8x128xf32>
    %c0_10 = arith.constant 0 : index
    %c0_11 = arith.constant 0 : index
    %12 = vector.load %arg9[%c0_10, %c0_11] : memref<8x128xf32, #tpu.memory_space<vmem>>, vector<8x128xf32>
    %c0_12 = arith.constant 0 : index
    %c0_13 = arith.constant 0 : index
    %13 = vector.load %arg4[%c0_12, %c0_13] : memref<128x128xf32, #tpu.memory_space<vmem>>, vector<128x128xf32>
    %cst_14 = arith.constant dense<0.000000e+00> : vector<8x128xf32>
    %14 = tpu.matmul %11, %13, %cst_14 {dimension_numbers = #tpu.dot_dimension_numbers<[1], [0], [0], [1], [0, 0, 1, 1], [], []>, precision = #tpu.contract_precision<fp32>} : vector<8x128xf32>, vector<128x128xf32>, vector<8x128xf32> -> vector<8x128xf32>
    %15 = arith.addf %12, %14 : vector<8x128xf32>
    %c0_15 = arith.constant 0 : index
    %c0_16 = arith.constant 0 : index
    %16 = vector.load %arg9[%c0_15, %c0_16] : memref<8x128xf32, #tpu.memory_space<vmem>>, vector<8x128xf32>
    tpu.vector_store %arg9[%c0_15, %c0_16], %15 {strides = array<i32>} : memref<8x128xf32, #tpu.memory_space<vmem>>, vector<8x128xf32>,
    %c0_17 = arith.constant 0 : index
    %c0_18 = arith.constant 0 : index
    %17 = vector.load %arg9[%c0_17, %c0_18] : memref<8x128xf32, #tpu.memory_space<vmem>>, vector<8x128xf32>
    %cst_19 = arith.constant dense<0.000000e+00> : vector<8xf32>
    %18 = vector.multi_reduction <add>, %17, %cst_19 [1] : vector<8x128xf32> to vector<8xf32>
    %19 = vector.shape_cast %18 : vector<8xf32> to vector<8x1xf32>
    %cst_20 = arith.constant 3.125000e-02 : f32
    %20 = vector.broadcast %cst_20 : f32 to vector<8x1xf32>
    %21 = arith.mulf %19, %20 : vector<8x1xf32>
    %22 = arith.mulf %17, %17 : vector<8x128xf32>
    %cst_21 = arith.constant dense<0.000000e+00> : vector<8xf32>
    %23 = vector.multi_reduction <add>, %22, %cst_21 [1] : vector<8x128xf32> to vector<8xf32>
    %24 = vector.shape_cast %23 : vector<8xf32> to vector<8x1xf32>
    %cst_22 = arith.constant 3.125000e-02 : f32
    %25 = vector.broadcast %cst_22 : f32 to vector<8x1xf32>
    %26 = arith.mulf %24, %25 : vector<8x1xf32>
    %27 = arith.mulf %21, %21 : vector<8x1xf32>
    %28 = arith.subf %26, %27 : vector<8x1xf32>
    %cst_23 = arith.constant 0.000000e+00 : f32
    %29 = vector.broadcast %cst_23 : f32 to vector<8x1xf32>
    %30 = arith.maximumf %28, %29 : vector<8x1xf32>
    %31 = vector.broadcast %21 : vector<8x1xf32> to vector<8x128xf32>
    %32 = arith.subf %17, %31 : vector<8x128xf32>
    %cst_24 = arith.constant 9.99999974E-6 : f32
    %33 = vector.broadcast %cst_24 : f32 to vector<8x1xf32>
    %34 = arith.addf %30, %33 : vector<8x1xf32>
    %35 = math.rsqrt %34 : vector<8x1xf32>
    %36 = vector.broadcast %35 : vector<8x1xf32> to vector<8x128xf32>
    %37 = arith.mulf %32, %36 : vector<8x128xf32>
    %c0_25 = arith.constant 0 : index
    %c0_26 = arith.constant 0 : index
    %38 = vector.load %arg6[%c0_25, %c0_26] : memref<1x128xf32, #tpu.memory_space<vmem>>, vector<1x128xf32>
    %39 = vector.broadcast %38 : vector<1x128xf32> to vector<8x128xf32>
    %40 = arith.mulf %37, %39 : vector<8x128xf32>
    %c0_27 = arith.constant 0 : index
    %c0_28 = arith.constant 0 : index
    %41 = vector.load %arg7[%c0_27, %c0_28] : memref<1x128xf32, #tpu.memory_space<vmem>>, vector<1x128xf32>
    %42 = vector.broadcast %41 : vector<1x128xf32> to vector<8x128xf32>
    %43 = arith.addf %40, %42 : vector<8x128xf32>
    %c0_29 = arith.constant 0 : index
    %c0_30 = arith.constant 0 : index
    %44 = vector.load %arg8[%c0_29, %c0_30] : memref<8x128xf32, #tpu.memory_space<vmem>>, vector<8x128xf32>
    tpu.vector_store %arg8[%c0_29, %c0_30], %43 {strides = array<i32>} : memref<8x128xf32, #tpu.memory_space<vmem>>, vector<8x128xf32>,
    return
  }
  func.func @transform_0(%arg0: i32) -> (i32, i32) {
    %c0_i32 = arith.constant 0 : i32
    %c0_i32_0 = arith.constant 0 : i32
    return %arg0, %c0_i32 : i32, i32
  }
  func.func @transform_1(%arg0: i32) -> (i32, i32) {
    %c0_i32 = arith.constant 0 : i32
    %c0_i32_0 = arith.constant 0 : i32
    %c0_i32_1 = arith.constant 0 : i32
    return %c0_i32, %c0_i32_0 : i32, i32
  }
  func.func @transform_2(%arg0: i32) -> (i32, i32) {
    %c0_i32 = arith.constant 0 : i32
    %c0_i32_0 = arith.constant 0 : i32
    %c0_i32_1 = arith.constant 0 : i32
    return %c0_i32, %c0_i32_0 : i32, i32
  }
  func.func @transform_3(%arg0: i32) -> (i32, i32) {
    %c0_i32 = arith.constant 0 : i32
    %c0_i32_0 = arith.constant 0 : i32
    %c0_i32_1 = arith.constant 0 : i32
    return %c0_i32, %c0_i32_0 : i32, i32
  }
  func.func @transform_4(%arg0: i32) -> (i32, i32) {
    %c0_i32 = arith.constant 0 : i32
    %c0_i32_0 = arith.constant 0 : i32
    %c0_i32_1 = arith.constant 0 : i32
    return %c0_i32, %c0_i32_0 : i32, i32
  }
  func.func @transform_5(%arg0: i32) -> (i32, i32) {
    %c0_i32 = arith.constant 0 : i32
    %c0_i32_0 = arith.constant 0 : i32
    %c0_i32_1 = arith.constant 0 : i32
    return %c0_i32, %c0_i32_0 : i32, i32
  }
  func.func @transform_6(%arg0: i32) -> (i32, i32) {
    %c0_i32 = arith.constant 0 : i32
    %c0_i32_0 = arith.constant 0 : i32
    %c0_i32_1 = arith.constant 0 : i32
    return %c0_i32, %c0_i32_0 : i32, i32
  }
  func.func @transform_7(%arg0: i32) -> (i32, i32) {
    %c0_i32 = arith.constant 0 : i32
    %c0_i32_0 = arith.constant 0 : i32
    return %arg0, %c0_i32 : i32, i32
  }
}

</mosaic_0001>

<llo_original>
// kernel: tpu_custom_call.1
$region0: #{tpu_custom_call.1}
  #allocation0 [shape = 'u32[]', space=smem, size = 0x4, offset = 0x4, fixed_abs, tag = 'smem constant byte address 0x4 - core index']
  #allocation1 [shape = 'u32[144,128]{1,0:T(1,128)}', space=vmem, size = 0x12000, scoped, tag = 'internal scratch']
  #allocation2 [shape = 'f32[8,128]{1,0:T(8,128)}', space=vmem, size = 0x1000, scoped, tag = 'scratch operand']
  %s0 = inlined_call_operand.hbm [shape: f32[16,128], index: 0, kind: input, shape index: {}]
  %s1 = inlined_call_operand.hbm [shape: f32[128,128], index: 1, kind: input, shape index: {}]
  %s2 = inlined_call_operand.vmem [shape: f32[1,128], index: 2, kind: input, shape index: {}]
  %s3 = inlined_call_operand.hbm [shape: f32[128,128], index: 3, kind: input, shape index: {}]
  %s4 = inlined_call_operand.vmem [shape: f32[1,128], index: 4, kind: input, shape index: {}]
  %s5 = inlined_call_operand.vmem [shape: f32[1,128], index: 5, kind: input, shape index: {}]
  %s6 = inlined_call_operand.vmem [shape: f32[1,128], index: 6, kind: input, shape index: {}]
  %s7 = inlined_call_operand.hbm [shape: f32[16,128], index: 7, kind: output, shape index: {}]
  %s8 = sld [smem:[#allocation0]]
  $region73: #{tpu_custom_call.1} parent=0
    _
  %s10 = ssub.s32 1, %s8
  %s11 = scalar_select 0, %s10, %s8
  $region1: #{tpu_custom_call.1} parent=0
    #allocation3 [shape = 'u8[8192]{0}', space=vmem, size = 0x2000, scoped, tag = 'input window, operand 0']
    #allocation4 [shape = 's32[2]{0}', space=sflag, size = 0x8, scoped, tag = 'scoped memory for tpu_custom_call.1']
    #allocation5 [shape = 's32[2]{0}', space=sflag, size = 0x8, scoped, tag = 'scoped memory for tpu_custom_call.1']
    #allocation6 [shape = 'u8[65536]{0}', space=vmem, size = 0x10000, scoped, tag = 'input window, operand 1, single buffered']
    #allocation7 [shape = 's32[1]{0}', space=sflag, size = 0x4, scoped, tag = 'scoped memory for tpu_custom_call.1']
    #allocation8 [shape = 'u8[65536]{0}', space=vmem, size = 0x10000, scoped, tag = 'input window, operand 3, single buffered']
    #allocation9 [shape = 'u8[8192]{0}', space=vmem, size = 0x2000, scoped, tag = 'output window, operand 0']
    %12 = vsyncpa [#allocation4], 0
    %s13 = scalar_lea.sflag [#allocation4], 1
    %14 = vsyncpa %s13, 0
    %15 = vsyncpa [#allocation7], 0
    %16 = vsyncpa [#allocation5], 0
    %s17 = scalar_lea.sflag [#allocation5], 1
    %18 = vsyncpa %s17, 0
    loop: start=0, step=1, limit=4
    $region2: #{tpu_custom_call.1} parent=1 // loop_pre_header
      _
    $region3: #{tpu_custom_call.1} parent=1 // loop_header
      %s20 = sphi 0, %s24
      %p21 = scmp.ge.s32.totalorder %s20, 4
      %s30 = sphi 0, %s32
      %s33 = sphi 0, %s30
      %s34 = sphi 0, %s33
      %s50 = sphi 0, %s34
      %s54 = sphi 0, %s54
      %s56 = sphi 0, %s54
      %s57 = sphi 0, %s56
      %s71 = sphi 0, %s57
      %s75 = sphi 0, %s75
      %s77 = sphi 0, %s75
      %s78 = sphi 0, %s77
      %s92 = sphi 0, %s78
      %s96 = sphi 0, %s96
      %s98 = sphi 0, %s96
      %s99 = sphi 0, %s98
      %s113 = sphi 0, %s99
      %s117 = sphi 0, %s117
      %s119 = sphi 0, %s117
      %s120 = sphi 0, %s119
      %s134 = sphi 0, %s120
      %s138 = sphi 0, %s138
      %s140 = sphi 0, %s138
      %s141 = sphi 0, %s140
      %s155 = sphi 0, %s141
      %s159 = sphi 0, %s159
      %s161 = sphi 0, %s159
      %s162 = sphi 0, %s161
      %s176 = sphi 0, %s162
      %s182 = sphi 0, %s184
      %s185 = sphi 0, %s182
      %s186 = sphi 0, %s185
      %s202 = sphi 0, %s186
    $region4: #{tpu_custom_call.1} parent=1 // loop_header_branch
      %23 = sbr.rel (%p21) target = $region8
    $region5: #{tpu_custom_call.1} parent=1 // loop_body
      %s25 = ssub.s32 %s20, 1
      %s26 = ssub.s32 %s20, 2
      %s27 = sadd.s32 %s20, 1
      %s28 = ssub.s32 %s20, %s27
      %p29 = scmp.eq.s32.totalorder %s28, 0
      %s31 = sadd.s32 %s30, 1
      %s32 = scalar_select %p29, %s30, %s31
      %p35 = pneg %p29
      %p36 = scmp.eq.s32.totalorder %s20, 1
      %p37 = por %p35, %p36
      %p38 = scmp.ne.s32.totalorder %s30, %s33
      %p39 = scmp.eq.s32.totalorder %s20, 0
      %p40 = por %p38, %p39
      %p41 = scmp.ne.s32.totalorder %s30, %s33
      %p42 = scmp.eq.s32.totalorder %s25, 1
      %p43 = por %p41, %p42
      %p44 = scmp.ne.s32.totalorder %s33, %s34
      %p45 = scmp.eq.s32.totalorder %s25, 0
      %p46 = por %p44, %p45
      %p47 = scmp.ne.s32.totalorder %s33, %s34
      %p48 = scmp.eq.s32.totalorder %s26, 1
      %p49 = por %p47, %p48
      %p51 = scmp.ne.s32.totalorder %s34, %s50
      %p52 = scmp.eq.s32.totalorder %s26, 0
      %p53 = por %p51, %p52
      %s55 = sadd.s32 %s54, 1
      %p58 = scmp.eq.s32.totalorder %s20, 1
      %p59 = scmp.ne.s32.totalorder %s54, %s56
      %p60 = scmp.eq.s32.totalorder %s20, 0
      %p61 = por %p59, %p60
      %p62 = scmp.ne.s32.totalorder %s54, %s56
      %p63 = scmp.eq.s32.totalorder %s25, 1
      %p64 = por %p62, %p63
      %p65 = scmp.ne.s32.totalorder %s56, %s57
      %p66 = scmp.eq.s32.totalorder %s25, 0
      %p67 = por %p65, %p66
      %p68 = scmp.ne.s32.totalorder %s56, %s57
      %p69 = scmp.eq.s32.totalorder %s26, 1
      %p70 = por %p68, %p69
      %p72 = scmp.ne.s32.totalorder %s57, %s71
      %p73 = scmp.eq.s32.totalorder %s26, 0
      %p74 = por %p72, %p73
      %s76 = sadd.s32 %s75, 1
      %p79 = scmp.eq.s32.totalorder %s20, 1
      %p80 = scmp.ne.s32.totalorder %s75, %s77
      %p81 = scmp.eq.s32.totalorder %s20, 0
      %p82 = por %p80, %p81
      %p83 = scmp.ne.s32.totalorder %s75, %s77
      %p84 = scmp.eq.s32.totalorder %s25, 1
      %p85 = por %p83, %p84
      %p86 = scmp.ne.s32.totalorder %s77, %s78
      %p87 = scmp.eq.s32.totalorder %s25, 0
      %p88 = por %p86, %p87
      %p89 = scmp.ne.s32.totalorder %s77, %s78
      %p90 = scmp.eq.s32.totalorder %s26, 1
      %p91 = por %p89, %p90
      %p93 = scmp.ne.s32.totalorder %s78, %s92
      %p94 = scmp.eq.s32.totalorder %s26, 0
      %p95 = por %p93, %p94
      %s97 = sadd.s32 %s96, 1
      %p100 = scmp.eq.s32.totalorder %s20, 1
      %p101 = scmp.ne.s32.totalorder %s96, %s98
      %p102 = scmp.eq.s32.totalorder %s20, 0
      %p103 = por %p101, %p102
      %p104 = scmp.ne.s32.totalorder %s96, %s98
      %p105 = scmp.eq.s32.totalorder %s25, 1
      %p106 = por %p104, %p105
      %p107 = scmp.ne.s32.totalorder %s98, %s99
      %p108 = scmp.eq.s32.totalorder %s25, 0
      %p109 = por %p107, %p108
      %p110 = scmp.ne.s32.totalorder %s98, %s99
      %p111 = scmp.eq.s32.totalorder %s26, 1
      %p112 = por %p110, %p111
      %p114 = scmp.ne.s32.totalorder %s99, %s113
      %p115 = scmp.eq.s32.totalorder %s26, 0
      %p116 = por %p114, %p115
      %s118 = sadd.s32 %s117, 1
      %p121 = scmp.eq.s32.totalorder %s20, 1
      %p122 = scmp.ne.s32.totalorder %s117, %s119
      %p123 = scmp.eq.s32.totalorder %s20, 0
      %p124 = por %p122, %p123
      %p125 = scmp.ne.s32.totalorder %s117, %s119
      %p126 = scmp.eq.s32.totalorder %s25, 1
      %p127 = por %p125, %p126
      %p128 = scmp.ne.s32.totalorder %s119, %s120
      %p129 = scmp.eq.s32.totalorder %s25, 0
      %p130 = por %p128, %p129
      %p131 = scmp.ne.s32.totalorder %s119, %s120
      %p132 = scmp.eq.s32.totalorder %s26, 1
      %p133 = por %p131, %p132
      %p135 = scmp.ne.s32.totalorder %s120, %s134
      %p136 = scmp.eq.s32.totalorder %s26, 0
      %p137 = por %p135, %p136
      %s139 = sadd.s32 %s138, 1
      %p142 = scmp.eq.s32.totalorder %s20, 1
      %p143 = scmp.ne.s32.totalorder %s138, %s140
      %p144 = scmp.eq.s32.totalorder %s20, 0
      %p145 = por %p143, %p144
      %p146 = scmp.ne.s32.totalorder %s138, %s140
      %p147 = scmp.eq.s32.totalorder %s25, 1
      %p148 = por %p146, %p147
      %p149 = scmp.ne.s32.totalorder %s140, %s141
      %p150 = scmp.eq.s32.totalorder %s25, 0
      %p151 = por %p149, %p150
      %p152 = scmp.ne.s32.totalorder %s140, %s141
      %p153 = scmp.eq.s32.totalorder %s26, 1
      %p154 = por %p152, %p153
      %p156 = scmp.ne.s32.totalorder %s141, %s155
      %p157 = scmp.eq.s32.totalorder %s26, 0
      %p158 = por %p156, %p157
      %s160 = sadd.s32 %s159, 1
      %p163 = scmp.eq.s32.totalorder %s20, 1
      %p164 = scmp.ne.s32.totalorder %s159, %s161
      %p165 = scmp.eq.s32.totalorder %s20, 0
      %p166 = por %p164, %p165
      %p167 = scmp.ne.s32.totalorder %s159, %s161
      %p168 = scmp.eq.s32.totalorder %s25, 1
      %p169 = por %p167, %p168
      %p170 = scmp.ne.s32.totalorder %s161, %s162
      %p171 = scmp.eq.s32.totalorder %s25, 0
      %p172 = por %p170, %p171
      %p173 = scmp.ne.s32.totalorder %s161, %s162
      %p174 = scmp.eq.s32.totalorder %s26, 1
      %p175 = por %p173, %p174
      %p177 = scmp.ne.s32.totalorder %s162, %s176
      %p178 = scmp.eq.s32.totalorder %s26, 0
      %p179 = por %p177, %p178
      %s180 = ssub.s32 %s20, %s27
      %p181 = scmp.eq.s32.totalorder %s180, 0
      %s183 = sadd.s32 %s182, 1
      %s184 = scalar_select %p181, %s182, %s183
      %p187 = pneg %p181
      %p188 = scmp.eq.s32.totalorder %s20, 1
      %p189 = por %p187, %p188
      %p190 = scmp.ne.s32.totalorder %s182, %s185
      %p191 = scmp.eq.s32.totalorder %s20, 0
      %p192 = por %p190, %p191
      %p193 = scmp.ne.s32.totalorder %s182, %s185
      %p194 = scmp.eq.s32.totalorder %s25, 1
      %p195 = por %p193, %p194
      %p196 = scmp.ne.s32.totalorder %s185, %s186
      %p197 = scmp.eq.s32.totalorder %s25, 0
      %p198 = por %p196, %p197
      %p199 = scmp.ne.s32.totalorder %s185, %s186
      %p200 = scmp.eq.s32.totalorder %s26, 1
      %p201 = por %p199, %p200
      %p203 = scmp.ne.s32.totalorder %s186, %s202
      %p204 = scmp.eq.s32.totalorder %s26, 0
      %p205 = por %p203, %p204
      %p206 = scmp.le.s32.totalorder 1, %s20
      %p207 = scmp.lt.s32.totalorder %s20, 3
      %p208 = pnand %p206, %p207
      %p209 = pneg %p208
      // Predicated region
      $region9: #{tpu_custom_call.1} parent=5 // pred_check
        _
      $region10: #{tpu_custom_call.1} parent=5 // pred_check_branch
        %211 = sbr.rel (%p208) target = $region12
      $region11: #{tpu_custom_call.1} parent=5 // pred_region
        %s212 = ssub.s32 %s20, 1
        // Predicated region
        $region13: #{tpu_custom_call.1} parent=11 // pred_check
          %p213 = pneg %p67
        $region14: #{tpu_custom_call.1} parent=11 // pred_check_branch
          %215 = sbr.rel (%p213) target = $region16
        $region15: #{tpu_custom_call.1} parent=11 // pred_region
          %s217 = ssub.s32 2048, 2048
          %218 = vsyncadd [#allocation7], %s217
          %s219 = sshll.u32 [#allocation6], 4
          %s220 = int_to_ptr.vmem [resolvable:$true] %s219
          %225 = dma.hbm_to_vmem [thread:$0]  %s1, 2048, %s220, [#allocation7], 128, 128, 8
        $region16: #{tpu_custom_call.1} parent=11 // pred_fallthru
          _
        // Predicated region
        $region17: #{tpu_custom_call.1} parent=11 // pred_check
          %p226 = pneg %p88
        $region18: #{tpu_custom_call.1} parent=11 // pred_check_branch
          %228 = sbr.rel (%p226) target = $region20
        $region19: #{tpu_custom_call.1} parent=11 // pred_region
          _
        $region20: #{tpu_custom_call.1} parent=11 // pred_fallthru
          _
        // Predicated region
        $region21: #{tpu_custom_call.1} parent=11 // pred_check
          %p229 = pneg %p109
        $region22: #{tpu_custom_call.1} parent=11 // pred_check_branch
          %231 = sbr.rel (%p229) target = $region24
        $region23: #{tpu_custom_call.1} parent=11 // pred_region
          %s233 = ssub.s32 2048, 2048
          %234 = vsyncadd [#allocation7], %s233
          %s235 = sshll.u32 [#allocation8], 4
          %s236 = int_to_ptr.vmem [resolvable:$true] %s235
          %241 = dma.hbm_to_vmem [thread:$0]  %s3, 2048, %s236, [#allocation7], 128, 128, 8
        $region24: #{tpu_custom_call.1} parent=11 // pred_fallthru
          _
        // Predicated region
        $region25: #{tpu_custom_call.1} parent=11 // pred_check
          %p242 = pneg %p130
        $region26: #{tpu_custom_call.1} parent=11 // pred_check_branch
          %244 = sbr.rel (%p242) target = $region28
        $region27: #{tpu_custom_call.1} parent=11 // pred_region
          _
        $region28: #{tpu_custom_call.1} parent=11 // pred_fallthru
          _
        // Predicated region
        $region29: #{tpu_custom_call.1} parent=11 // pred_check
          %p245 = pneg %p151
        $region30: #{tpu_custom_call.1} parent=11 // pred_check_branch
          %247 = sbr.rel (%p245) target = $region32
        $region31: #{tpu_custom_call.1} parent=11 // pred_region
          _
        $region32: #{tpu_custom_call.1} parent=11 // pred_fallthru
          _
        // Predicated region
        $region33: #{tpu_custom_call.1} parent=11 // pred_check
          %p248 = pneg %p172
        $region34: #{tpu_custom_call.1} parent=11 // pred_check_branch
          %250 = sbr.rel (%p248) target = $region36
        $region35: #{tpu_custom_call.1} parent=11 // pred_region
          _
        $region36: #{tpu_custom_call.1} parent=11 // pred_fallthru
          _
      $region12: #{tpu_custom_call.1} parent=5 // pred_fallthru
        _
      %p251 = scmp.lt.s32.totalorder %s20, 2
      // Predicated region
      $region37: #{tpu_custom_call.1} parent=5 // pred_check
        %p252 = pneg %p251
      $region38: #{tpu_custom_call.1} parent=5 // pred_check_branch
        %254 = sbr.rel (%p252) target = $region40
      $region39: #{tpu_custom_call.1} parent=5 // pred_region
        // Predicated region
        $region41: #{tpu_custom_call.1} parent=39 // pred_check
          %p255 = pneg %p40
        $region42: #{tpu_custom_call.1} parent=39 // pred_check_branch
          %257 = sbr.rel (%p255) target = $region44
        $region43: #{tpu_custom_call.1} parent=39 // pred_region
          %s258 = sand.u32 %s30, 1
          %s259 = scalar_lea.sflag [#allocation4], %s258
          %s260 = sand.u32 %s30, 1
          %s261 = smul.addr %s260, 8
          %s262 = scalar_lea.vmem [#allocation3], %s261
          %s264 = ssub.s32 128, 128
          %265 = vsyncadd %s259, %s264
          %s266 = smul.addr %s20, 128
          %s267 = scalar_lea.hbm %s0, %s266
          %s269 = sshll.u32 %s262, 4
          %s270 = int_to_ptr.vmem [resolvable:$true] %s269
          %272 = dma.hbm_to_vmem [thread:$0]  %s267, 128, %s270, %s259
        $region44: #{tpu_custom_call.1} parent=39 // pred_fallthru
          _
      $region40: #{tpu_custom_call.1} parent=5 // pred_fallthru
        _
      %p273 = scmp.le.s32.totalorder 1, %s20
      %p274 = scmp.lt.s32.totalorder %s20, 3
      %p275 = pnand %p273, %p274
      %p276 = pneg %p275
      // Predicated region
      $region45: #{tpu_custom_call.1} parent=5 // pred_check
        _
      $region46: #{tpu_custom_call.1} parent=5 // pred_check_branch
        %278 = sbr.rel (%p275) target = $region48
      $region47: #{tpu_custom_call.1} parent=5 // pred_region
        %s279 = ssub.s32 %s20, 1
        %s280 = sand.u32 %s33, 1
        %s281 = scalar_lea.sflag [#allocation4], %s280
        %s282 = sand.u32 %s33, 1
        %s283 = smul.addr %s282, 8
        %s284 = scalar_lea.vmem [#allocation3], %s283
        // Predicated region
        $region49: #{tpu_custom_call.1} parent=47 // pred_check
          %p285 = pneg %p46
        $region50: #{tpu_custom_call.1} parent=47 // pred_check_branch
          %287 = sbr.rel (%p285) target = $region52
        $region51: #{tpu_custom_call.1} parent=47 // pred_region
          %288 = dma.done %s281, 128
        $region52: #{tpu_custom_call.1} parent=47 // pred_fallthru
          _
        // Predicated region
        $region53: #{tpu_custom_call.1} parent=47 // pred_check
          %p289 = pneg %p67
        $region54: #{tpu_custom_call.1} parent=47 // pred_check_branch
          %291 = sbr.rel (%p289) target = $region56
        $region55: #{tpu_custom_call.1} parent=47 // pred_region
          %292 = dma.done [#allocation7], 2048
        $region56: #{tpu_custom_call.1} parent=47 // pred_fallthru
          _
        // Predicated region
        $region57: #{tpu_custom_call.1} parent=47 // pred_check
          %p293 = pneg %p109
        $region58: #{tpu_custom_call.1} parent=47 // pred_check_branch
          %295 = sbr.rel (%p293) target = $region60
        $region59: #{tpu_custom_call.1} parent=47 // pred_region
          %296 = dma.done [#allocation7], 2048
        $region60: #{tpu_custom_call.1} parent=47 // pred_fallthru
          _
        %s297 = sand.u32 %s33, 1
        %s298 = scalar_lea.sflag [#allocation4], %s297
        %s299 = sand.u32 %s33, 1
        %s300 = smul.addr %s299, 8
        %s301 = scalar_lea.vmem [#allocation3], %s300
        %p302 = pneg %p46
        %p303 = pneg %p43
        %p304 = pneg %p67
        %p305 = pneg %p64
        %p306 = pneg %p88
        %p307 = pneg %p85
        %p308 = pneg %p109
        %p309 = pneg %p106
        %p310 = pneg %p130
        %p311 = pneg %p127
        %p312 = pneg %p151
        %p313 = pneg %p148
        %p314 = pneg %p172
        %p315 = pneg %p169
        %p316 = pneg %p198
        %p317 = pneg %p195
        %s318 = sand.u32 %s185, 1
        %s319 = scalar_lea.sflag [#allocation5], %s318
        %s320 = sand.u32 %s185, 1
        %s321 = smul.addr %s320, 8
        %s322 = scalar_lea.vmem [#allocation9], %s321
        %v323 = vld [vmem:[%s284] sm:$0xff]
        %v324 = vld [vmem:[%s4] sm:$0x1]
        %v326 = vlaneseq
        %v327 = vshrl.u32 %v326, 7
        %v328 = vsub.s32 0, %v327
        %v329 = vrot.slane %v324, %v328
        %v331 = vadd.f32 %v323, %v329
        %332 = vst [vmem:[#allocation2] sm:$0xff] %v331
        %v333 = vld [vmem:[#allocation6] sm:$0xff]
        %v334 = vld [vmem:[#allocation6 + $0x8] sm:$0xff]
        %v335 = vld [vmem:[#allocation6 + $0x10] sm:$0xff]
        %v336 = vld [vmem:[#allocation6 + $0x18] sm:$0xff]
        %v337 = vld [vmem:[#allocation6 + $0x20] sm:$0xff]
        %v338 = vld [vmem:[#allocation6 + $0x28] sm:$0xff]
        %v339 = vld [vmem:[#allocation6 + $0x30] sm:$0xff]
        %v340 = vld [vmem:[#allocation6 + $0x38] sm:$0xff]
        %v341 = vld [vmem:[#allocation6 + $0x40] sm:$0xff]
        %v342 = vld [vmem:[#allocation6 + $0x48] sm:$0xff]
        %v343 = vld [vmem:[#allocation6 + $0x50] sm:$0xff]
        %v344 = vld [vmem:[#allocation6 + $0x58] sm:$0xff]
        %v345 = vld [vmem:[#allocation6 + $0x60] sm:$0xff]
        %v346 = vld [vmem:[#allocation6 + $0x68] sm:$0xff]
        %v347 = vld [vmem:[#allocation6 + $0x70] sm:$0xff]
        %v348 = vld [vmem:[#allocation6 + $0x78] sm:$0xff]
        %v349 = vld [vmem:[%s2] sm:$0x1]
        %v351 = vlaneseq
        %v352 = vshrl.u32 %v351, 7
        %v353 = vsub.s32 0, %v352
        %v354 = vrot.slane %v349, %v353
        %356 = vmatprep.subr.mxu0 0.0
        %v357 = vand.u32 %v333, 4294901760
        %358 = vmatpush1.msra.mxu0 %v357
        %359 = vmatprep.subr.mxu0 0.0
        %v360 = vand.u32 %v334, 4294901760
        %361 = vmatpush1.msra.mxu0 %v360
        %362 = vmatprep.subr.mxu0 0.0
        %v363 = vand.u32 %v335, 4294901760
        %364 = vmatpush1.msra.mxu0 %v363
        %365 = vmatprep.subr.mxu0 0.0
        %v366 = vand.u32 %v336, 4294901760
        %367 = vmatpush1.msra.mxu0 %v366
        %368 = vmatprep.subr.mxu0 0.0
        %v369 = vand.u32 %v337, 4294901760
        %370 = vmatpush1.msra.mxu0 %v369
        %371 = vmatprep.subr.mxu0 0.0
        %v372 = vand.u32 %v338, 4294901760
        %373 = vmatpush1.msra.mxu0 %v372
        %374 = vmatprep.subr.mxu0 0.0
        %v375 = vand.u32 %v339, 4294901760
        %376 = vmatpush1.msra.mxu0 %v375
        %377 = vmatprep.subr.mxu0 0.0
        %v378 = vand.u32 %v340, 4294901760
        %379 = vmatpush1.msra.mxu0 %v378
        %380 = vmatprep.subr.mxu0 0.0
        %v381 = vand.u32 %v341, 4294901760
        %382 = vmatpush1.msra.mxu0 %v381
        %383 = vmatprep.subr.mxu0 0.0
        %v384 = vand.u32 %v342, 4294901760
        %385 = vmatpush1.msra.mxu0 %v384
        %386 = vmatprep.subr.mxu0 0.0
        %v387 = vand.u32 %v343, 4294901760
        %388 = vmatpush1.msra.mxu0 %v387
        %389 = vmatprep.subr.mxu0 0.0
        %v390 = vand.u32 %v344, 4294901760
        %391 = vmatpush1.msra.mxu0 %v390
        %392 = vmatprep.subr.mxu0 0.0
        %v393 = vand.u32 %v345, 4294901760
        %394 = vmatpush1.msra.mxu0 %v393
        %395 = vmatprep.subr.mxu0 0.0
        %v396 = vand.u32 %v346, 4294901760
        %397 = vmatpush1.msra.mxu0 %v396
        %398 = vmatprep.subr.mxu0 0.0
        %v399 = vand.u32 %v347, 4294901760
        %400 = vmatpush1.msra.mxu0 %v399
        %401 = vmatprep.subr.mxu0 0.0
        %v402 = vand.u32 %v348, 4294901760
        %403 = vmatpush1.msra.mxu0 %v402
        %404 = vmatprep.subr.mxu0 0.0
        %405 = vmatpush1.msra.mxu0 0.0
        %406 = vmatprep.subr.mxu0 0.0
        %407 = vmatpush1.msra.mxu0 0.0
        %408 = vmatprep.subr.mxu0 0.0
        %409 = vmatpush1.msra.mxu0 0.0
        %410 = vmatprep.subr.mxu0 0.0
        %411 = vmatpush1.msra.mxu0 0.0
        %412 = vmatprep.subr.mxu0 0.0
        %413 = vmatpush1.msra.mxu0 0.0
        %414 = vmatprep.subr.mxu0 0.0
        %415 = vmatpush1.msra.mxu0 0.0
        %416 = vmatprep.subr.mxu0 0.0
        %417 = vmatpush1.msra.mxu0 0.0
        %418 = vmatprep.subr.mxu0 0.0
        %419 = vmatpush1.msra.mxu0 0.0
        %420 = vmatprep.subr.mxu0 0.0
        %421 = vmatpush1.msra.mxu0 0.0
        %422 = vmatprep.subr.mxu0 0.0
        %423 = vmatpush1.msra.mxu0 0.0
        %424 = vmatprep.subr.mxu0 0.0
        %425 = vmatpush1.msra.mxu0 0.0
        %426 = vmatprep.subr.mxu0 0.0
        %427 = vmatpush1.msra.mxu0 0.0
        %428 = vmatprep.subr.mxu0 0.0
        %429 = vmatpush1.msra.mxu0 0.0
        %430 = vmatprep.subr.mxu0 0.0
        %431 = vmatpush1.msra.mxu0 0.0
        %432 = vmatprep.subr.mxu0 0.0
        %433 = vmatpush1.msra.mxu0 0.0
        %434 = vmatprep.subr.mxu0 0.0
        %435 = vmatpush1.msra.mxu0 0.0
        %436 = vmatprep.mubr.f32.mxu0 0.0
        %v437 = vand.u32 %v323, 4294901760
        %v438 = vsub.f32 %v323, %v437
        %v439 = vand.u32 %v438, 4294901760
        %v440 = vsub.f32 %v438, %v439
        %v441 = vand.u32 %v440, 4294901760
        %442 = vmatmul.mubr.f32.gmra.mrb[0].mxu0 %v441
        %v443 = vpop.f32.mrb[0].mxu0
        %v444 = vadd.f32 %v354, %v443
        %v445 = vpop.f32.mrb[0].mxu0
        %446 = vdwg.mxu0
        %447 = vmatprep.subr.mxu0 0.0
        %v448 = vand.u32 %v333, 4294901760
        %v449 = vsub.f32 %v333, %v448
        %v450 = vand.u32 %v449, 4294901760
        %v451 = vsub.f32 %v449, %v450
        %v452 = vand.u32 %v451, 4294901760
        %453 = vmatpush1.msra.mxu0 %v452
        %454 = vmatprep.subr.mxu0 0.0
        %v455 = vand.u32 %v334, 4294901760
        %v456 = vsub.f32 %v334, %v455
        %v457 = vand.u32 %v456, 4294901760
        %v458 = vsub.f32 %v456, %v457
        %v459 = vand.u32 %v458, 4294901760
        %460 = vmatpush1.msra.mxu0 %v459
        %461 = vmatprep.subr.mxu0 0.0
        %v462 = vand.u32 %v335, 4294901760
        %v463 = vsub.f32 %v335, %v462
        %v464 = vand.u32 %v463, 4294901760
        %v465 = vsub.f32 %v463, %v464
        %v466 = vand.u32 %v465, 4294901760
        %467 = vmatpush1.msra.mxu0 %v466
        %468 = vmatprep.subr.mxu0 0.0
        %v469 = vand.u32 %v336, 4294901760
        %v470 = vsub.f32 %v336, %v469
        %v471 = vand.u32 %v470, 4294901760
        %v472 = vsub.f32 %v470, %v471
        %v473 = vand.u32 %v472, 4294901760
        %474 = vmatpush1.msra.mxu0 %v473
        %475 = vmatprep.subr.mxu0 0.0
        %v476 = vand.u32 %v337, 4294901760
        %v477 = vsub.f32 %v337, %v476
        %v478 = vand.u32 %v477, 4294901760
        %v479 = vsub.f32 %v477, %v478
        %v480 = vand.u32 %v479, 4294901760
        %481 = vmatpush1.msra.mxu0 %v480
        %482 = vmatprep.subr.mxu0 0.0
        %v483 = vand.u32 %v338, 4294901760
        %v484 = vsub.f32 %v338, %v483
        %v485 = vand.u32 %v484, 4294901760
        %v486 = vsub.f32 %v484, %v485
        %v487 = vand.u32 %v486, 4294901760
        %488 = vmatpush1.msra.mxu0 %v487
        %489 = vmatprep.subr.mxu0 0.0
        %v490 = vand.u32 %v339, 4294901760
        %v491 = vsub.f32 %v339, %v490
        %v492 = vand.u32 %v491, 4294901760
        %v493 = vsub.f32 %v491, %v492
        %v494 = vand.u32 %v493, 4294901760
        %495 = vmatpush1.msra.mxu0 %v494
        %496 = vmatprep.subr.mxu0 0.0
        %v497 = vand.u32 %v340, 4294901760
        %v498 = vsub.f32 %v340, %v497
        %v499 = vand.u32 %v498, 4294901760
        %v500 = vsub.f32 %v498, %v499
        %v501 = vand.u32 %v500, 4294901760
        %502 = vmatpush1.msra.mxu0 %v501
        %503 = vmatprep.subr.mxu0 0.0
        %v504 = vand.u32 %v341, 4294901760
        %v505 = vsub.f32 %v341, %v504
        %v506 = vand.u32 %v505, 4294901760
        %v507 = vsub.f32 %v505, %v506
        %v508 = vand.u32 %v507, 4294901760
        %509 = vmatpush1.msra.mxu0 %v508
        %510 = vmatprep.subr.mxu0 0.0
        %v511 = vand.u32 %v342, 4294901760
        %v512 = vsub.f32 %v342, %v511
        %v513 = vand.u32 %v512, 4294901760
        %v514 = vsub.f32 %v512, %v513
        %v515 = vand.u32 %v514, 4294901760
        %516 = vmatpush1.msra.mxu0 %v515
        %517 = vmatprep.subr.mxu0 0.0
        %v518 = vand.u32 %v343, 4294901760
        %v519 = vsub.f32 %v343, %v518
        %v520 = vand.u32 %v519, 4294901760
        %v521 = vsub.f32 %v519, %v520
        %v522 = vand.u32 %v521, 4294901760
        %523 = vmatpush1.msra.mxu0 %v522
        %524 = vmatprep.subr.mxu0 0.0
        %v525 = vand.u32 %v344, 4294901760
        %v526 = vsub.f32 %v344, %v525
        %v527 = vand.u32 %v526, 4294901760
        %v528 = vsub.f32 %v526, %v527
        %v529 = vand.u32 %v528, 4294901760
        %530 = vmatpush1.msra.mxu0 %v529
        %531 = vmatprep.subr.mxu0 0.0
        %v532 = vand.u32 %v345, 4294901760
        %v533 = vsub.f32 %v345, %v532
        %v534 = vand.u32 %v533, 4294901760
        %v535 = vsub.f32 %v533, %v534
        %v536 = vand.u32 %v535, 4294901760
        %537 = vmatpush1.msra.mxu0 %v536
        %538 = vmatprep.subr.mxu0 0.0
        %v539 = vand.u32 %v346, 4294901760
        %v540 = vsub.f32 %v346, %v539
        %v541 = vand.u32 %v540, 4294901760
        %v542 = vsub.f32 %v540, %v541
        %v543 = vand.u32 %v542, 4294901760
        %544 = vmatpush1.msra.mxu0 %v543
        %545 = vmatprep.subr.mxu0 0.0
        %v546 = vand.u32 %v347, 4294901760
        %v547 = vsub.f32 %v347, %v546
        %v548 = vand.u32 %v547, 4294901760
        %v549 = vsub.f32 %v547, %v548
        %v550 = vand.u32 %v549, 4294901760
        %551 = vmatpush1.msra.mxu0 %v550
        %552 = vmatprep.subr.mxu0 0.0
        %v553 = vand.u32 %v348, 4294901760
        %v554 = vsub.f32 %v348, %v553
        %v555 = vand.u32 %v554, 4294901760
        %v556 = vsub.f32 %v554, %v555
        %v557 = vand.u32 %v556, 4294901760
        %558 = vmatpush1.msra.mxu0 %v557
        %559 = vmatprep.subr.mxu0 0.0
        %560 = vmatpush1.msra.mxu0 0.0
        %561 = vmatprep.subr.mxu0 0.0
        %562 = vmatpush1.msra.mxu0 0.0
        %563 = vmatprep.subr.mxu0 0.0
        %564 = vmatpush1.msra.mxu0 0.0
        %565 = vmatprep.subr.mxu0 0.0
        %566 = vmatpush1.msra.mxu0 0.0
        %567 = vmatprep.subr.mxu0 0.0
        %568 = vmatpush1.msra.mxu0 0.0
        %569 = vmatprep.subr.mxu0 0.0
        %570 = vmatpush1.msra.mxu0 0.0
        %571 = vmatprep.subr.mxu0 0.0
        %572 = vmatpush1.msra.mxu0 0.0
        %573 = vmatprep.subr.mxu0 0.0
        %574 = vmatpush1.msra.mxu0 0.0
        %575 = vmatprep.subr.mxu0 0.0
        %576 = vmatpush1.msra.mxu0 0.0
        %577 = vmatprep.subr.mxu0 0.0
        %578 = vmatpush1.msra.mxu0 0.0
        %579 = vmatprep.subr.mxu0 0.0
        %580 = vmatpush1.msra.mxu0 0.0
        %581 = vmatprep.subr.mxu0 0.0
        %582 = vmatpush1.msra.mxu0 0.0
        %583 = vmatprep.subr.mxu0 0.0
        %584 = vmatpush1.msra.mxu0 0.0
        %585 = vmatprep.subr.mxu0 0.0
        %586 = vmatpush1.msra.mxu0 0.0
        %587 = vmatprep.subr.mxu0 0.0
        %588 = vmatpush1.msra.mxu0 0.0
        %589 = vmatprep.subr.mxu0 0.0
        %590 = vmatpush1.msra.mxu0 0.0
        %591 = vmatprep.mubr.f32.mxu0 0.0
        %v592 = vand.u32 %v323, 4294901760
        %593 = vmatmul.mubr.f32.gmra.mrb[0].mxu0 %v592
        %v594 = vpop.f32.mrb[0].mxu0
        %v595 = vadd.f32 %v444, %v594
        %v596 = vpop.f32.mrb[0].mxu0
        %597 = vdwg.mxu0
        %598 = vmatprep.subr.mxu0 0.0
        %v599 = vand.u32 %v333, 4294901760
        %v600 = vsub.f32 %v333, %v599
        %601 = vmatpush1.msra.mxu0 %v600
        %602 = vmatprep.subr.mxu0 0.0
        %v603 = vand.u32 %v334, 4294901760
        %v604 = vsub.f32 %v334, %v603
        %605 = vmatpush1.msra.mxu0 %v604
        %606 = vmatprep.subr.mxu0 0.0
        %v607 = vand.u32 %v335, 4294901760
        %v608 = vsub.f32 %v335, %v607
        %609 = vmatpush1.msra.mxu0 %v608
        %610 = vmatprep.subr.mxu0 0.0
        %v611 = vand.u32 %v336, 4294901760
        %v612 = vsub.f32 %v336, %v611
        %613 = vmatpush1.msra.mxu0 %v612
        %614 = vmatprep.subr.mxu0 0.0
        %v615 = vand.u32 %v337, 4294901760
        %v616 = vsub.f32 %v337, %v615
        %617 = vmatpush1.msra.mxu0 %v616
        %618 = vmatprep.subr.mxu0 0.0
        %v619 = vand.u32 %v338, 4294901760
        %v620 = vsub.f32 %v338, %v619
        %621 = vmatpush1.msra.mxu0 %v620
        %622 = vmatprep.subr.mxu0 0.0
        %v623 = vand.u32 %v339, 4294901760
        %v624 = vsub.f32 %v339, %v623
        %625 = vmatpush1.msra.mxu0 %v624
        %626 = vmatprep.subr.mxu0 0.0
        %v627 = vand.u32 %v340, 4294901760
        %v628 = vsub.f32 %v340, %v627
        %629 = vmatpush1.msra.mxu0 %v628
        %630 = vmatprep.subr.mxu0 0.0
        %v631 = vand.u32 %v341, 4294901760
        %v632 = vsub.f32 %v341, %v631
        %633 = vmatpush1.msra.mxu0 %v632
        %634 = vmatprep.subr.mxu0 0.0
        %v635 = vand.u32 %v342, 4294901760
        %v636 = vsub.f32 %v342, %v635
        %637 = vmatpush1.msra.mxu0 %v636
        %638 = vmatprep.subr.mxu0 0.0
        %v639 = vand.u32 %v343, 4294901760
        %v640 = vsub.f32 %v343, %v639
        %641 = vmatpush1.msra.mxu0 %v640
        %642 = vmatprep.subr.mxu0 0.0
        %v643 = vand.u32 %v344, 4294901760
        %v644 = vsub.f32 %v344, %v643
        %645 = vmatpush1.msra.mxu0 %v644
        %646 = vmatprep.subr.mxu0 0.0
        %v647 = vand.u32 %v345, 4294901760
        %v648 = vsub.f32 %v345, %v647
        %649 = vmatpush1.msra.mxu0 %v648
        %650 = vmatprep.subr.mxu0 0.0
        %v651 = vand.u32 %v346, 4294901760
        %v652 = vsub.f32 %v346, %v651
        %653 = vmatpush1.msra.mxu0 %v652
        %654 = vmatprep.subr.mxu0 0.0
        %v655 = vand.u32 %v347, 4294901760
        %v656 = vsub.f32 %v347, %v655
        %657 = vmatpush1.msra.mxu0 %v656
        %658 = vmatprep.subr.mxu0 0.0
        %v659 = vand.u32 %v348, 4294901760
        %v660 = vsub.f32 %v348, %v659
        %661 = vmatpush1.msra.mxu0 %v660
        %662 = vmatprep.subr.mxu0 0.0
        %663 = vmatpush1.msra.mxu0 0.0
        %664 = vmatprep.subr.mxu0 0.0
        %665 = vmatpush1.msra.mxu0 0.0
        %666 = vmatprep.subr.mxu0 0.0
        %667 = vmatpush1.msra.mxu0 0.0
        %668 = vmatprep.subr.mxu0 0.0
        %669 = vmatpush1.msra.mxu0 0.0
        %670 = vmatprep.subr.mxu0 0.0
        %671 = vmatpush1.msra.mxu0 0.0
        %672 = vmatprep.subr.mxu0 0.0
        %673 = vmatpush1.msra.mxu0 0.0
        %674 = vmatprep.subr.mxu0 0.0
        %675 = vmatpush1.msra.mxu0 0.0
        %676 = vmatprep.subr.mxu0 0.0
        %677 = vmatpush1.msra.mxu0 0.0
        %678 = vmatprep.subr.mxu0 0.0
        %679 = vmatpush1.msra.mxu0 0.0
        %680 = vmatprep.subr.mxu0 0.0
        %681 = vmatpush1.msra.mxu0 0.0
        %682 = vmatprep.subr.mxu0 0.0
        %683 = vmatpush1.msra.mxu0 0.0
        %684 = vmatprep.subr.mxu0 0.0
        %685 = vmatpush1.msra.mxu0 0.0
        %686 = vmatprep.subr.mxu0 0.0
        %687 = vmatpush1.msra.mxu0 0.0
        %688 = vmatprep.subr.mxu0 0.0
        %689 = vmatpush1.msra.mxu0 0.0
        %690 = vmatprep.subr.mxu0 0.0
        %691 = vmatpush1.msra.mxu0 0.0
        %692 = vmatprep.subr.mxu0 0.0
        %693 = vmatpush1.msra.mxu0 0.0
        %694 = vmatprep.mubr.f32.mxu0 0.0
        %v695 = vand.u32 %v323, 4294901760
        %v696 = vsub.f32 %v323, %v695
        %697 = vmatmul.mubr.f32.gmra.mrb[0].mxu0 %v696
        %v698 = vpop.f32.mrb[0].mxu0
        %v699 = vadd.f32 %v595, %v698
        %v700 = vpop.f32.mrb[0].mxu0
        %701 = vdwg.mxu0
        %702 = vmatprep.subr.mxu0 0.0
        %v703 = vand.u32 %v333, 4294901760
        %704 = vmatpush1.msra.mxu0 %v703
        %705 = vmatprep.subr.mxu0 0.0
        %v706 = vand.u32 %v334, 4294901760
        %707 = vmatpush1.msra.mxu0 %v706
        %708 = vmatprep.subr.mxu0 0.0
        %v709 = vand.u32 %v335, 4294901760
        %710 = vmatpush1.msra.mxu0 %v709
        %711 = vmatprep.subr.mxu0 0.0
        %v712 = vand.u32 %v336, 4294901760
        %713 = vmatpush1.msra.mxu0 %v712
        %714 = vmatprep.subr.mxu0 0.0
        %v715 = vand.u32 %v337, 4294901760
        %716 = vmatpush1.msra.mxu0 %v715
        %717 = vmatprep.subr.mxu0 0.0
        %v718 = vand.u32 %v338, 4294901760
        %719 = vmatpush1.msra.mxu0 %v718
        %720 = vmatprep.subr.mxu0 0.0
        %v721 = vand.u32 %v339, 4294901760
        %722 = vmatpush1.msra.mxu0 %v721
        %723 = vmatprep.subr.mxu0 0.0
        %v724 = vand.u32 %v340, 4294901760
        %725 = vmatpush1.msra.mxu0 %v724
        %726 = vmatprep.subr.mxu0 0.0
        %v727 = vand.u32 %v341, 4294901760
        %728 = vmatpush1.msra.mxu0 %v727
        %729 = vmatprep.subr.mxu0 0.0
        %v730 = vand.u32 %v342, 4294901760
        %731 = vmatpush1.msra.mxu0 %v730
        %732 = vmatprep.subr.mxu0 0.0
        %v733 = vand.u32 %v343, 4294901760
        %734 = vmatpush1.msra.mxu0 %v733
        %735 = vmatprep.subr.mxu0 0.0
        %v736 = vand.u32 %v344, 4294901760
        %737 = vmatpush1.msra.mxu0 %v736
        %738 = vmatprep.subr.mxu0 0.0
        %v739 = vand.u32 %v345, 4294901760
        %740 = vmatpush1.msra.mxu0 %v739
        %741 = vmatprep.subr.mxu0 0.0
        %v742 = vand.u32 %v346, 4294901760
        %743 = vmatpush1.msra.mxu0 %v742
        %744 = vmatprep.subr.mxu0 0.0
        %v745 = vand.u32 %v347, 4294901760
        %746 = vmatpush1.msra.mxu0 %v745
        %747 = vmatprep.subr.mxu0 0.0
        %v748 = vand.u32 %v348, 4294901760
        %749 = vmatpush1.msra.mxu0 %v748
        %750 = vmatprep.subr.mxu0 0.0
        %751 = vmatpush1.msra.mxu0 0.0
        %752 = vmatprep.subr.mxu0 0.0
        %753 = vmatpush1.msra.mxu0 0.0
        %754 = vmatprep.subr.mxu0 0.0
        %755 = vmatpush1.msra.mxu0 0.0
        %756 = vmatprep.subr.mxu0 0.0
        %757 = vmatpush1.msra.mxu0 0.0
        %758 = vmatprep.subr.mxu0 0.0
        %759 = vmatpush1.msra.mxu0 0.0
        %760 = vmatprep.subr.mxu0 0.0
        %761 = vmatpush1.msra.mxu0 0.0
        %762 = vmatprep.subr.mxu0 0.0
        %763 = vmatpush1.msra.mxu0 0.0
        %764 = vmatprep.subr.mxu0 0.0
        %765 = vmatpush1.msra.mxu0 0.0
        %766 = vmatprep.subr.mxu0 0.0
        %767 = vmatpush1.msra.mxu0 0.0
        %768 = vmatprep.subr.mxu0 0.0
        %769 = vmatpush1.msra.mxu0 0.0
        %770 = vmatprep.subr.mxu0 0.0
        %771 = vmatpush1.msra.mxu0 0.0
        %772 = vmatprep.subr.mxu0 0.0
        %773 = vmatpush1.msra.mxu0 0.0
        %774 = vmatprep.subr.mxu0 0.0
        %775 = vmatpush1.msra.mxu0 0.0
        %776 = vmatprep.subr.mxu0 0.0
        %777 = vmatpush1.msra.mxu0 0.0
        %778 = vmatprep.subr.mxu0 0.0
        %779 = vmatpush1.msra.mxu0 0.0
        %780 = vmatprep.subr.mxu0 0.0
        %781 = vmatpush1.msra.mxu0 0.0
        %782 = vmatprep.mubr.f32.mxu0 0.0
        %v783 = vand.u32 %v323, 4294901760
        %v784 = vsub.f32 %v323, %v783
        %v785 = vand.u32 %v784, 4294901760
        %786 = vmatmul.mubr.f32.gmra.mrb[0].mxu0 %v785
        %v787 = vpop.f32.mrb[0].mxu0
        %v788 = vadd.f32 %v699, %v787
        %v789 = vpop.f32.mrb[0].mxu0
        %790 = vdwg.mxu0
        %791 = vmatprep.subr.mxu0 0.0
        %v792 = vand.u32 %v333, 4294901760
        %v793 = vsub.f32 %v333, %v792
        %v794 = vand.u32 %v793, 4294901760
        %795 = vmatpush1.msra.mxu0 %v794
        %796 = vmatprep.subr.mxu0 0.0
        %v797 = vand.u32 %v334, 4294901760
        %v798 = vsub.f32 %v334, %v797
        %v799 = vand.u32 %v798, 4294901760
        %800 = vmatpush1.msra.mxu0 %v799
        %801 = vmatprep.subr.mxu0 0.0
        %v802 = vand.u32 %v335, 4294901760
        %v803 = vsub.f32 %v335, %v802
        %v804 = vand.u32 %v803, 4294901760
        %805 = vmatpush1.msra.mxu0 %v804
        %806 = vmatprep.subr.mxu0 0.0
        %v807 = vand.u32 %v336, 4294901760
        %v808 = vsub.f32 %v336, %v807
        %v809 = vand.u32 %v808, 4294901760
        %810 = vmatpush1.msra.mxu0 %v809
        %811 = vmatprep.subr.mxu0 0.0
        %v812 = vand.u32 %v337, 4294901760
        %v813 = vsub.f32 %v337, %v812
        %v814 = vand.u32 %v813, 4294901760
        %815 = vmatpush1.msra.mxu0 %v814
        %816 = vmatprep.subr.mxu0 0.0
        %v817 = vand.u32 %v338, 4294901760
        %v818 = vsub.f32 %v338, %v817
        %v819 = vand.u32 %v818, 4294901760
        %820 = vmatpush1.msra.mxu0 %v819
        %821 = vmatprep.subr.mxu0 0.0
        %v822 = vand.u32 %v339, 4294901760
        %v823 = vsub.f32 %v339, %v822
        %v824 = vand.u32 %v823, 4294901760
        %825 = vmatpush1.msra.mxu0 %v824
        %826 = vmatprep.subr.mxu0 0.0
        %v827 = vand.u32 %v340, 4294901760
        %v828 = vsub.f32 %v340, %v827
        %v829 = vand.u32 %v828, 4294901760
        %830 = vmatpush1.msra.mxu0 %v829
        %831 = vmatprep.subr.mxu0 0.0
        %v832 = vand.u32 %v341, 4294901760
        %v833 = vsub.f32 %v341, %v832
        %v834 = vand.u32 %v833, 4294901760
        %835 = vmatpush1.msra.mxu0 %v834
        %836 = vmatprep.subr.mxu0 0.0
        %v837 = vand.u32 %v342, 4294901760
        %v838 = vsub.f32 %v342, %v837
        %v839 = vand.u32 %v838, 4294901760
        %840 = vmatpush1.msra.mxu0 %v839
        %841 = vmatprep.subr.mxu0 0.0
        %v842 = vand.u32 %v343, 4294901760
        %v843 = vsub.f32 %v343, %v842
        %v844 = vand.u32 %v843, 4294901760
        %845 = vmatpush1.msra.mxu0 %v844
        %846 = vmatprep.subr.mxu0 0.0
        %v847 = vand.u32 %v344, 4294901760
        %v848 = vsub.f32 %v344, %v847
        %v849 = vand.u32 %v848, 4294901760
        %850 = vmatpush1.msra.mxu0 %v849
        %851 = vmatprep.subr.mxu0 0.0
        %v852 = vand.u32 %v345, 4294901760
        %v853 = vsub.f32 %v345, %v852
        %v854 = vand.u32 %v853, 4294901760
        %855 = vmatpush1.msra.mxu0 %v854
        %856 = vmatprep.subr.mxu0 0.0
        %v857 = vand.u32 %v346, 4294901760
        %v858 = vsub.f32 %v346, %v857
        %v859 = vand.u32 %v858, 4294901760
        %860 = vmatpush1.msra.mxu0 %v859
        %861 = vmatprep.subr.mxu0 0.0
        %v862 = vand.u32 %v347, 4294901760
        %v863 = vsub.f32 %v347, %v862
        %v864 = vand.u32 %v863, 4294901760
        %865 = vmatpush1.msra.mxu0 %v864
        %866 = vmatprep.subr.mxu0 0.0
        %v867 = vand.u32 %v348, 4294901760
        %v868 = vsub.f32 %v348, %v867
        %v869 = vand.u32 %v868, 4294901760
        %870 = vmatpush1.msra.mxu0 %v869
        %871 = vmatprep.subr.mxu0 0.0
        %872 = vmatpush1.msra.mxu0 0.0
        %873 = vmatprep.subr.mxu0 0.0
        %874 = vmatpush1.msra.mxu0 0.0
        %875 = vmatprep.subr.mxu0 0.0
        %876 = vmatpush1.msra.mxu0 0.0
        %877 = vmatprep.subr.mxu0 0.0
        %878 = vmatpush1.msra.mxu0 0.0
        %879 = vmatprep.subr.mxu0 0.0
        %880 = vmatpush1.msra.mxu0 0.0
        %881 = vmatprep.subr.mxu0 0.0
        %882 = vmatpush1.msra.mxu0 0.0
        %883 = vmatprep.subr.mxu0 0.0
        %884 = vmatpush1.msra.mxu0 0.0
        %885 = vmatprep.subr.mxu0 0.0
        %886 = vmatpush1.msra.mxu0 0.0
        %887 = vmatprep.subr.mxu0 0.0
        %888 = vmatpush1.msra.mxu0 0.0
        %889 = vmatprep.subr.mxu0 0.0
        %890 = vmatpush1.msra.mxu0 0.0
        %891 = vmatprep.subr.mxu0 0.0
        %892 = vmatpush1.msra.mxu0 0.0
        %893 = vmatprep.subr.mxu0 0.0
        %894 = vmatpush1.msra.mxu0 0.0
        %895 = vmatprep.subr.mxu0 0.0
        %896 = vmatpush1.msra.mxu0 0.0
        %897 = vmatprep.subr.mxu0 0.0
        %898 = vmatpush1.msra.mxu0 0.0
        %899 = vmatprep.subr.mxu0 0.0
        %900 = vmatpush1.msra.mxu0 0.0
        %901 = vmatprep.subr.mxu0 0.0
        %902 = vmatpush1.msra.mxu0 0.0
        %903 = vmatprep.mubr.f32.mxu0 0.0
        %v904 = vand.u32 %v323, 4294901760
        %905 = vmatmul.mubr.f32.gmra.mrb[0].mxu0 %v904
        %v906 = vpop.f32.mrb[0].mxu0
        %v907 = vadd.f32 %v788, %v906
        %v908 = vpop.f32.mrb[0].mxu0
        %909 = vdwg.mxu0
        %910 = vmatprep.subr.mxu0 0.0
        %v911 = vand.u32 %v333, 4294901760
        %912 = vmatpush1.msra.mxu0 %v911
        %913 = vmatprep.subr.mxu0 0.0
        %v914 = vand.u32 %v334, 4294901760
        %915 = vmatpush1.msra.mxu0 %v914
        %916 = vmatprep.subr.mxu0 0.0
        %v917 = vand.u32 %v335, 4294901760
        %918 = vmatpush1.msra.mxu0 %v917
        %919 = vmatprep.subr.mxu0 0.0
        %v920 = vand.u32 %v336, 4294901760
        %921 = vmatpush1.msra.mxu0 %v920
        %922 = vmatprep.subr.mxu0 0.0
        %v923 = vand.u32 %v337, 4294901760
        %924 = vmatpush1.msra.mxu0 %v923
        %925 = vmatprep.subr.mxu0 0.0
        %v926 = vand.u32 %v338, 4294901760
        %927 = vmatpush1.msra.mxu0 %v926
        %928 = vmatprep.subr.mxu0 0.0
        %v929 = vand.u32 %v339, 4294901760
        %930 = vmatpush1.msra.mxu0 %v929
        %931 = vmatprep.subr.mxu0 0.0
        %v932 = vand.u32 %v340, 4294901760
        %933 = vmatpush1.msra.mxu0 %v932
        %934 = vmatprep.subr.mxu0 0.0
        %v935 = vand.u32 %v341, 4294901760
        %936 = vmatpush1.msra.mxu0 %v935
        %937 = vmatprep.subr.mxu0 0.0
        %v938 = vand.u32 %v342, 4294901760
        %939 = vmatpush1.msra.mxu0 %v938
        %940 = vmatprep.subr.mxu0 0.0
        %v941 = vand.u32 %v343, 4294901760
        %942 = vmatpush1.msra.mxu0 %v941
        %943 = vmatprep.subr.mxu0 0.0
        %v944 = vand.u32 %v344, 4294901760
        %945 = vmatpush1.msra.mxu0 %v944
        %946 = vmatprep.subr.mxu0 0.0
        %v947 = vand.u32 %v345, 4294901760
        %948 = vmatpush1.msra.mxu0 %v947
        %949 = vmatprep.subr.mxu0 0.0
        %v950 = vand.u32 %v346, 4294901760
        %951 = vmatpush1.msra.mxu0 %v950
        %952 = vmatprep.subr.mxu0 0.0
        %v953 = vand.u32 %v347, 4294901760
        %954 = vmatpush1.msra.mxu0 %v953
        %955 = vmatprep.subr.mxu0 0.0
        %v956 = vand.u32 %v348, 4294901760
        %957 = vmatpush1.msra.mxu0 %v956
        %958 = vmatprep.subr.mxu0 0.0
        %959 = vmatpush1.msra.mxu0 0.0
        %960 = vmatprep.subr.mxu0 0.0
        %961 = vmatpush1.msra.mxu0 0.0
        %962 = vmatprep.subr.mxu0 0.0
        %963 = vmatpush1.msra.mxu0 0.0
        %964 = vmatprep.subr.mxu0 0.0
        %965 = vmatpush1.msra.mxu0 0.0
        %966 = vmatprep.subr.mxu0 0.0
        %967 = vmatpush1.msra.mxu0 0.0
        %968 = vmatprep.subr.mxu0 0.0
        %969 = vmatpush1.msra.mxu0 0.0
        %970 = vmatprep.subr.mxu0 0.0
        %971 = vmatpush1.msra.mxu0 0.0
        %972 = vmatprep.subr.mxu0 0.0
        %973 = vmatpush1.msra.mxu0 0.0
        %974 = vmatprep.subr.mxu0 0.0
        %975 = vmatpush1.msra.mxu0 0.0
        %976 = vmatprep.subr.mxu0 0.0
        %977 = vmatpush1.msra.mxu0 0.0
        %978 = vmatprep.subr.mxu0 0.0
        %979 = vmatpush1.msra.mxu0 0.0
        %980 = vmatprep.subr.mxu0 0.0
        %981 = vmatpush1.msra.mxu0 0.0
        %982 = vmatprep.subr.mxu0 0.0
        %983 = vmatpush1.msra.mxu0 0.0
        %984 = vmatprep.subr.mxu0 0.0
        %985 = vmatpush1.msra.mxu0 0.0
        %986 = vmatprep.subr.mxu0 0.0
        %987 = vmatpush1.msra.mxu0 0.0
        %988 = vmatprep.subr.mxu0 0.0
        %989 = vmatpush1.msra.mxu0 0.0
        %990 = vmatprep.mubr.f32.mxu0 0.0
        %v991 = vand.u32 %v323, 4294901760
        %992 = vmatmul.mubr.f32.gmra.mrb[0].mxu0 %v991
        %v993 = vpop.f32.mrb[0].mxu0
        %v994 = vadd.f32 %v907, %v993
        %v995 = vpop.f32.mrb[0].mxu0
        %996 = vdwg.mxu0
        %v997 = vmax.f32 %v994, 0.0
        %v998 = vld [vmem:[#allocation2] sm:$0xff]
        %v999 = vld [vmem:[#allocation8] sm:$0xff]
        %v1000 = vld [vmem:[#allocation8 + $0x8] sm:$0xff]
        %v1001 = vld [vmem:[#allocation8 + $0x10] sm:$0xff]
        %v1002 = vld [vmem:[#allocation8 + $0x18] sm:$0xff]
        %v1003 = vld [vmem:[#allocation8 + $0x20] sm:$0xff]
        %v1004 = vld [vmem:[#allocation8 + $0x28] sm:$0xff]
        %v1005 = vld [vmem:[#allocation8 + $0x30] sm:$0xff]
        %v1006 = vld [vmem:[#allocation8 + $0x38] sm:$0xff]
        %v1007 = vld [vmem:[#allocation8 + $0x40] sm:$0xff]
        %v1008 = vld [vmem:[#allocation8 + $0x48] sm:$0xff]
        %v1009 = vld [vmem:[#allocation8 + $0x50] sm:$0xff]
        %v1010 = vld [vmem:[#allocation8 + $0x58] sm:$0xff]
        %v1011 = vld [vmem:[#allocation8 + $0x60] sm:$0xff]
        %v1012 = vld [vmem:[#allocation8 + $0x68] sm:$0xff]
        %v1013 = vld [vmem:[#allocation8 + $0x70] sm:$0xff]
        %v1014 = vld [vmem:[#allocation8 + $0x78] sm:$0xff]
        %1015 = vmatprep.subr.mxu0 0.0
        %v1016 = vand.u32 %v999, 4294901760
        %1017 = vmatpush1.msra.mxu0 %v1016
        %1018 = vmatprep.subr.mxu0 0.0
        %v1019 = vand.u32 %v1000, 4294901760
        %1020 = vmatpush1.msra.mxu0 %v1019
        %1021 = vmatprep.subr.mxu0 0.0
        %v1022 = vand.u32 %v1001, 4294901760
        %1023 = vmatpush1.msra.mxu0 %v1022
        %1024 = vmatprep.subr.mxu0 0.0
        %v1025 = vand.u32 %v1002, 4294901760
        %1026 = vmatpush1.msra.mxu0 %v1025
        %1027 = vmatprep.subr.mxu0 0.0
        %v1028 = vand.u32 %v1003, 4294901760
        %1029 = vmatpush1.msra.mxu0 %v1028
        %1030 = vmatprep.subr.mxu0 0.0
        %v1031 = vand.u32 %v1004, 4294901760
        %1032 = vmatpush1.msra.mxu0 %v1031
        %1033 = vmatprep.subr.mxu0 0.0
        %v1034 = vand.u32 %v1005, 4294901760
        %1035 = vmatpush1.msra.mxu0 %v1034
        %1036 = vmatprep.subr.mxu0 0.0
        %v1037 = vand.u32 %v1006, 4294901760
        %1038 = vmatpush1.msra.mxu0 %v1037
        %1039 = vmatprep.subr.mxu0 0.0
        %v1040 = vand.u32 %v1007, 4294901760
        %1041 = vmatpush1.msra.mxu0 %v1040
        %1042 = vmatprep.subr.mxu0 0.0
        %v1043 = vand.u32 %v1008, 4294901760
        %1044 = vmatpush1.msra.mxu0 %v1043
        %1045 = vmatprep.subr.mxu0 0.0
        %v1046 = vand.u32 %v1009, 4294901760
        %1047 = vmatpush1.msra.mxu0 %v1046
        %1048 = vmatprep.subr.mxu0 0.0
        %v1049 = vand.u32 %v1010, 4294901760
        %1050 = vmatpush1.msra.mxu0 %v1049
        %1051 = vmatprep.subr.mxu0 0.0
        %v1052 = vand.u32 %v1011, 4294901760
        %1053 = vmatpush1.msra.mxu0 %v1052
        %1054 = vmatprep.subr.mxu0 0.0
        %v1055 = vand.u32 %v1012, 4294901760
        %1056 = vmatpush1.msra.mxu0 %v1055
        %1057 = vmatprep.subr.mxu0 0.0
        %v1058 = vand.u32 %v1013, 4294901760
        %1059 = vmatpush1.msra.mxu0 %v1058
        %1060 = vmatprep.subr.mxu0 0.0
        %v1061 = vand.u32 %v1014, 4294901760
        %1062 = vmatpush1.msra.mxu0 %v1061
        %1063 = vmatprep.subr.mxu0 0.0
        %1064 = vmatpush1.msra.mxu0 0.0
        %1065 = vmatprep.subr.mxu0 0.0
        %1066 = vmatpush1.msra.mxu0 0.0
        %1067 = vmatprep.subr.mxu0 0.0
        %1068 = vmatpush1.msra.mxu0 0.0
        %1069 = vmatprep.subr.mxu0 0.0
        %1070 = vmatpush1.msra.mxu0 0.0
        %1071 = vmatprep.subr.mxu0 0.0
        %1072 = vmatpush1.msra.mxu0 0.0
        %1073 = vmatprep.subr.mxu0 0.0
        %1074 = vmatpush1.msra.mxu0 0.0
        %1075 = vmatprep.subr.mxu0 0.0
        %1076 = vmatpush1.msra.mxu0 0.0
        %1077 = vmatprep.subr.mxu0 0.0
        %1078 = vmatpush1.msra.mxu0 0.0
        %1079 = vmatprep.subr.mxu0 0.0
        %1080 = vmatpush1.msra.mxu0 0.0
        %1081 = vmatprep.subr.mxu0 0.0
        %1082 = vmatpush1.msra.mxu0 0.0
        %1083 = vmatprep.subr.mxu0 0.0
        %1084 = vmatpush1.msra.mxu0 0.0
        %1085 = vmatprep.subr.mxu0 0.0
        %1086 = vmatpush1.msra.mxu0 0.0
        %1087 = vmatprep.subr.mxu0 0.0
        %1088 = vmatpush1.msra.mxu0 0.0
        %1089 = vmatprep.subr.mxu0 0.0
        %1090 = vmatpush1.msra.mxu0 0.0
        %1091 = vmatprep.subr.mxu0 0.0
        %1092 = vmatpush1.msra.mxu0 0.0
        %1093 = vmatprep.subr.mxu0 0.0
        %1094 = vmatpush1.msra.mxu0 0.0
        %1095 = vmatprep.mubr.f32.mxu0 0.0
        %v1096 = vand.u32 %v997, 4294901760
        %v1097 = vsub.f32 %v997, %v1096
        %v1098 = vand.u32 %v1097, 4294901760
        %v1099 = vsub.f32 %v1097, %v1098
        %v1100 = vand.u32 %v1099, 4294901760
        %1101 = vmatmul.mubr.f32.gmra.mrb[0].mxu0 %v1100
        %v1102 = vpop.f32.mrb[0].mxu0
        %v1103 = vadd.f32 0.0, %v1102
        %v1104 = vpop.f32.mrb[0].mxu0
        %1105 = vdwg.mxu0
        %1106 = vmatprep.subr.mxu0 0.0
        %v1107 = vand.u32 %v999, 4294901760
        %v1108 = vsub.f32 %v999, %v1107
        %v1109 = vand.u32 %v1108, 4294901760
        %v1110 = vsub.f32 %v1108, %v1109
        %v1111 = vand.u32 %v1110, 4294901760
        %1112 = vmatpush1.msra.mxu0 %v1111
        %1113 = vmatprep.subr.mxu0 0.0
        %v1114 = vand.u32 %v1000, 4294901760
        %v1115 = vsub.f32 %v1000, %v1114
        %v1116 = vand.u32 %v1115, 4294901760
        %v1117 = vsub.f32 %v1115, %v1116
        %v1118 = vand.u32 %v1117, 4294901760
        %1119 = vmatpush1.msra.mxu0 %v1118
        %1120 = vmatprep.subr.mxu0 0.0
        %v1121 = vand.u32 %v1001, 4294901760
        %v1122 = vsub.f32 %v1001, %v1121
        %v1123 = vand.u32 %v1122, 4294901760
        %v1124 = vsub.f32 %v1122, %v1123
        %v1125 = vand.u32 %v1124, 4294901760
        %1126 = vmatpush1.msra.mxu0 %v1125
        %1127 = vmatprep.subr.mxu0 0.0
        %v1128 = vand.u32 %v1002, 4294901760
        %v1129 = vsub.f32 %v1002, %v1128
        %v1130 = vand.u32 %v1129, 4294901760
        %v1131 = vsub.f32 %v1129, %v1130
        %v1132 = vand.u32 %v1131, 4294901760
        %1133 = vmatpush1.msra.mxu0 %v1132
        %1134 = vmatprep.subr.mxu0 0.0
        %v1135 = vand.u32 %v1003, 4294901760
        %v1136 = vsub.f32 %v1003, %v1135
        %v1137 = vand.u32 %v1136, 4294901760
        %v1138 = vsub.f32 %v1136, %v1137
        %v1139 = vand.u32 %v1138, 4294901760
        %1140 = vmatpush1.msra.mxu0 %v1139
        %1141 = vmatprep.subr.mxu0 0.0
        %v1142 = vand.u32 %v1004, 4294901760
        %v1143 = vsub.f32 %v1004, %v1142
        %v1144 = vand.u32 %v1143, 4294901760
        %v1145 = vsub.f32 %v1143, %v1144
        %v1146 = vand.u32 %v1145, 4294901760
        %1147 = vmatpush1.msra.mxu0 %v1146
        %1148 = vmatprep.subr.mxu0 0.0
        %v1149 = vand.u32 %v1005, 4294901760
        %v1150 = vsub.f32 %v1005, %v1149
        %v1151 = vand.u32 %v1150, 4294901760
        %v1152 = vsub.f32 %v1150, %v1151
        %v1153 = vand.u32 %v1152, 4294901760
        %1154 = vmatpush1.msra.mxu0 %v1153
        %1155 = vmatprep.subr.mxu0 0.0
        %v1156 = vand.u32 %v1006, 4294901760
        %v1157 = vsub.f32 %v1006, %v1156
        %v1158 = vand.u32 %v1157, 4294901760
        %v1159 = vsub.f32 %v1157, %v1158
        %v1160 = vand.u32 %v1159, 4294901760
        %1161 = vmatpush1.msra.mxu0 %v1160
        %1162 = vmatprep.subr.mxu0 0.0
        %v1163 = vand.u32 %v1007, 4294901760
        %v1164 = vsub.f32 %v1007, %v1163
        %v1165 = vand.u32 %v1164, 4294901760
        %v1166 = vsub.f32 %v1164, %v1165
        %v1167 = vand.u32 %v1166, 4294901760
        %1168 = vmatpush1.msra.mxu0 %v1167
        %1169 = vmatprep.subr.mxu0 0.0
        %v1170 = vand.u32 %v1008, 4294901760
        %v1171 = vsub.f32 %v1008, %v1170
        %v1172 = vand.u32 %v1171, 4294901760
        %v1173 = vsub.f32 %v1171, %v1172
        %v1174 = vand.u32 %v1173, 4294901760
        %1175 = vmatpush1.msra.mxu0 %v1174
        %1176 = vmatprep.subr.mxu0 0.0
        %v1177 = vand.u32 %v1009, 4294901760
        %v1178 = vsub.f32 %v1009, %v1177
        %v1179 = vand.u32 %v1178, 4294901760
        %v1180 = vsub.f32 %v1178, %v1179
        %v1181 = vand.u32 %v1180, 4294901760
        %1182 = vmatpush1.msra.mxu0 %v1181
        %1183 = vmatprep.subr.mxu0 0.0
        %v1184 = vand.u32 %v1010, 4294901760
        %v1185 = vsub.f32 %v1010, %v1184
        %v1186 = vand.u32 %v1185, 4294901760
        %v1187 = vsub.f32 %v1185, %v1186
        %v1188 = vand.u32 %v1187, 4294901760
        %1189 = vmatpush1.msra.mxu0 %v1188
        %1190 = vmatprep.subr.mxu0 0.0
        %v1191 = vand.u32 %v1011, 4294901760
        %v1192 = vsub.f32 %v1011, %v1191
        %v1193 = vand.u32 %v1192, 4294901760
        %v1194 = vsub.f32 %v1192, %v1193
        %v1195 = vand.u32 %v1194, 4294901760
        %1196 = vmatpush1.msra.mxu0 %v1195
        %1197 = vmatprep.subr.mxu0 0.0
        %v1198 = vand.u32 %v1012, 4294901760
        %v1199 = vsub.f32 %v1012, %v1198
        %v1200 = vand.u32 %v1199, 4294901760
        %v1201 = vsub.f32 %v1199, %v1200
        %v1202 = vand.u32 %v1201, 4294901760
        %1203 = vmatpush1.msra.mxu0 %v1202
        %1204 = vmatprep.subr.mxu0 0.0
        %v1205 = vand.u32 %v1013, 4294901760
        %v1206 = vsub.f32 %v1013, %v1205
        %v1207 = vand.u32 %v1206, 4294901760
        %v1208 = vsub.f32 %v1206, %v1207
        %v1209 = vand.u32 %v1208, 4294901760
        %1210 = vmatpush1.msra.mxu0 %v1209
        %1211 = vmatprep.subr.mxu0 0.0
        %v1212 = vand.u32 %v1014, 4294901760
        %v1213 = vsub.f32 %v1014, %v1212
        %v1214 = vand.u32 %v1213, 4294901760
        %v1215 = vsub.f32 %v1213, %v1214
        %v1216 = vand.u32 %v1215, 4294901760
        %1217 = vmatpush1.msra.mxu0 %v1216
        %1218 = vmatprep.subr.mxu0 0.0
        %1219 = vmatpush1.msra.mxu0 0.0
        %1220 = vmatprep.subr.mxu0 0.0
        %1221 = vmatpush1.msra.mxu0 0.0
        %1222 = vmatprep.subr.mxu0 0.0
        %1223 = vmatpush1.msra.mxu0 0.0
        %1224 = vmatprep.subr.mxu0 0.0
        %1225 = vmatpush1.msra.mxu0 0.0
        %1226 = vmatprep.subr.mxu0 0.0
        %1227 = vmatpush1.msra.mxu0 0.0
        %1228 = vmatprep.subr.mxu0 0.0
        %1229 = vmatpush1.msra.mxu0 0.0
        %1230 = vmatprep.subr.mxu0 0.0
        %1231 = vmatpush1.msra.mxu0 0.0
        %1232 = vmatprep.subr.mxu0 0.0
        %1233 = vmatpush1.msra.mxu0 0.0
        %1234 = vmatprep.subr.mxu0 0.0
        %1235 = vmatpush1.msra.mxu0 0.0
        %1236 = vmatprep.subr.mxu0 0.0
        %1237 = vmatpush1.msra.mxu0 0.0
        %1238 = vmatprep.subr.mxu0 0.0
        %1239 = vmatpush1.msra.mxu0 0.0
        %1240 = vmatprep.subr.mxu0 0.0
        %1241 = vmatpush1.msra.mxu0 0.0
        %1242 = vmatprep.subr.mxu0 0.0
        %1243 = vmatpush1.msra.mxu0 0.0
        %1244 = vmatprep.subr.mxu0 0.0
        %1245 = vmatpush1.msra.mxu0 0.0
        %1246 = vmatprep.subr.mxu0 0.0
        %1247 = vmatpush1.msra.mxu0 0.0
        %1248 = vmatprep.subr.mxu0 0.0
        %1249 = vmatpush1.msra.mxu0 0.0
        %1250 = vmatprep.mubr.f32.mxu0 0.0
        %v1251 = vand.u32 %v997, 4294901760
        %1252 = vmatmul.mubr.f32.gmra.mrb[0].mxu0 %v1251
        %v1253 = vpop.f32.mrb[0].mxu0
        %v1254 = vadd.f32 %v1103, %v1253
        %v1255 = vpop.f32.mrb[0].mxu0
        %1256 = vdwg.mxu0
        %1257 = vmatprep.subr.mxu0 0.0
        %v1258 = vand.u32 %v999, 4294901760
        %v1259 = vsub.f32 %v999, %v1258
        %1260 = vmatpush1.msra.mxu0 %v1259
        %1261 = vmatprep.subr.mxu0 0.0
        %v1262 = vand.u32 %v1000, 4294901760
        %v1263 = vsub.f32 %v1000, %v1262
        %1264 = vmatpush1.msra.mxu0 %v1263
        %1265 = vmatprep.subr.mxu0 0.0
        %v1266 = vand.u32 %v1001, 4294901760
        %v1267 = vsub.f32 %v1001, %v1266
        %1268 = vmatpush1.msra.mxu0 %v1267
        %1269 = vmatprep.subr.mxu0 0.0
        %v1270 = vand.u32 %v1002, 4294901760
        %v1271 = vsub.f32 %v1002, %v1270
        %1272 = vmatpush1.msra.mxu0 %v1271
        %1273 = vmatprep.subr.mxu0 0.0
        %v1274 = vand.u32 %v1003, 4294901760
        %v1275 = vsub.f32 %v1003, %v1274
        %1276 = vmatpush1.msra.mxu0 %v1275
        %1277 = vmatprep.subr.mxu0 0.0
        %v1278 = vand.u32 %v1004, 4294901760
        %v1279 = vsub.f32 %v1004, %v1278
        %1280 = vmatpush1.msra.mxu0 %v1279
        %1281 = vmatprep.subr.mxu0 0.0
        %v1282 = vand.u32 %v1005, 4294901760
        %v1283 = vsub.f32 %v1005, %v1282
        %1284 = vmatpush1.msra.mxu0 %v1283
        %1285 = vmatprep.subr.mxu0 0.0
        %v1286 = vand.u32 %v1006, 4294901760
        %v1287 = vsub.f32 %v1006, %v1286
        %1288 = vmatpush1.msra.mxu0 %v1287
        %1289 = vmatprep.subr.mxu0 0.0
        %v1290 = vand.u32 %v1007, 4294901760
        %v1291 = vsub.f32 %v1007, %v1290
        %1292 = vmatpush1.msra.mxu0 %v1291
        %1293 = vmatprep.subr.mxu0 0.0
        %v1294 = vand.u32 %v1008, 4294901760
        %v1295 = vsub.f32 %v1008, %v1294
        %1296 = vmatpush1.msra.mxu0 %v1295
        %1297 = vmatprep.subr.mxu0 0.0
        %v1298 = vand.u32 %v1009, 4294901760
        %v1299 = vsub.f32 %v1009, %v1298
        %1300 = vmatpush1.msra.mxu0 %v1299
        %1301 = vmatprep.subr.mxu0 0.0
        %v1302 = vand.u32 %v1010, 4294901760
        %v1303 = vsub.f32 %v1010, %v1302
        %1304 = vmatpush1.msra.mxu0 %v1303
        %1305 = vmatprep.subr.mxu0 0.0
        %v1306 = vand.u32 %v1011, 4294901760
        %v1307 = vsub.f32 %v1011, %v1306
        %1308 = vmatpush1.msra.mxu0 %v1307
        %1309 = vmatprep.subr.mxu0 0.0
        %v1310 = vand.u32 %v1012, 4294901760
        %v1311 = vsub.f32 %v1012, %v1310
        %1312 = vmatpush1.msra.mxu0 %v1311
        %1313 = vmatprep.subr.mxu0 0.0
        %v1314 = vand.u32 %v1013, 4294901760
        %v1315 = vsub.f32 %v1013, %v1314
        %1316 = vmatpush1.msra.mxu0 %v1315
        %1317 = vmatprep.subr.mxu0 0.0
        %v1318 = vand.u32 %v1014, 4294901760
        %v1319 = vsub.f32 %v1014, %v1318
        %1320 = vmatpush1.msra.mxu0 %v1319
        %1321 = vmatprep.subr.mxu0 0.0
        %1322 = vmatpush1.msra.mxu0 0.0
        %1323 = vmatprep.subr.mxu0 0.0
        %1324 = vmatpush1.msra.mxu0 0.0
        %1325 = vmatprep.subr.mxu0 0.0
        %1326 = vmatpush1.msra.mxu0 0.0
        %1327 = vmatprep.subr.mxu0 0.0
        %1328 = vmatpush1.msra.mxu0 0.0
        %1329 = vmatprep.subr.mxu0 0.0
        %1330 = vmatpush1.msra.mxu0 0.0
        %1331 = vmatprep.subr.mxu0 0.0
        %1332 = vmatpush1.msra.mxu0 0.0
        %1333 = vmatprep.subr.mxu0 0.0
        %1334 = vmatpush1.msra.mxu0 0.0
        %1335 = vmatprep.subr.mxu0 0.0
        %1336 = vmatpush1.msra.mxu0 0.0
        %1337 = vmatprep.subr.mxu0 0.0
        %1338 = vmatpush1.msra.mxu0 0.0
        %1339 = vmatprep.subr.mxu0 0.0
        %1340 = vmatpush1.msra.mxu0 0.0
        %1341 = vmatprep.subr.mxu0 0.0
        %1342 = vmatpush1.msra.mxu0 0.0
        %1343 = vmatprep.subr.mxu0 0.0
        %1344 = vmatpush1.msra.mxu0 0.0
        %1345 = vmatprep.subr.mxu0 0.0
        %1346 = vmatpush1.msra.mxu0 0.0
        %1347 = vmatprep.subr.mxu0 0.0
        %1348 = vmatpush1.msra.mxu0 0.0
        %1349 = vmatprep.subr.mxu0 0.0
        %1350 = vmatpush1.msra.mxu0 0.0
        %1351 = vmatprep.subr.mxu0 0.0
        %1352 = vmatpush1.msra.mxu0 0.0
        %1353 = vmatprep.mubr.f32.mxu0 0.0
        %v1354 = vand.u32 %v997, 4294901760
        %v1355 = vsub.f32 %v997, %v1354
        %1356 = vmatmul.mubr.f32.gmra.mrb[0].mxu0 %v1355
        %v1357 = vpop.f32.mrb[0].mxu0
        %v1358 = vadd.f32 %v1254, %v1357
        %v1359 = vpop.f32.mrb[0].mxu0
        %1360 = vdwg.mxu0
        %1361 = vmatprep.subr.mxu0 0.0
        %v1362 = vand.u32 %v999, 4294901760
        %1363 = vmatpush1.msra.mxu0 %v1362
        %1364 = vmatprep.subr.mxu0 0.0
        %v1365 = vand.u32 %v1000, 4294901760
        %1366 = vmatpush1.msra.mxu0 %v1365
        %1367 = vmatprep.subr.mxu0 0.0
        %v1368 = vand.u32 %v1001, 4294901760
        %1369 = vmatpush1.msra.mxu0 %v1368
        %1370 = vmatprep.subr.mxu0 0.0
        %v1371 = vand.u32 %v1002, 4294901760
        %1372 = vmatpush1.msra.mxu0 %v1371
        %1373 = vmatprep.subr.mxu0 0.0
        %v1374 = vand.u32 %v1003, 4294901760
        %1375 = vmatpush1.msra.mxu0 %v1374
        %1376 = vmatprep.subr.mxu0 0.0
        %v1377 = vand.u32 %v1004, 4294901760
        %1378 = vmatpush1.msra.mxu0 %v1377
        %1379 = vmatprep.subr.mxu0 0.0
        %v1380 = vand.u32 %v1005, 4294901760
        %1381 = vmatpush1.msra.mxu0 %v1380
        %1382 = vmatprep.subr.mxu0 0.0
        %v1383 = vand.u32 %v1006, 4294901760
        %1384 = vmatpush1.msra.mxu0 %v1383
        %1385 = vmatprep.subr.mxu0 0.0
        %v1386 = vand.u32 %v1007, 4294901760
        %1387 = vmatpush1.msra.mxu0 %v1386
        %1388 = vmatprep.subr.mxu0 0.0
        %v1389 = vand.u32 %v1008, 4294901760
        %1390 = vmatpush1.msra.mxu0 %v1389
        %1391 = vmatprep.subr.mxu0 0.0
        %v1392 = vand.u32 %v1009, 4294901760
        %1393 = vmatpush1.msra.mxu0 %v1392
        %1394 = vmatprep.subr.mxu0 0.0
        %v1395 = vand.u32 %v1010, 4294901760
        %1396 = vmatpush1.msra.mxu0 %v1395
        %1397 = vmatprep.subr.mxu0 0.0
        %v1398 = vand.u32 %v1011, 4294901760
        %1399 = vmatpush1.msra.mxu0 %v1398
        %1400 = vmatprep.subr.mxu0 0.0
        %v1401 = vand.u32 %v1012, 4294901760
        %1402 = vmatpush1.msra.mxu0 %v1401
        %1403 = vmatprep.subr.mxu0 0.0
        %v1404 = vand.u32 %v1013, 4294901760
        %1405 = vmatpush1.msra.mxu0 %v1404
        %1406 = vmatprep.subr.mxu0 0.0
        %v1407 = vand.u32 %v1014, 4294901760
        %1408 = vmatpush1.msra.mxu0 %v1407
        %1409 = vmatprep.subr.mxu0 0.0
        %1410 = vmatpush1.msra.mxu0 0.0
        %1411 = vmatprep.subr.mxu0 0.0
        %1412 = vmatpush1.msra.mxu0 0.0
        %1413 = vmatprep.subr.mxu0 0.0
        %1414 = vmatpush1.msra.mxu0 0.0
        %1415 = vmatprep.subr.mxu0 0.0
        %1416 = vmatpush1.msra.mxu0 0.0
        %1417 = vmatprep.subr.mxu0 0.0
        %1418 = vmatpush1.msra.mxu0 0.0
        %1419 = vmatprep.subr.mxu0 0.0
        %1420 = vmatpush1.msra.mxu0 0.0
        %1421 = vmatprep.subr.mxu0 0.0
        %1422 = vmatpush1.msra.mxu0 0.0
        %1423 = vmatprep.subr.mxu0 0.0
        %1424 = vmatpush1.msra.mxu0 0.0
        %1425 = vmatprep.subr.mxu0 0.0
        %1426 = vmatpush1.msra.mxu0 0.0
        %1427 = vmatprep.subr.mxu0 0.0
        %1428 = vmatpush1.msra.mxu0 0.0
        %1429 = vmatprep.subr.mxu0 0.0
        %1430 = vmatpush1.msra.mxu0 0.0
        %1431 = vmatprep.subr.mxu0 0.0
        %1432 = vmatpush1.msra.mxu0 0.0
        %1433 = vmatprep.subr.mxu0 0.0
        %1434 = vmatpush1.msra.mxu0 0.0
        %1435 = vmatprep.subr.mxu0 0.0
        %1436 = vmatpush1.msra.mxu0 0.0
        %1437 = vmatprep.subr.mxu0 0.0
        %1438 = vmatpush1.msra.mxu0 0.0
        %1439 = vmatprep.subr.mxu0 0.0
        %1440 = vmatpush1.msra.mxu0 0.0
        %1441 = vmatprep.mubr.f32.mxu0 0.0
        %v1442 = vand.u32 %v997, 4294901760
        %v1443 = vsub.f32 %v997, %v1442
        %v1444 = vand.u32 %v1443, 4294901760
        %1445 = vmatmul.mubr.f32.gmra.mrb[0].mxu0 %v1444
        %v1446 = vpop.f32.mrb[0].mxu0
        %v1447 = vadd.f32 %v1358, %v1446
        %v1448 = vpop.f32.mrb[0].mxu0
        %1449 = vdwg.mxu0
        %1450 = vmatprep.subr.mxu0 0.0
        %v1451 = vand.u32 %v999, 4294901760
        %v1452 = vsub.f32 %v999, %v1451
        %v1453 = vand.u32 %v1452, 4294901760
        %1454 = vmatpush1.msra.mxu0 %v1453
        %1455 = vmatprep.subr.mxu0 0.0
        %v1456 = vand.u32 %v1000, 4294901760
        %v1457 = vsub.f32 %v1000, %v1456
        %v1458 = vand.u32 %v1457, 4294901760
        %1459 = vmatpush1.msra.mxu0 %v1458
        %1460 = vmatprep.subr.mxu0 0.0
        %v1461 = vand.u32 %v1001, 4294901760
        %v1462 = vsub.f32 %v1001, %v1461
        %v1463 = vand.u32 %v1462, 4294901760
        %1464 = vmatpush1.msra.mxu0 %v1463
        %1465 = vmatprep.subr.mxu0 0.0
        %v1466 = vand.u32 %v1002, 4294901760
        %v1467 = vsub.f32 %v1002, %v1466
        %v1468 = vand.u32 %v1467, 4294901760
        %1469 = vmatpush1.msra.mxu0 %v1468
        %1470 = vmatprep.subr.mxu0 0.0
        %v1471 = vand.u32 %v1003, 4294901760
        %v1472 = vsub.f32 %v1003, %v1471
        %v1473 = vand.u32 %v1472, 4294901760
        %1474 = vmatpush1.msra.mxu0 %v1473
        %1475 = vmatprep.subr.mxu0 0.0
        %v1476 = vand.u32 %v1004, 4294901760
        %v1477 = vsub.f32 %v1004, %v1476
        %v1478 = vand.u32 %v1477, 4294901760
        %1479 = vmatpush1.msra.mxu0 %v1478
        %1480 = vmatprep.subr.mxu0 0.0
        %v1481 = vand.u32 %v1005, 4294901760
        %v1482 = vsub.f32 %v1005, %v1481
        %v1483 = vand.u32 %v1482, 4294901760
        %1484 = vmatpush1.msra.mxu0 %v1483
        %1485 = vmatprep.subr.mxu0 0.0
        %v1486 = vand.u32 %v1006, 4294901760
        %v1487 = vsub.f32 %v1006, %v1486
        %v1488 = vand.u32 %v1487, 4294901760
        %1489 = vmatpush1.msra.mxu0 %v1488
        %1490 = vmatprep.subr.mxu0 0.0
        %v1491 = vand.u32 %v1007, 4294901760
        %v1492 = vsub.f32 %v1007, %v1491
        %v1493 = vand.u32 %v1492, 4294901760
        %1494 = vmatpush1.msra.mxu0 %v1493
        %1495 = vmatprep.subr.mxu0 0.0
        %v1496 = vand.u32 %v1008, 4294901760
        %v1497 = vsub.f32 %v1008, %v1496
        %v1498 = vand.u32 %v1497, 4294901760
        %1499 = vmatpush1.msra.mxu0 %v1498
        %1500 = vmatprep.subr.mxu0 0.0
        %v1501 = vand.u32 %v1009, 4294901760
        %v1502 = vsub.f32 %v1009, %v1501
        %v1503 = vand.u32 %v1502, 4294901760
        %1504 = vmatpush1.msra.mxu0 %v1503
        %1505 = vmatprep.subr.mxu0 0.0
        %v1506 = vand.u32 %v1010, 4294901760
        %v1507 = vsub.f32 %v1010, %v1506
        %v1508 = vand.u32 %v1507, 4294901760
        %1509 = vmatpush1.msra.mxu0 %v1508
        %1510 = vmatprep.subr.mxu0 0.0
        %v1511 = vand.u32 %v1011, 4294901760
        %v1512 = vsub.f32 %v1011, %v1511
        %v1513 = vand.u32 %v1512, 4294901760
        %1514 = vmatpush1.msra.mxu0 %v1513
        %1515 = vmatprep.subr.mxu0 0.0
        %v1516 = vand.u32 %v1012, 4294901760
        %v1517 = vsub.f32 %v1012, %v1516
        %v1518 = vand.u32 %v1517, 4294901760
        %1519 = vmatpush1.msra.mxu0 %v1518
        %1520 = vmatprep.subr.mxu0 0.0
        %v1521 = vand.u32 %v1013, 4294901760
        %v1522 = vsub.f32 %v1013, %v1521
        %v1523 = vand.u32 %v1522, 4294901760
        %1524 = vmatpush1.msra.mxu0 %v1523
        %1525 = vmatprep.subr.mxu0 0.0
        %v1526 = vand.u32 %v1014, 4294901760
        %v1527 = vsub.f32 %v1014, %v1526
        %v1528 = vand.u32 %v1527, 4294901760
        %1529 = vmatpush1.msra.mxu0 %v1528
        %1530 = vmatprep.subr.mxu0 0.0
        %1531 = vmatpush1.msra.mxu0 0.0
        %1532 = vmatprep.subr.mxu0 0.0
        %1533 = vmatpush1.msra.mxu0 0.0
        %1534 = vmatprep.subr.mxu0 0.0
        %1535 = vmatpush1.msra.mxu0 0.0
        %1536 = vmatprep.subr.mxu0 0.0
        %1537 = vmatpush1.msra.mxu0 0.0
        %1538 = vmatprep.subr.mxu0 0.0
        %1539 = vmatpush1.msra.mxu0 0.0
        %1540 = vmatprep.subr.mxu0 0.0
        %1541 = vmatpush1.msra.mxu0 0.0
        %1542 = vmatprep.subr.mxu0 0.0
        %1543 = vmatpush1.msra.mxu0 0.0
        %1544 = vmatprep.subr.mxu0 0.0
        %1545 = vmatpush1.msra.mxu0 0.0
        %1546 = vmatprep.subr.mxu0 0.0
        %1547 = vmatpush1.msra.mxu0 0.0
        %1548 = vmatprep.subr.mxu0 0.0
        %1549 = vmatpush1.msra.mxu0 0.0
        %1550 = vmatprep.subr.mxu0 0.0
        %1551 = vmatpush1.msra.mxu0 0.0
        %1552 = vmatprep.subr.mxu0 0.0
        %1553 = vmatpush1.msra.mxu0 0.0
        %1554 = vmatprep.subr.mxu0 0.0
        %1555 = vmatpush1.msra.mxu0 0.0
        %1556 = vmatprep.subr.mxu0 0.0
        %1557 = vmatpush1.msra.mxu0 0.0
        %1558 = vmatprep.subr.mxu0 0.0
        %1559 = vmatpush1.msra.mxu0 0.0
        %1560 = vmatprep.subr.mxu0 0.0
        %1561 = vmatpush1.msra.mxu0 0.0
        %1562 = vmatprep.mubr.f32.mxu0 0.0
        %v1563 = vand.u32 %v997, 4294901760
        %1564 = vmatmul.mubr.f32.gmra.mrb[0].mxu0 %v1563
        %v1565 = vpop.f32.mrb[0].mxu0
        %v1566 = vadd.f32 %v1447, %v1565
        %v1567 = vpop.f32.mrb[0].mxu0
        %1568 = vdwg.mxu0
        %1569 = vmatprep.subr.mxu0 0.0
        %v1570 = vand.u32 %v999, 4294901760
        %1571 = vmatpush1.msra.mxu0 %v1570
        %1572 = vmatprep.subr.mxu0 0.0
        %v1573 = vand.u32 %v1000, 4294901760
        %1574 = vmatpush1.msra.mxu0 %v1573
        %1575 = vmatprep.subr.mxu0 0.0
        %v1576 = vand.u32 %v1001, 4294901760
        %1577 = vmatpush1.msra.mxu0 %v1576
        %1578 = vmatprep.subr.mxu0 0.0
        %v1579 = vand.u32 %v1002, 4294901760
        %1580 = vmatpush1.msra.mxu0 %v1579
        %1581 = vmatprep.subr.mxu0 0.0
        %v1582 = vand.u32 %v1003, 4294901760
        %1583 = vmatpush1.msra.mxu0 %v1582
        %1584 = vmatprep.subr.mxu0 0.0
        %v1585 = vand.u32 %v1004, 4294901760
        %1586 = vmatpush1.msra.mxu0 %v1585
        %1587 = vmatprep.subr.mxu0 0.0
        %v1588 = vand.u32 %v1005, 4294901760
        %1589 = vmatpush1.msra.mxu0 %v1588
        %1590 = vmatprep.subr.mxu0 0.0
        %v1591 = vand.u32 %v1006, 4294901760
        %1592 = vmatpush1.msra.mxu0 %v1591
        %1593 = vmatprep.subr.mxu0 0.0
        %v1594 = vand.u32 %v1007, 4294901760
        %1595 = vmatpush1.msra.mxu0 %v1594
        %1596 = vmatprep.subr.mxu0 0.0
        %v1597 = vand.u32 %v1008, 4294901760
        %1598 = vmatpush1.msra.mxu0 %v1597
        %1599 = vmatprep.subr.mxu0 0.0
        %v1600 = vand.u32 %v1009, 4294901760
        %1601 = vmatpush1.msra.mxu0 %v1600
        %1602 = vmatprep.subr.mxu0 0.0
        %v1603 = vand.u32 %v1010, 4294901760
        %1604 = vmatpush1.msra.mxu0 %v1603
        %1605 = vmatprep.subr.mxu0 0.0
        %v1606 = vand.u32 %v1011, 4294901760
        %1607 = vmatpush1.msra.mxu0 %v1606
        %1608 = vmatprep.subr.mxu0 0.0
        %v1609 = vand.u32 %v1012, 4294901760
        %1610 = vmatpush1.msra.mxu0 %v1609
        %1611 = vmatprep.subr.mxu0 0.0
        %v1612 = vand.u32 %v1013, 4294901760
        %1613 = vmatpush1.msra.mxu0 %v1612
        %1614 = vmatprep.subr.mxu0 0.0
        %v1615 = vand.u32 %v1014, 4294901760
        %1616 = vmatpush1.msra.mxu0 %v1615
        %1617 = vmatprep.subr.mxu0 0.0
        %1618 = vmatpush1.msra.mxu0 0.0
        %1619 = vmatprep.subr.mxu0 0.0
        %1620 = vmatpush1.msra.mxu0 0.0
        %1621 = vmatprep.subr.mxu0 0.0
        %1622 = vmatpush1.msra.mxu0 0.0
        %1623 = vmatprep.subr.mxu0 0.0
        %1624 = vmatpush1.msra.mxu0 0.0
        %1625 = vmatprep.subr.mxu0 0.0
        %1626 = vmatpush1.msra.mxu0 0.0
        %1627 = vmatprep.subr.mxu0 0.0
        %1628 = vmatpush1.msra.mxu0 0.0
        %1629 = vmatprep.subr.mxu0 0.0
        %1630 = vmatpush1.msra.mxu0 0.0
        %1631 = vmatprep.subr.mxu0 0.0
        %1632 = vmatpush1.msra.mxu0 0.0
        %1633 = vmatprep.subr.mxu0 0.0
        %1634 = vmatpush1.msra.mxu0 0.0
        %1635 = vmatprep.subr.mxu0 0.0
        %1636 = vmatpush1.msra.mxu0 0.0
        %1637 = vmatprep.subr.mxu0 0.0
        %1638 = vmatpush1.msra.mxu0 0.0
        %1639 = vmatprep.subr.mxu0 0.0
        %1640 = vmatpush1.msra.mxu0 0.0
        %1641 = vmatprep.subr.mxu0 0.0
        %1642 = vmatpush1.msra.mxu0 0.0
        %1643 = vmatprep.subr.mxu0 0.0
        %1644 = vmatpush1.msra.mxu0 0.0
        %1645 = vmatprep.subr.mxu0 0.0
        %1646 = vmatpush1.msra.mxu0 0.0
        %1647 = vmatprep.subr.mxu0 0.0
        %1648 = vmatpush1.msra.mxu0 0.0
        %1649 = vmatprep.mubr.f32.mxu0 0.0
        %v1650 = vand.u32 %v997, 4294901760
        %1651 = vmatmul.mubr.f32.gmra.mrb[0].mxu0 %v1650
        %v1652 = vpop.f32.mrb[0].mxu0
        %v1653 = vadd.f32 %v1566, %v1652
        %v1654 = vpop.f32.mrb[0].mxu0
        %1655 = vdwg.mxu0
        %v1656 = vadd.f32 %v998, %v1653
        %1657 = vst [vmem:[#allocation2] sm:$0xff] %v1656
        %v1658 = vld [vmem:[#allocation2] sm:$0xff]
        %1659 = vadd.xlane.f32.xlu0 %v1658
        %v1660 = vpop.xlane.xlu0 %1659
        %v1661 = vmul.f32 %v1660, 0.03125
        %v1662 = vmul.f32 %v1658, %v1658
        %1663 = vadd.xlane.f32.xlu0 %v1662
        %v1664 = vpop.xlane.xlu0 %1663
        %v1665 = vmul.f32 %v1664, 0.03125
        %v1666 = vmul.f32 %v1661, %v1661
        %v1667 = vsub.f32 %v1665, %v1666
        %v1668 = vmax.f32 %v1667, 0.0
        %v1669 = vsub.f32 %v1658, %v1661
        %v1670 = vadd.f32 %v1668, 1e-05
        %v1671 = vrsqrt.pop %v1670
        %v1672 = vmul.f32 %v1669, %v1671
        %v1673 = vld [vmem:[%s5] sm:$0x1]
        %v1675 = vlaneseq
        %v1676 = vshrl.u32 %v1675, 7
        %v1677 = vsub.s32 0, %v1676
        %v1678 = vrot.slane %v1673, %v1677
        %v1680 = vmul.f32 %v1672, %v1678
        %v1681 = vld [vmem:[%s6] sm:$0x1]
        %v1683 = vlaneseq
        %v1684 = vshrl.u32 %v1683, 7
        %v1685 = vsub.s32 0, %v1684
        %v1686 = vrot.slane %v1681, %v1685
        %v1688 = vadd.f32 %v1680, %v1686
        %1689 = vst [vmem:[%s322] sm:$0xff] %v1688
        %s1690 = sand.u32 %s185, 1
        %s1691 = scalar_lea.sflag [#allocation5], %s1690
        %s1692 = sand.u32 %s185, 1
        %s1693 = smul.addr %s1692, 8
        %s1694 = scalar_lea.vmem [#allocation9], %s1693
        // Predicated region
        $region61: #{tpu_custom_call.1} parent=47 // pred_check
          %p1695 = pneg %p195
        $region62: #{tpu_custom_call.1} parent=47 // pred_check_branch
          %1697 = sbr.rel (%p1695) target = $region64
        $region63: #{tpu_custom_call.1} parent=47 // pred_region
          %s1699 = ssub.s32 128, 128
          %1700 = vsyncadd %s1691, %s1699
          %s1701 = smul.addr %s25, 128
          %s1702 = scalar_lea.hbm %s7, %s1701
          %s1704 = sshll.u32 %s1694, 4
          %s1705 = int_to_ptr.vmem [resolvable:$true] %s1704
          %1707 = dma.vmem_to_hbm [thread:$0]  %s1705, 128, %s1702, %s1691
        $region64: #{tpu_custom_call.1} parent=47 // pred_fallthru
          _
      $region48: #{tpu_custom_call.1} parent=5 // pred_fallthru
        _
      %p1708 = scmp.le.s32.totalorder 2, %s20
      // Predicated region
      $region65: #{tpu_custom_call.1} parent=5 // pred_check
        %p1709 = pneg %p1708
      $region66: #{tpu_custom_call.1} parent=5 // pred_check_branch
        %1711 = sbr.rel (%p1709) target = $region68
      $region67: #{tpu_custom_call.1} parent=5 // pred_region
        %s1712 = ssub.s32 %s20, 2
        // Predicated region
        $region69: #{tpu_custom_call.1} parent=67 // pred_check
          %p1713 = pneg %p201
        $region70: #{tpu_custom_call.1} parent=67 // pred_check_branch
          %1715 = sbr.rel (%p1713) target = $region72
        $region71: #{tpu_custom_call.1} parent=67 // pred_region
          %s1716 = sand.u32 %s186, 1
          %s1717 = scalar_lea.sflag [#allocation5], %s1716
          %s1718 = sand.u32 %s186, 1
          %s1719 = smul.addr %s1718, 8
          %s1720 = scalar_lea.vmem [#allocation9], %s1719
          %1721 = dma.done %s1717, 128
        $region72: #{tpu_custom_call.1} parent=67 // pred_fallthru
          _
      $region68: #{tpu_custom_call.1} parent=5 // pred_fallthru
        _
    $region6: #{tpu_custom_call.1} parent=1 // loop_footer
      %s24 = sadd.s32 1, %s20
    $region7: #{tpu_custom_call.1} parent=1 // loop_footer_branch
      %19 = sbr.rel target = $region3
    $region8: #{tpu_custom_call.1} parent=1 // loop_exit
      _
    %1722 = vsyncpa [#allocation4], 1
    %s1723 = scalar_lea.sflag [#allocation4], 1
    %1724 = vsyncpa %s1723, 1
    %1725 = vsyncpa [#allocation7], 1
    %1726 = vsyncpa [#allocation5], 1
    %s1727 = scalar_lea.sflag [#allocation5], 1
    %1728 = vsyncpa %s1727, 1

// kernel: tpu_custom_call.1
$region0: #{tpu_custom_call.1}
  #allocation0 [shape = 'u32[]', space=smem, size = 0x4, offset = 0x4, fixed_abs, tag = 'smem constant byte address 0x4 - core index']
  #allocation1 [shape = 'u32[144,128]{1,0:T(1,128)}', space=vmem, size = 0x12000, scoped, tag = 'internal scratch']
  #allocation2 [shape = 'f32[8,128]{1,0:T(8,128)}', space=vmem, size = 0x1000, scoped, tag = 'scratch operand']
  %s0 = inlined_call_operand.hbm [shape: f32[16,128], index: 0, kind: input, shape index: {}]
  %s1 = inlined_call_operand.hbm [shape: f32[128,128], index: 1, kind: input, shape index: {}]
  %s2 = inlined_call_operand.vmem [shape: f32[1,128], index: 2, kind: input, shape index: {}]
  %s3 = inlined_call_operand.hbm [shape: f32[128,128], index: 3, kind: input, shape index: {}]
  %s4 = inlined_call_operand.vmem [shape: f32[1,128], index: 4, kind: input, shape index: {}]
  %s5 = inlined_call_operand.vmem [shape: f32[1,128], index: 5, kind: input, shape index: {}]
  %s6 = inlined_call_operand.vmem [shape: f32[1,128], index: 6, kind: input, shape index: {}]
  %s7 = inlined_call_operand.hbm [shape: f32[16,128], index: 7, kind: output, shape index: {}]
  %s8 = sld [smem:[#allocation0]]
  $region73: #{tpu_custom_call.1} parent=0
    _
  %s10 = ssub.s32 1, %s8
  %s11 = scalar_select 0, %s10, %s8
  $region1: #{tpu_custom_call.1} parent=0
    #allocation3 [shape = 'u8[8192]{0}', space=vmem, size = 0x2000, scoped, tag = 'input window, operand 0']
    #allocation4 [shape = 's32[2]{0}', space=sflag, size = 0x8, scoped, tag = 'scoped memory for tpu_custom_call.1']
    #allocation5 [shape = 's32[2]{0}', space=sflag, size = 0x8, scoped, tag = 'scoped memory for tpu_custom_call.1']
    #allocation6 [shape = 'u8[65536]{0}', space=vmem, size = 0x10000, scoped, tag = 'input window, operand 1, single buffered']
    #allocation7 [shape = 's32[1]{0}', space=sflag, size = 0x4, scoped, tag = 'scoped memory for tpu_custom_call.1']
    #allocation8 [shape = 'u8[65536]{0}', space=vmem, size = 0x10000, scoped, tag = 'input window, operand 3, single buffered']
    #allocation9 [shape = 'u8[8192]{0}', space=vmem, size = 0x2000, scoped, tag = 'output window, operand 0']
    %12 = vsyncpa [#allocation4], 0
    %s13 = scalar_lea.sflag [#allocation4], 1
    %14 = vsyncpa %s13, 0
    %15 = vsyncpa [#allocation7], 0
    %16 = vsyncpa [#allocation5], 0
    %s17 = scalar_lea.sflag [#allocation5], 1
    %18 = vsyncpa %s17, 0
    loop: start=0, step=1, limit=4
    $region2: #{tpu_custom_call.1} parent=1 // loop_pre_header
      _
    $region3: #{tpu_custom_call.1} parent=1 // loop_header
      %s20 = sphi 0, %s24
      %p21 = scmp.ge.s32.totalorder %s20, 4
      %s30 = sphi 0, %s32
      %s33 = sphi 0, %s30
      %s34 = sphi 0, %s33
      %s50 = sphi 0, %s34
      %s54 = sphi 0, %s54
      %s56 = sphi 0, %s54
      %s57 = sphi 0, %s56
      %s71 = sphi 0, %s57
      %s75 = sphi 0, %s75
      %s77 = sphi 0, %s75
      %s78 = sphi 0, %s77
      %s92 = sphi 0, %s78
      %s96 = sphi 0, %s96
      %s98 = sphi 0, %s96
      %s99 = sphi 0, %s98
      %s113 = sphi 0, %s99
      %s117 = sphi 0, %s117
      %s119 = sphi 0, %s117
      %s120 = sphi 0, %s119
      %s134 = sphi 0, %s120
      %s138 = sphi 0, %s138
      %s140 = sphi 0, %s138
      %s141 = sphi 0, %s140
      %s155 = sphi 0, %s141
      %s159 = sphi 0, %s159
      %s161 = sphi 0, %s159
      %s162 = sphi 0, %s161
      %s176 = sphi 0, %s162
      %s182 = sphi 0, %s184
      %s185 = sphi 0, %s182
      %s186 = sphi 0, %s185
      %s202 = sphi 0, %s186
    $region4: #{tpu_custom_call.1} parent=1 // loop_header_branch
      %23 = sbr.rel (%p21) target = $region8
    $region5: #{tpu_custom_call.1} parent=1 // loop_body
      %s25 = ssub.s32 %s20, 1
      %s26 = ssub.s32 %s20, 2
      %s27 = sadd.s32 %s20, 1
      %s28 = ssub.s32 %s20, %s27
      %p29 = scmp.eq.s32.totalorder %s28, 0
      %s31 = sadd.s32 %s30, 1
      %s32 = scalar_select %p29, %s30, %s31
      %p35 = pneg %p29
      %p36 = scmp.eq.s32.totalorder %s20, 1
      %p37 = por %p35, %p36
      %p38 = scmp.ne.s32.totalorder %s30, %s33
      %p39 = scmp.eq.s32.totalorder %s20, 0
      %p40 = por %p38, %p39
      %p41 = scmp.ne.s32.totalorder %s30, %s33
      %p42 = scmp.eq.s32.totalorder %s25, 1
      %p43 = por %p41, %p42
      %p44 = scmp.ne.s32.totalorder %s33, %s34
      %p45 = scmp.eq.s32.totalorder %s25, 0
      %p46 = por %p44, %p45
      %p47 = scmp.ne.s32.totalorder %s33, %s34
      %p48 = scmp.eq.s32.totalorder %s26, 1
      %p49 = por %p47, %p48
      %p51 = scmp.ne.s32.totalorder %s34, %s50
      %p52 = scmp.eq.s32.totalorder %s26, 0
      %p53 = por %p51, %p52
      %s55 = sadd.s32 %s54, 1
      %p58 = scmp.eq.s32.totalorder %s20, 1
      %p59 = scmp.ne.s32.totalorder %s54, %s56
      %p60 = scmp.eq.s32.totalorder %s20, 0
      %p61 = por %p59, %p60
      %p62 = scmp.ne.s32.totalorder %s54, %s56
      %p63 = scmp.eq.s32.totalorder %s25, 1
      %p64 = por %p62, %p63
      %p65 = scmp.ne.s32.totalorder %s56, %s57
      %p66 = scmp.eq.s32.totalorder %s25, 0
      %p67 = por %p65, %p66
      %p68 = scmp.ne.s32.totalorder %s56, %s57
      %p69 = scmp.eq.s32.totalorder %s26, 1
      %p70 = por %p68, %p69
      %p72 = scmp.ne.s32.totalorder %s57, %s71
      %p73 = scmp.eq.s32.totalorder %s26, 0
      %p74 = por %p72, %p73
      %s76 = sadd.s32 %s75, 1
      %p79 = scmp.eq.s32.totalorder %s20, 1
      %p80 = scmp.ne.s32.totalorder %s75, %s77
      %p81 = scmp.eq.s32.totalorder %s20, 0
      %p82 = por %p80, %p81
      %p83 = scmp.ne.s32.totalorder %s75, %s77
      %p84 = scmp.eq.s32.totalorder %s25, 1
      %p85 = por %p83, %p84
      %p86 = scmp.ne.s32.totalorder %s77, %s78
      %p87 = scmp.eq.s32.totalorder %s25, 0
      %p88 = por %p86, %p87
      %p89 = scmp.ne.s32.totalorder %s77, %s78
      %p90 = scmp.eq.s32.totalorder %s26, 1
      %p91 = por %p89, %p90
      %p93 = scmp.ne.s32.totalorder %s78, %s92
      %p94 = scmp.eq.s32.totalorder %s26, 0
      %p95 = por %p93, %p94
      %s97 = sadd.s32 %s96, 1
      %p100 = scmp.eq.s32.totalorder %s20, 1
      %p101 = scmp.ne.s32.totalorder %s96, %s98
      %p102 = scmp.eq.s32.totalorder %s20, 0
      %p103 = por %p101, %p102
      %p104 = scmp.ne.s32.totalorder %s96, %s98
      %p105 = scmp.eq.s32.totalorder %s25, 1
      %p106 = por %p104, %p105
      %p107 = scmp.ne.s32.totalorder %s98, %s99
      %p108 = scmp.eq.s32.totalorder %s25, 0
      %p109 = por %p107, %p108
      %p110 = scmp.ne.s32.totalorder %s98, %s99
      %p111 = scmp.eq.s32.totalorder %s26, 1
      %p112 = por %p110, %p111
      %p114 = scmp.ne.s32.totalorder %s99, %s113
      %p115 = scmp.eq.s32.totalorder %s26, 0
      %p116 = por %p114, %p115
      %s118 = sadd.s32 %s117, 1
      %p121 = scmp.eq.s32.totalorder %s20, 1
      %p122 = scmp.ne.s32.totalorder %s117, %s119
      %p123 = scmp.eq.s32.totalorder %s20, 0
      %p124 = por %p122, %p123
      %p125 = scmp.ne.s32.totalorder %s117, %s119
      %p126 = scmp.eq.s32.totalorder %s25, 1
      %p127 = por %p125, %p126
      %p128 = scmp.ne.s32.totalorder %s119, %s120
      %p129 = scmp.eq.s32.totalorder %s25, 0
      %p130 = por %p128, %p129
      %p131 = scmp.ne.s32.totalorder %s119, %s120
      %p132 = scmp.eq.s32.totalorder %s26, 1
      %p133 = por %p131, %p132
      %p135 = scmp.ne.s32.totalorder %s120, %s134
      %p136 = scmp.eq.s32.totalorder %s26, 0
      %p137 = por %p135, %p136
      %s139 = sadd.s32 %s138, 1
      %p142 = scmp.eq.s32.totalorder %s20, 1
      %p143 = scmp.ne.s32.totalorder %s138, %s140
      %p144 = scmp.eq.s32.totalorder %s20, 0
      %p145 = por %p143, %p144
      %p146 = scmp.ne.s32.totalorder %s138, %s140
      %p147 = scmp.eq.s32.totalorder %s25, 1
      %p148 = por %p146, %p147
      %p149 = scmp.ne.s32.totalorder %s140, %s141
      %p150 = scmp.eq.s32.totalorder %s25, 0
      %p151 = por %p149, %p150
      %p152 = scmp.ne.s32.totalorder %s140, %s141
      %p153 = scmp.eq.s32.totalorder %s26, 1
      %p154 = por %p152, %p153
      %p156 = scmp.ne.s32.totalorder %s141, %s155
      %p157 = scmp.eq.s32.totalorder %s26, 0
      %p158 = por %p156, %p157
      %s160 = sadd.s32 %s159, 1
      %p163 = scmp.eq.s32.totalorder %s20, 1
      %p164 = scmp.ne.s32.totalorder %s159, %s161
      %p165 = scmp.eq.s32.totalorder %s20, 0
      %p166 = por %p164, %p165
      %p167 = scmp.ne.s32.totalorder %s159, %s161
      %p168 = scmp.eq.s32.totalorder %s25, 1
      %p169 = por %p167, %p168
      %p170 = scmp.ne.s32.totalorder %s161, %s162
      %p171 = scmp.eq.s32.totalorder %s25, 0
      %p172 = por %p170, %p171
      %p173 = scmp.ne.s32.totalorder %s161, %s162
      %p174 = scmp.eq.s32.totalorder %s26, 1
      %p175 = por %p173, %p174
      %p177 = scmp.ne.s32.totalorder %s162, %s176
      %p178 = scmp.eq.s32.totalorder %s26, 0
      %p179 = por %p177, %p178
      %s180 = ssub.s32 %s20, %s27
      %p181 = scmp.eq.s32.totalorder %s180, 0
      %s183 = sadd.s32 %s182, 1
      %s184 = scalar_select %p181, %s182, %s183
      %p187 = pneg %p181
      %p188 = scmp.eq.s32.totalorder %s20, 1
      %p189 = por %p187, %p188
      %p190 = scmp.ne.s32.totalorder %s182, %s185
      %p191 = scmp.eq.s32.totalorder %s20, 0
      %p192 = por %p190, %p191
      %p193 = scmp.ne.s32.totalorder %s182, %s185
      %p194 = scmp.eq.s32.totalorder %s25, 1
      %p195 = por %p193, %p194
      %p196 = scmp.ne.s32.totalorder %s185, %s186
      %p197 = scmp.eq.s32.totalorder %s25, 0
      %p198 = por %p196, %p197
      %p199 = scmp.ne.s32.totalorder %s185, %s186
      %p200 = scmp.eq.s32.totalorder %s26, 1
      %p201 = por %p199, %p200
      %p203 = scmp.ne.s32.totalorder %s186, %s202
      %p204 = scmp.eq.s32.totalorder %s26, 0
      %p205 = por %p203, %p204
      %p206 = scmp.le.s32.totalorder 1, %s20
      %p207 = scmp.lt.s32.totalorder %s20, 3
      %p208 = pnand %p206, %p207
      %p209 = pneg %p208
      // Predicated region
      $region9: #{tpu_custom_call.1} parent=5 // pred_check
        _
      $region10: #{tpu_custom_call.1} parent=5 // pred_check_branch
        %211 = sbr.rel (%p208) target = $region12
      $region11: #{tpu_custom_call.1} parent=5 // pred_region
        %s212 = ssub.s32 %s20, 1
        // Predicated region
        $region13: #{tpu_custom_call.1} parent=11 // pred_check
          %p213 = pneg %p67
        $region14: #{tpu_custom_call.1} parent=11 // pred_check_branch
          %215 = sbr.rel (%p213) target = $region16
        $region15: #{tpu_custom_call.1} parent=11 // pred_region
          %s217 = ssub.s32 2048, 2048
          %218 = vsyncadd [#allocation7], %s217
          %s219 = sshll.u32 [#allocation6], 4
          %s220 = int_to_ptr.vmem [resolvable:$true] %s219
          %225 = dma.hbm_to_vmem [thread:$0]  %s1, 2048, %s220, [#allocation7], 128, 128, 8
        $region16: #{tpu_custom_call.1} parent=11 // pred_fallthru
          _
        // Predicated region
        $region17: #{tpu_custom_call.1} parent=11 // pred_check
          %p226 = pneg %p88
        $region18: #{tpu_custom_call.1} parent=11 // pred_check_branch
          %228 = sbr.rel (%p226) target = $region20
        $region19: #{tpu_custom_call.1} parent=11 // pred_region
          _
        $region20: #{tpu_custom_call.1} parent=11 // pred_fallthru
          _
        // Predicated region
        $region21: #{tpu_custom_call.1} parent=11 // pred_check
          %p229 = pneg %p109
        $region22: #{tpu_custom_call.1} parent=11 // pred_check_branch
          %231 = sbr.rel (%p229) target = $region24
        $region23: #{tpu_custom_call.1} parent=11 // pred_region
          %s233 = ssub.s32 2048, 2048
          %234 = vsyncadd [#allocation7], %s233
          %s235 = sshll.u32 [#allocation8], 4
          %s236 = int_to_ptr.vmem [resolvable:$true] %s235
          %241 = dma.hbm_to_vmem [thread:$0]  %s3, 2048, %s236, [#allocation7], 128, 128, 8
        $region24: #{tpu_custom_call.1} parent=11 // pred_fallthru
          _
        // Predicated region
        $region25: #{tpu_custom_call.1} parent=11 // pred_check
          %p242 = pneg %p130
        $region26: #{tpu_custom_call.1} parent=11 // pred_check_branch
          %244 = sbr.rel (%p242) target = $region28
        $region27: #{tpu_custom_call.1} parent=11 // pred_region
          _
        $region28: #{tpu_custom_call.1} parent=11 // pred_fallthru
          _
        // Predicated region
        $region29: #{tpu_custom_call.1} parent=11 // pred_check
          %p245 = pneg %p151
        $region30: #{tpu_custom_call.1} parent=11 // pred_check_branch
          %247 = sbr.rel (%p245) target = $region32
        $region31: #{tpu_custom_call.1} parent=11 // pred_region
          _
        $region32: #{tpu_custom_call.1} parent=11 // pred_fallthru
          _
        // Predicated region
        $region33: #{tpu_custom_call.1} parent=11 // pred_check
          %p248 = pneg %p172
        $region34: #{tpu_custom_call.1} parent=11 // pred_check_branch
          %250 = sbr.rel (%p248) target = $region36
        $region35: #{tpu_custom_call.1} parent=11 // pred_region
          _
        $region36: #{tpu_custom_call.1} parent=11 // pred_fallthru
          _
      $region12: #{tpu_custom_call.1} parent=5 // pred_fallthru
        _
      %p251 = scmp.lt.s32.totalorder %s20, 2
      // Predicated region
      $region37: #{tpu_custom_call.1} parent=5 // pred_check
        %p252 = pneg %p251
      $region38: #{tpu_custom_call.1} parent=5 // pred_check_branch
        %254 = sbr.rel (%p252) target = $region40
      $region39: #{tpu_custom_call.1} parent=5 // pred_region
        // Predicated region
        $region41: #{tpu_custom_call.1} parent=39 // pred_check
          %p255 = pneg %p40
        $region42: #{tpu_custom_call.1} parent=39 // pred_check_branch
          %257 = sbr.rel (%p255) target = $region44
        $region43: #{tpu_custom_call.1} parent=39 // pred_region
          %s258 = sand.u32 %s30, 1
          %s259 = scalar_lea.sflag [#allocation4], %s258
          %s260 = sand.u32 %s30, 1
          %s261 = smul.addr %s260, 8
          %s262 = scalar_lea.vmem [#allocation3], %s261
          %s264 = ssub.s32 128, 128
          %265 = vsyncadd %s259, %s264
          %s266 = smul.addr %s20, 128
          %s267 = scalar_lea.hbm %s0, %s266
          %s269 = sshll.u32 %s262, 4
          %s270 = int_to_ptr.vmem [resolvable:$true] %s269
          %272 = dma.hbm_to_vmem [thread:$0]  %s267, 128, %s270, %s259
        $region44: #{tpu_custom_call.1} parent=39 // pred_fallthru
          _
      $region40: #{tpu_custom_call.1} parent=5 // pred_fallthru
        _
      %p273 = scmp.le.s32.totalorder 1, %s20
      %p274 = scmp.lt.s32.totalorder %s20, 3
      %p275 = pnand %p273, %p274
      %p276 = pneg %p275
      // Predicated region
      $region45: #{tpu_custom_call.1} parent=5 // pred_check
        _
      $region46: #{tpu_custom_call.1} parent=5 // pred_check_branch
        %278 = sbr.rel (%p275) target = $region48
      $region47: #{tpu_custom_call.1} parent=5 // pred_region
        %s279 = ssub.s32 %s20, 1
        %s280 = sand.u32 %s33, 1
        %s281 = scalar_lea.sflag [#allocation4], %s280
        %s282 = sand.u32 %s33, 1
        %s283 = smul.addr %s282, 8
        %s284 = scalar_lea.vmem [#allocation3], %s283
        // Predicated region
        $region49: #{tpu_custom_call.1} parent=47 // pred_check
          %p285 = pneg %p46
        $region50: #{tpu_custom_call.1} parent=47 // pred_check_branch
          %287 = sbr.rel (%p285) target = $region52
        $region51: #{tpu_custom_call.1} parent=47 // pred_region
          %288 = dma.done %s281, 128
        $region52: #{tpu_custom_call.1} parent=47 // pred_fallthru
          _
        // Predicated region
        $region53: #{tpu_custom_call.1} parent=47 // pred_check
          %p289 = pneg %p67
        $region54: #{tpu_custom_call.1} parent=47 // pred_check_branch
          %291 = sbr.rel (%p289) target = $region56
        $region55: #{tpu_custom_call.1} parent=47 // pred_region
          %292 = dma.done [#allocation7], 2048
        $region56: #{tpu_custom_call.1} parent=47 // pred_fallthru
          _
        // Predicated region
        $region57: #{tpu_custom_call.1} parent=47 // pred_check
          %p293 = pneg %p109
        $region58: #{tpu_custom_call.1} parent=47 // pred_check_branch
          %295 = sbr.rel (%p293) target = $region60
        $region59: #{tpu_custom_call.1} parent=47 // pred_region
          %296 = dma.done [#allocation7], 2048
        $region60: #{tpu_custom_call.1} parent=47 // pred_fallthru
          _
        %s297 = sand.u32 %s33, 1
        %s298 = scalar_lea.sflag [#allocation4], %s297
        %s299 = sand.u32 %s33, 1
        %s300 = smul.addr %s299, 8
        %s301 = scalar_lea.vmem [#allocation3], %s300
        %p302 = pneg %p46
        %p303 = pneg %p43
        %p304 = pneg %p67
        %p305 = pneg %p64
        %p306 = pneg %p88
        %p307 = pneg %p85
        %p308 = pneg %p109
        %p309 = pneg %p106
        %p310 = pneg %p130
        %p311 = pneg %p127
        %p312 = pneg %p151
        %p313 = pneg %p148
        %p314 = pneg %p172
        %p315 = pneg %p169
        %p316 = pneg %p198
        %p317 = pneg %p195
        %s318 = sand.u32 %s185, 1
        %s319 = scalar_lea.sflag [#allocation5], %s318
        %s320 = sand.u32 %s185, 1
        %s321 = smul.addr %s320, 8
        %s322 = scalar_lea.vmem [#allocation9], %s321
        %v323 = vld [vmem:[%s284] sm:$0xff]
        %v324 = vld [vmem:[%s4] sm:$0x1]
        %v326 = vlaneseq
        %v327 = vshrl.u32 %v326, 7
        %v328 = vsub.s32 0, %v327
        %v329 = vrot.slane %v324, %v328
        %v331 = vadd.f32 %v323, %v329
        %332 = vst [vmem:[#allocation2] sm:$0xff] %v331
        %v333 = vld [vmem:[#allocation6] sm:$0xff]
        %v334 = vld [vmem:[#allocation6 + $0x8] sm:$0xff]
        %v335 = vld [vmem:[#allocation6 + $0x10] sm:$0xff]
        %v336 = vld [vmem:[#allocation6 + $0x18] sm:$0xff]
        %v337 = vld [vmem:[#allocation6 + $0x20] sm:$0xff]
        %v338 = vld [vmem:[#allocation6 + $0x28] sm:$0xff]
        %v339 = vld [vmem:[#allocation6 + $0x30] sm:$0xff]
        %v340 = vld [vmem:[#allocation6 + $0x38] sm:$0xff]
        %v341 = vld [vmem:[#allocation6 + $0x40] sm:$0xff]
        %v342 = vld [vmem:[#allocation6 + $0x48] sm:$0xff]
        %v343 = vld [vmem:[#allocation6 + $0x50] sm:$0xff]
        %v344 = vld [vmem:[#allocation6 + $0x58] sm:$0xff]
        %v345 = vld [vmem:[#allocation6 + $0x60] sm:$0xff]
        %v346 = vld [vmem:[#allocation6 + $0x68] sm:$0xff]
        %v347 = vld [vmem:[#allocation6 + $0x70] sm:$0xff]
        %v348 = vld [vmem:[#allocation6 + $0x78] sm:$0xff]
        %v349 = vld [vmem:[%s2] sm:$0x1]
        %v351 = vlaneseq
        %v352 = vshrl.u32 %v351, 7
        %v353 = vsub.s32 0, %v352
        %v354 = vrot.slane %v349, %v353
        %356 = vmatprep.subr.mxu0 0.0
        %v357 = vand.u32 %v333, 4294901760
        %358 = vmatpush1.msra.mxu0 %v357
        %359 = vmatprep.subr.mxu0 0.0
        %v360 = vand.u32 %v334, 4294901760
        %361 = vmatpush1.msra.mxu0 %v360
        %362 = vmatprep.subr.mxu0 0.0
        %v363 = vand.u32 %v335, 4294901760
        %364 = vmatpush1.msra.mxu0 %v363
        %365 = vmatprep.subr.mxu0 0.0
        %v366 = vand.u32 %v336, 4294901760
        %367 = vmatpush1.msra.mxu0 %v366
        %368 = vmatprep.subr.mxu0 0.0
        %v369 = vand.u32 %v337, 4294901760
        %370 = vmatpush1.msra.mxu0 %v369
        %371 = vmatprep.subr.mxu0 0.0
        %v372 = vand.u32 %v338, 4294901760
        %373 = vmatpush1.msra.mxu0 %v372
        %374 = vmatprep.subr.mxu0 0.0
        %v375 = vand.u32 %v339, 4294901760
        %376 = vmatpush1.msra.mxu0 %v375
        %377 = vmatprep.subr.mxu0 0.0
        %v378 = vand.u32 %v340, 4294901760
        %379 = vmatpush1.msra.mxu0 %v378
        %380 = vmatprep.subr.mxu0 0.0
        %v381 = vand.u32 %v341, 4294901760
        %382 = vmatpush1.msra.mxu0 %v381
        %383 = vmatprep.subr.mxu0 0.0
        %v384 = vand.u32 %v342, 4294901760
        %385 = vmatpush1.msra.mxu0 %v384
        %386 = vmatprep.subr.mxu0 0.0
        %v387 = vand.u32 %v343, 4294901760
        %388 = vmatpush1.msra.mxu0 %v387
        %389 = vmatprep.subr.mxu0 0.0
        %v390 = vand.u32 %v344, 4294901760
        %391 = vmatpush1.msra.mxu0 %v390
        %392 = vmatprep.subr.mxu0 0.0
        %v393 = vand.u32 %v345, 4294901760
        %394 = vmatpush1.msra.mxu0 %v393
        %395 = vmatprep.subr.mxu0 0.0
        %v396 = vand.u32 %v346, 4294901760
        %397 = vmatpush1.msra.mxu0 %v396
        %398 = vmatprep.subr.mxu0 0.0
        %v399 = vand.u32 %v347, 4294901760
        %400 = vmatpush1.msra.mxu0 %v399
        %401 = vmatprep.subr.mxu0 0.0
        %v402 = vand.u32 %v348, 4294901760
        %403 = vmatpush1.msra.mxu0 %v402
        %404 = vmatprep.subr.mxu0 0.0
        %405 = vmatpush1.msra.mxu0 0.0
        %406 = vmatprep.subr.mxu0 0.0
        %407 = vmatpush1.msra.mxu0 0.0
        %408 = vmatprep.subr.mxu0 0.0
        %409 = vmatpush1.msra.mxu0 0.0
        %410 = vmatprep.subr.mxu0 0.0
        %411 = vmatpush1.msra.mxu0 0.0
        %412 = vmatprep.subr.mxu0 0.0
        %413 = vmatpush1.msra.mxu0 0.0
        %414 = vmatprep.subr.mxu0 0.0
        %415 = vmatpush1.msra.mxu0 0.0
        %416 = vmatprep.subr.mxu0 0.0
        %417 = vmatpush1.msra.mxu0 0.0
        %418 = vmatprep.subr.mxu0 0.0
        %419 = vmatpush1.msra.mxu0 0.0
        %420 = vmatprep.subr.mxu0 0.0
        %421 = vmatpush1.msra.mxu0 0.0
        %422 = vmatprep.subr.mxu0 0.0
        %423 = vmatpush1.msra.mxu0 0.0
        %424 = vmatprep.subr.mxu0 0.0
        %425 = vmatpush1.msra.mxu0 0.0
        %426 = vmatprep.subr.mxu0 0.0
        %427 = vmatpush1.msra.mxu0 0.0
        %428 = vmatprep.subr.mxu0 0.0
        %429 = vmatpush1.msra.mxu0 0.0
        %430 = vmatprep.subr.mxu0 0.0
        %431 = vmatpush1.msra.mxu0 0.0
        %432 = vmatprep.subr.mxu0 0.0
        %433 = vmatpush1.msra.mxu0 0.0
        %434 = vmatprep.subr.mxu0 0.0
        %435 = vmatpush1.msra.mxu0 0.0
        %436 = vmatprep.mubr.f32.mxu0 0.0
        %v437 = vand.u32 %v323, 4294901760
        %v438 = vsub.f32 %v323, %v437
        %v439 = vand.u32 %v438, 4294901760
        %v440 = vsub.f32 %v438, %v439
        %v441 = vand.u32 %v440, 4294901760
        %442 = vmatmul.mubr.f32.gmra.mrb[0].mxu0 %v441
        %v443 = vpop.f32.mrb[0].mxu0
        %v444 = vadd.f32 %v354, %v443
        %v445 = vpop.f32.mrb[0].mxu0
        %446 = vdwg.mxu0
        %447 = vmatprep.subr.mxu0 0.0
        %v448 = vand.u32 %v333, 4294901760
        %v449 = vsub.f32 %v333, %v448
        %v450 = vand.u32 %v449, 4294901760
        %v451 = vsub.f32 %v449, %v450
        %v452 = vand.u32 %v451, 4294901760
        %453 = vmatpush1.msra.mxu0 %v452
        %454 = vmatprep.subr.mxu0 0.0
        %v455 = vand.u32 %v334, 4294901760
        %v456 = vsub.f32 %v334, %v455
        %v457 = vand.u32 %v456, 4294901760
        %v458 = vsub.f32 %v456, %v457
        %v459 = vand.u32 %v458, 4294901760
        %460 = vmatpush1.msra.mxu0 %v459
        %461 = vmatprep.subr.mxu0 0.0
        %v462 = vand.u32 %v335, 4294901760
        %v463 = vsub.f32 %v335, %v462
        %v464 = vand.u32 %v463, 4294901760
        %v465 = vsub.f32 %v463, %v464
        %v466 = vand.u32 %v465, 4294901760
        %467 = vmatpush1.msra.mxu0 %v466
        %468 = vmatprep.subr.mxu0 0.0
        %v469 = vand.u32 %v336, 4294901760
        %v470 = vsub.f32 %v336, %v469
        %v471 = vand.u32 %v470, 4294901760
        %v472 = vsub.f32 %v470, %v471
        %v473 = vand.u32 %v472, 4294901760
        %474 = vmatpush1.msra.mxu0 %v473
        %475 = vmatprep.subr.mxu0 0.0
        %v476 = vand.u32 %v337, 4294901760
        %v477 = vsub.f32 %v337, %v476
        %v478 = vand.u32 %v477, 4294901760
        %v479 = vsub.f32 %v477, %v478
        %v480 = vand.u32 %v479, 4294901760
        %481 = vmatpush1.msra.mxu0 %v480
        %482 = vmatprep.subr.mxu0 0.0
        %v483 = vand.u32 %v338, 4294901760
        %v484 = vsub.f32 %v338, %v483
        %v485 = vand.u32 %v484, 4294901760
        %v486 = vsub.f32 %v484, %v485
        %v487 = vand.u32 %v486, 4294901760
        %488 = vmatpush1.msra.mxu0 %v487
        %489 = vmatprep.subr.mxu0 0.0
        %v490 = vand.u32 %v339, 4294901760
        %v491 = vsub.f32 %v339, %v490
        %v492 = vand.u32 %v491, 4294901760
        %v493 = vsub.f32 %v491, %v492
        %v494 = vand.u32 %v493, 4294901760
        %495 = vmatpush1.msra.mxu0 %v494
        %496 = vmatprep.subr.mxu0 0.0
        %v497 = vand.u32 %v340, 4294901760
        %v498 = vsub.f32 %v340, %v497
        %v499 = vand.u32 %v498, 4294901760
        %v500 = vsub.f32 %v498, %v499
        %v501 = vand.u32 %v500, 4294901760
        %502 = vmatpush1.msra.mxu0 %v501
        %503 = vmatprep.subr.mxu0 0.0
        %v504 = vand.u32 %v341, 4294901760
        %v505 = vsub.f32 %v341, %v504
        %v506 = vand.u32 %v505, 4294901760
        %v507 = vsub.f32 %v505, %v506
        %v508 = vand.u32 %v507, 4294901760
        %509 = vmatpush1.msra.mxu0 %v508
        %510 = vmatprep.subr.mxu0 0.0
        %v511 = vand.u32 %v342, 4294901760
        %v512 = vsub.f32 %v342, %v511
        %v513 = vand.u32 %v512, 4294901760
        %v514 = vsub.f32 %v512, %v513
        %v515 = vand.u32 %v514, 4294901760
        %516 = vmatpush1.msra.mxu0 %v515
        %517 = vmatprep.subr.mxu0 0.0
        %v518 = vand.u32 %v343, 4294901760
        %v519 = vsub.f32 %v343, %v518
        %v520 = vand.u32 %v519, 4294901760
        %v521 = vsub.f32 %v519, %v520
        %v522 = vand.u32 %v521, 4294901760
        %523 = vmatpush1.msra.mxu0 %v522
        %524 = vmatprep.subr.mxu0 0.0
        %v525 = vand.u32 %v344, 4294901760
        %v526 = vsub.f32 %v344, %v525
        %v527 = vand.u32 %v526, 4294901760
        %v528 = vsub.f32 %v526, %v527
        %v529 = vand.u32 %v528, 4294901760
        %530 = vmatpush1.msra.mxu0 %v529
        %531 = vmatprep.subr.mxu0 0.0
        %v532 = vand.u32 %v345, 4294901760
        %v533 = vsub.f32 %v345, %v532
        %v534 = vand.u32 %v533, 4294901760
        %v535 = vsub.f32 %v533, %v534
        %v536 = vand.u32 %v535, 4294901760
        %537 = vmatpush1.msra.mxu0 %v536
        %538 = vmatprep.subr.mxu0 0.0
        %v539 = vand.u32 %v346, 4294901760
        %v540 = vsub.f32 %v346, %v539
        %v541 = vand.u32 %v540, 4294901760
        %v542 = vsub.f32 %v540, %v541
        %v543 = vand.u32 %v542, 4294901760
        %544 = vmatpush1.msra.mxu0 %v543
        %545 = vmatprep.subr.mxu0 0.0
        %v546 = vand.u32 %v347, 4294901760
        %v547 = vsub.f32 %v347, %v546
        %v548 = vand.u32 %v547, 4294901760
        %v549 = vsub.f32 %v547, %v548
        %v550 = vand.u32 %v549, 4294901760
        %551 = vmatpush1.msra.mxu0 %v550
        %552 = vmatprep.subr.mxu0 0.0
        %v553 = vand.u32 %v348, 4294901760
        %v554 = vsub.f32 %v348, %v553
        %v555 = vand.u32 %v554, 4294901760
        %v556 = vsub.f32 %v554, %v555
        %v557 = vand.u32 %v556, 4294901760
        %558 = vmatpush1.msra.mxu0 %v557
        %559 = vmatprep.subr.mxu0 0.0
        %560 = vmatpush1.msra.mxu0 0.0
        %561 = vmatprep.subr.mxu0 0.0
        %562 = vmatpush1.msra.mxu0 0.0
        %563 = vmatprep.subr.mxu0 0.0
        %564 = vmatpush1.msra.mxu0 0.0
        %565 = vmatprep.subr.mxu0 0.0
        %566 = vmatpush1.msra.mxu0 0.0
        %567 = vmatprep.subr.mxu0 0.0
        %568 = vmatpush1.msra.mxu0 0.0
        %569 = vmatprep.subr.mxu0 0.0
        %570 = vmatpush1.msra.mxu0 0.0
        %571 = vmatprep.subr.mxu0 0.0
        %572 = vmatpush1.msra.mxu0 0.0
        %573 = vmatprep.subr.mxu0 0.0
        %574 = vmatpush1.msra.mxu0 0.0
        %575 = vmatprep.subr.mxu0 0.0
        %576 = vmatpush1.msra.mxu0 0.0
        %577 = vmatprep.subr.mxu0 0.0
        %578 = vmatpush1.msra.mxu0 0.0
        %579 = vmatprep.subr.mxu0 0.0
        %580 = vmatpush1.msra.mxu0 0.0
        %581 = vmatprep.subr.mxu0 0.0
        %582 = vmatpush1.msra.mxu0 0.0
        %583 = vmatprep.subr.mxu0 0.0
        %584 = vmatpush1.msra.mxu0 0.0
        %585 = vmatprep.subr.mxu0 0.0
        %586 = vmatpush1.msra.mxu0 0.0
        %587 = vmatprep.subr.mxu0 0.0
        %588 = vmatpush1.msra.mxu0 0.0
        %589 = vmatprep.subr.mxu0 0.0
        %590 = vmatpush1.msra.mxu0 0.0
        %591 = vmatprep.mubr.f32.mxu0 0.0
        %v592 = vand.u32 %v323, 4294901760
        %593 = vmatmul.mubr.f32.gmra.mrb[0].mxu0 %v592
        %v594 = vpop.f32.mrb[0].mxu0
        %v595 = vadd.f32 %v444, %v594
        %v596 = vpop.f32.mrb[0].mxu0
        %597 = vdwg.mxu0
        %598 = vmatprep.subr.mxu0 0.0
        %v599 = vand.u32 %v333, 4294901760
        %v600 = vsub.f32 %v333, %v599
        %601 = vmatpush1.msra.mxu0 %v600
        %602 = vmatprep.subr.mxu0 0.0
        %v603 = vand.u32 %v334, 4294901760
        %v604 = vsub.f32 %v334, %v603
        %605 = vmatpush1.msra.mxu0 %v604
        %606 = vmatprep.subr.mxu0 0.0
        %v607 = vand.u32 %v335, 4294901760
        %v608 = vsub.f32 %v335, %v607
        %609 = vmatpush1.msra.mxu0 %v608
        %610 = vmatprep.subr.mxu0 0.0
        %v611 = vand.u32 %v336, 4294901760
        %v612 = vsub.f32 %v336, %v611
        %613 = vmatpush1.msra.mxu0 %v612
        %614 = vmatprep.subr.mxu0 0.0
        %v615 = vand.u32 %v337, 4294901760
        %v616 = vsub.f32 %v337, %v615
        %617 = vmatpush1.msra.mxu0 %v616
        %618 = vmatprep.subr.mxu0 0.0
        %v619 = vand.u32 %v338, 4294901760
        %v620 = vsub.f32 %v338, %v619
        %621 = vmatpush1.msra.mxu0 %v620
        %622 = vmatprep.subr.mxu0 0.0
        %v623 = vand.u32 %v339, 4294901760
        %v624 = vsub.f32 %v339, %v623
        %625 = vmatpush1.msra.mxu0 %v624
        %626 = vmatprep.subr.mxu0 0.0
        %v627 = vand.u32 %v340, 4294901760
        %v628 = vsub.f32 %v340, %v627
        %629 = vmatpush1.msra.mxu0 %v628
        %630 = vmatprep.subr.mxu0 0.0
        %v631 = vand.u32 %v341, 4294901760
        %v632 = vsub.f32 %v341, %v631
        %633 = vmatpush1.msra.mxu0 %v632
        %634 = vmatprep.subr.mxu0 0.0
        %v635 = vand.u32 %v342, 4294901760
        %v636 = vsub.f32 %v342, %v635
        %637 = vmatpush1.msra.mxu0 %v636
        %638 = vmatprep.subr.mxu0 0.0
        %v639 = vand.u32 %v343, 4294901760
        %v640 = vsub.f32 %v343, %v639
        %641 = vmatpush1.msra.mxu0 %v640
        %642 = vmatprep.subr.mxu0 0.0
        %v643 = vand.u32 %v344, 4294901760
        %v644 = vsub.f32 %v344, %v643
        %645 = vmatpush1.msra.mxu0 %v644
        %646 = vmatprep.subr.mxu0 0.0
        %v647 = vand.u32 %v345, 4294901760
        %v648 = vsub.f32 %v345, %v647
        %649 = vmatpush1.msra.mxu0 %v648
        %650 = vmatprep.subr.mxu0 0.0
        %v651 = vand.u32 %v346, 4294901760
        %v652 = vsub.f32 %v346, %v651
        %653 = vmatpush1.msra.mxu0 %v652
        %654 = vmatprep.subr.mxu0 0.0
        %v655 = vand.u32 %v347, 4294901760
        %v656 = vsub.f32 %v347, %v655
        %657 = vmatpush1.msra.mxu0 %v656
        %658 = vmatprep.subr.mxu0 0.0
        %v659 = vand.u32 %v348, 4294901760
        %v660 = vsub.f32 %v348, %v659
        %661 = vmatpush1.msra.mxu0 %v660
        %662 = vmatprep.subr.mxu0 0.0
        %663 = vmatpush1.msra.mxu0 0.0
        %664 = vmatprep.subr.mxu0 0.0
        %665 = vmatpush1.msra.mxu0 0.0
        %666 = vmatprep.subr.mxu0 0.0
        %667 = vmatpush1.msra.mxu0 0.0
        %668 = vmatprep.subr.mxu0 0.0
        %669 = vmatpush1.msra.mxu0 0.0
        %670 = vmatprep.subr.mxu0 0.0
        %671 = vmatpush1.msra.mxu0 0.0
        %672 = vmatprep.subr.mxu0 0.0
        %673 = vmatpush1.msra.mxu0 0.0
        %674 = vmatprep.subr.mxu0 0.0
        %675 = vmatpush1.msra.mxu0 0.0
        %676 = vmatprep.subr.mxu0 0.0
        %677 = vmatpush1.msra.mxu0 0.0
        %678 = vmatprep.subr.mxu0 0.0
        %679 = vmatpush1.msra.mxu0 0.0
        %680 = vmatprep.subr.mxu0 0.0
        %681 = vmatpush1.msra.mxu0 0.0
        %682 = vmatprep.subr.mxu0 0.0
        %683 = vmatpush1.msra.mxu0 0.0
        %684 = vmatprep.subr.mxu0 0.0
        %685 = vmatpush1.msra.mxu0 0.0
        %686 = vmatprep.subr.mxu0 0.0
        %687 = vmatpush1.msra.mxu0 0.0
        %688 = vmatprep.subr.mxu0 0.0
        %689 = vmatpush1.msra.mxu0 0.0
        %690 = vmatprep.subr.mxu0 0.0
        %691 = vmatpush1.msra.mxu0 0.0
        %692 = vmatprep.subr.mxu0 0.0
        %693 = vmatpush1.msra.mxu0 0.0
        %694 = vmatprep.mubr.f32.mxu0 0.0
        %v695 = vand.u32 %v323, 4294901760
        %v696 = vsub.f32 %v323, %v695
        %697 = vmatmul.mubr.f32.gmra.mrb[0].mxu0 %v696
        %v698 = vpop.f32.mrb[0].mxu0
        %v699 = vadd.f32 %v595, %v698
        %v700 = vpop.f32.mrb[0].mxu0
        %701 = vdwg.mxu0
        %702 = vmatprep.subr.mxu0 0.0
        %v703 = vand.u32 %v333, 4294901760
        %704 = vmatpush1.msra.mxu0 %v703
        %705 = vmatprep.subr.mxu0 0.0
        %v706 = vand.u32 %v334, 4294901760
        %707 = vmatpush1.msra.mxu0 %v706
        %708 = vmatprep.subr.mxu0 0.0
        %v709 = vand.u32 %v335, 4294901760
        %710 = vmatpush1.msra.mxu0 %v709
        %711 = vmatprep.subr.mxu0 0.0
        %v712 = vand.u32 %v336, 4294901760
        %713 = vmatpush1.msra.mxu0 %v712
        %714 = vmatprep.subr.mxu0 0.0
        %v715 = vand.u32 %v337, 4294901760
        %716 = vmatpush1.msra.mxu0 %v715
        %717 = vmatprep.subr.mxu0 0.0
        %v718 = vand.u32 %v338, 4294901760
        %719 = vmatpush1.msra.mxu0 %v718
        %720 = vmatprep.subr.mxu0 0.0
        %v721 = vand.u32 %v339, 4294901760
        %722 = vmatpush1.msra.mxu0 %v721
        %723 = vmatprep.subr.mxu0 0.0
        %v724 = vand.u32 %v340, 4294901760
        %725 = vmatpush1.msra.mxu0 %v724
        %726 = vmatprep.subr.mxu0 0.0
        %v727 = vand.u32 %v341, 4294901760
        %728 = vmatpush1.msra.mxu0 %v727
        %729 = vmatprep.subr.mxu0 0.0
        %v730 = vand.u32 %v342, 4294901760
        %731 = vmatpush1.msra.mxu0 %v730
        %732 = vmatprep.subr.mxu0 0.0
        %v733 = vand.u32 %v343, 4294901760
        %734 = vmatpush1.msra.mxu0 %v733
        %735 = vmatprep.subr.mxu0 0.0
        %v736 = vand.u32 %v344, 4294901760
        %737 = vmatpush1.msra.mxu0 %v736
        %738 = vmatprep.subr.mxu0 0.0
        %v739 = vand.u32 %v345, 4294901760
        %740 = vmatpush1.msra.mxu0 %v739
        %741 = vmatprep.subr.mxu0 0.0
        %v742 = vand.u32 %v346, 4294901760
        %743 = vmatpush1.msra.mxu0 %v742
        %744 = vmatprep.subr.mxu0 0.0
        %v745 = vand.u32 %v347, 4294901760
        %746 = vmatpush1.msra.mxu0 %v745
        %747 = vmatprep.subr.mxu0 0.0
        %v748 = vand.u32 %v348, 4294901760
        %749 = vmatpush1.msra.mxu0 %v748
        %750 = vmatprep.subr.mxu0 0.0
        %751 = vmatpush1.msra.mxu0 0.0
        %752 = vmatprep.subr.mxu0 0.0
        %753 = vmatpush1.msra.mxu0 0.0
        %754 = vmatprep.subr.mxu0 0.0
        %755 = vmatpush1.msra.mxu0 0.0
        %756 = vmatprep.subr.mxu0 0.0
        %757 = vmatpush1.msra.mxu0 0.0
        %758 = vmatprep.subr.mxu0 0.0
        %759 = vmatpush1.msra.mxu0 0.0
        %760 = vmatprep.subr.mxu0 0.0
        %761 = vmatpush1.msra.mxu0 0.0
        %762 = vmatprep.subr.mxu0 0.0
        %763 = vmatpush1.msra.mxu0 0.0
        %764 = vmatprep.subr.mxu0 0.0
        %765 = vmatpush1.msra.mxu0 0.0
        %766 = vmatprep.subr.mxu0 0.0
        %767 = vmatpush1.msra.mxu0 0.0
        %768 = vmatprep.subr.mxu0 0.0
        %769 = vmatpush1.msra.mxu0 0.0
        %770 = vmatprep.subr.mxu0 0.0
        %771 = vmatpush1.msra.mxu0 0.0
        %772 = vmatprep.subr.mxu0 0.0
        %773 = vmatpush1.msra.mxu0 0.0
        %774 = vmatprep.subr.mxu0 0.0
        %775 = vmatpush1.msra.mxu0 0.0
        %776 = vmatprep.subr.mxu0 0.0
        %777 = vmatpush1.msra.mxu0 0.0
        %778 = vmatprep.subr.mxu0 0.0
        %779 = vmatpush1.msra.mxu0 0.0
        %780 = vmatprep.subr.mxu0 0.0
        %781 = vmatpush1.msra.mxu0 0.0
        %782 = vmatprep.mubr.f32.mxu0 0.0
        %v783 = vand.u32 %v323, 4294901760
        %v784 = vsub.f32 %v323, %v783
        %v785 = vand.u32 %v784, 4294901760
        %786 = vmatmul.mubr.f32.gmra.mrb[0].mxu0 %v785
        %v787 = vpop.f32.mrb[0].mxu0
        %v788 = vadd.f32 %v699, %v787
        %v789 = vpop.f32.mrb[0].mxu0
        %790 = vdwg.mxu0
        %791 = vmatprep.subr.mxu0 0.0
        %v792 = vand.u32 %v333, 4294901760
        %v793 = vsub.f32 %v333, %v792
        %v794 = vand.u32 %v793, 4294901760
        %795 = vmatpush1.msra.mxu0 %v794
        %796 = vmatprep.subr.mxu0 0.0
        %v797 = vand.u32 %v334, 4294901760
        %v798 = vsub.f32 %v334, %v797
        %v799 = vand.u32 %v798, 4294901760
        %800 = vmatpush1.msra.mxu0 %v799
        %801 = vmatprep.subr.mxu0 0.0
        %v802 = vand.u32 %v335, 4294901760
        %v803 = vsub.f32 %v335, %v802
        %v804 = vand.u32 %v803, 4294901760
        %805 = vmatpush1.msra.mxu0 %v804
        %806 = vmatprep.subr.mxu0 0.0
        %v807 = vand.u32 %v336, 4294901760
        %v808 = vsub.f32 %v336, %v807
        %v809 = vand.u32 %v808, 4294901760
        %810 = vmatpush1.msra.mxu0 %v809
        %811 = vmatprep.subr.mxu0 0.0
        %v812 = vand.u32 %v337, 4294901760
        %v813 = vsub.f32 %v337, %v812
        %v814 = vand.u32 %v813, 4294901760
        %815 = vmatpush1.msra.mxu0 %v814
        %816 = vmatprep.subr.mxu0 0.0
        %v817 = vand.u32 %v338, 4294901760
        %v818 = vsub.f32 %v338, %v817
        %v819 = vand.u32 %v818, 4294901760
        %820 = vmatpush1.msra.mxu0 %v819
        %821 = vmatprep.subr.mxu0 0.0
        %v822 = vand.u32 %v339, 4294901760
        %v823 = vsub.f32 %v339, %v822
        %v824 = vand.u32 %v823, 4294901760
        %825 = vmatpush1.msra.mxu0 %v824
        %826 = vmatprep.subr.mxu0 0.0
        %v827 = vand.u32 %v340, 4294901760
        %v828 = vsub.f32 %v340, %v827
        %v829 = vand.u32 %v828, 4294901760
        %830 = vmatpush1.msra.mxu0 %v829
        %831 = vmatprep.subr.mxu0 0.0
        %v832 = vand.u32 %v341, 4294901760
        %v833 = vsub.f32 %v341, %v832
        %v834 = vand.u32 %v833, 4294901760
        %835 = vmatpush1.msra.mxu0 %v834
        %836 = vmatprep.subr.mxu0 0.0
        %v837 = vand.u32 %v342, 4294901760
        %v838 = vsub.f32 %v342, %v837
        %v839 = vand.u32 %v838, 4294901760
        %840 = vmatpush1.msra.mxu0 %v839
        %841 = vmatprep.subr.mxu0 0.0
        %v842 = vand.u32 %v343, 4294901760
        %v843 = vsub.f32 %v343, %v842
        %v844 = vand.u32 %v843, 4294901760
        %845 = vmatpush1.msra.mxu0 %v844
        %846 = vmatprep.subr.mxu0 0.0
        %v847 = vand.u32 %v344, 4294901760
        %v848 = vsub.f32 %v344, %v847
        %v849 = vand.u32 %v848, 4294901760
        %850 = vmatpush1.msra.mxu0 %v849
        %851 = vmatprep.subr.mxu0 0.0
        %v852 = vand.u32 %v345, 4294901760
        %v853 = vsub.f32 %v345, %v852
        %v854 = vand.u32 %v853, 4294901760
        %855 = vmatpush1.msra.mxu0 %v854
        %856 = vmatprep.subr.mxu0 0.0
        %v857 = vand.u32 %v346, 4294901760
        %v858 = vsub.f32 %v346, %v857
        %v859 = vand.u32 %v858, 4294901760
        %860 = vmatpush1.msra.mxu0 %v859
        %861 = vmatprep.subr.mxu0 0.0
        %v862 = vand.u32 %v347, 4294901760
        %v863 = vsub.f32 %v347, %v862
        %v864 = vand.u32 %v863, 4294901760
        %865 = vmatpush1.msra.mxu0 %v864
        %866 = vmatprep.subr.mxu0 0.0
        %v867 = vand.u32 %v348, 4294901760
        %v868 = vsub.f32 %v348, %v867
        %v869 = vand.u32 %v868, 4294901760
        %870 = vmatpush1.msra.mxu0 %v869
        %871 = vmatprep.subr.mxu0 0.0
        %872 = vmatpush1.msra.mxu0 0.0
        %873 = vmatprep.subr.mxu0 0.0
        %874 = vmatpush1.msra.mxu0 0.0
        %875 = vmatprep.subr.mxu0 0.0
        %876 = vmatpush1.msra.mxu0 0.0
        %877 = vmatprep.subr.mxu0 0.0
        %878 = vmatpush1.msra.mxu0 0.0
        %879 = vmatprep.subr.mxu0 0.0
        %880 = vmatpush1.msra.mxu0 0.0
        %881 = vmatprep.subr.mxu0 0.0
        %882 = vmatpush1.msra.mxu0 0.0
        %883 = vmatprep.subr.mxu0 0.0
        %884 = vmatpush1.msra.mxu0 0.0
        %885 = vmatprep.subr.mxu0 0.0
        %886 = vmatpush1.msra.mxu0 0.0
        %887 = vmatprep.subr.mxu0 0.0
        %888 = vmatpush1.msra.mxu0 0.0
        %889 = vmatprep.subr.mxu0 0.0
        %890 = vmatpush1.msra.mxu0 0.0
        %891 = vmatprep.subr.mxu0 0.0
        %892 = vmatpush1.msra.mxu0 0.0
        %893 = vmatprep.subr.mxu0 0.0
        %894 = vmatpush1.msra.mxu0 0.0
        %895 = vmatprep.subr.mxu0 0.0
        %896 = vmatpush1.msra.mxu0 0.0
        %897 = vmatprep.subr.mxu0 0.0
        %898 = vmatpush1.msra.mxu0 0.0
        %899 = vmatprep.subr.mxu0 0.0
        %900 = vmatpush1.msra.mxu0 0.0
        %901 = vmatprep.subr.mxu0 0.0
        %902 = vmatpush1.msra.mxu0 0.0
        %903 = vmatprep.mubr.f32.mxu0 0.0
        %v904 = vand.u32 %v323, 4294901760
        %905 = vmatmul.mubr.f32.gmra.mrb[0].mxu0 %v904
        %v906 = vpop.f32.mrb[0].mxu0
        %v907 = vadd.f32 %v788, %v906
        %v908 = vpop.f32.mrb[0].mxu0
        %909 = vdwg.mxu0
        %910 = vmatprep.subr.mxu0 0.0
        %v911 = vand.u32 %v333, 4294901760
        %912 = vmatpush1.msra.mxu0 %v911
        %913 = vmatprep.subr.mxu0 0.0
        %v914 = vand.u32 %v334, 4294901760
        %915 = vmatpush1.msra.mxu0 %v914
        %916 = vmatprep.subr.mxu0 0.0
        %v917 = vand.u32 %v335, 4294901760
        %918 = vmatpush1.msra.mxu0 %v917
        %919 = vmatprep.subr.mxu0 0.0
        %v920 = vand.u32 %v336, 4294901760
        %921 = vmatpush1.msra.mxu0 %v920
        %922 = vmatprep.subr.mxu0 0.0
        %v923 = vand.u32 %v337, 4294901760
        %924 = vmatpush1.msra.mxu0 %v923
        %925 = vmatprep.subr.mxu0 0.0
        %v926 = vand.u32 %v338, 4294901760
        %927 = vmatpush1.msra.mxu0 %v926
        %928 = vmatprep.subr.mxu0 0.0
        %v929 = vand.u32 %v339, 4294901760
        %930 = vmatpush1.msra.mxu0 %v929
        %931 = vmatprep.subr.mxu0 0.0
        %v932 = vand.u32 %v340, 4294901760
        %933 = vmatpush1.msra.mxu0 %v932
        %934 = vmatprep.subr.mxu0 0.0
        %v935 = vand.u32 %v341, 4294901760
        %936 = vmatpush1.msra.mxu0 %v935
        %937 = vmatprep.subr.mxu0 0.0
        %v938 = vand.u32 %v342, 4294901760
        %939 = vmatpush1.msra.mxu0 %v938
        %940 = vmatprep.subr.mxu0 0.0
        %v941 = vand.u32 %v343, 4294901760
        %942 = vmatpush1.msra.mxu0 %v941
        %943 = vmatprep.subr.mxu0 0.0
        %v944 = vand.u32 %v344, 4294901760
        %945 = vmatpush1.msra.mxu0 %v944
        %946 = vmatprep.subr.mxu0 0.0
        %v947 = vand.u32 %v345, 4294901760
        %948 = vmatpush1.msra.mxu0 %v947
        %949 = vmatprep.subr.mxu0 0.0
        %v950 = vand.u32 %v346, 4294901760
        %951 = vmatpush1.msra.mxu0 %v950
        %952 = vmatprep.subr.mxu0 0.0
        %v953 = vand.u32 %v347, 4294901760
        %954 = vmatpush1.msra.mxu0 %v953
        %955 = vmatprep.subr.mxu0 0.0
        %v956 = vand.u32 %v348, 4294901760
        %957 = vmatpush1.msra.mxu0 %v956
        %958 = vmatprep.subr.mxu0 0.0
        %959 = vmatpush1.msra.mxu0 0.0
        %960 = vmatprep.subr.mxu0 0.0
        %961 = vmatpush1.msra.mxu0 0.0
        %962 = vmatprep.subr.mxu0 0.0
        %963 = vmatpush1.msra.mxu0 0.0
        %964 = vmatprep.subr.mxu0 0.0
        %965 = vmatpush1.msra.mxu0 0.0
        %966 = vmatprep.subr.mxu0 0.0
        %967 = vmatpush1.msra.mxu0 0.0
        %968 = vmatprep.subr.mxu0 0.0
        %969 = vmatpush1.msra.mxu0 0.0
        %970 = vmatprep.subr.mxu0 0.0
        %971 = vmatpush1.msra.mxu0 0.0
        %972 = vmatprep.subr.mxu0 0.0
        %973 = vmatpush1.msra.mxu0 0.0
        %974 = vmatprep.subr.mxu0 0.0
        %975 = vmatpush1.msra.mxu0 0.0
        %976 = vmatprep.subr.mxu0 0.0
        %977 = vmatpush1.msra.mxu0 0.0
        %978 = vmatprep.subr.mxu0 0.0
        %979 = vmatpush1.msra.mxu0 0.0
        %980 = vmatprep.subr.mxu0 0.0
        %981 = vmatpush1.msra.mxu0 0.0
        %982 = vmatprep.subr.mxu0 0.0
        %983 = vmatpush1.msra.mxu0 0.0
        %984 = vmatprep.subr.mxu0 0.0
        %985 = vmatpush1.msra.mxu0 0.0
        %986 = vmatprep.subr.mxu0 0.0
        %987 = vmatpush1.msra.mxu0 0.0
        %988 = vmatprep.subr.mxu0 0.0
        %989 = vmatpush1.msra.mxu0 0.0
        %990 = vmatprep.mubr.f32.mxu0 0.0
        %v991 = vand.u32 %v323, 4294901760
        %992 = vmatmul.mubr.f32.gmra.mrb[0].mxu0 %v991
        %v993 = vpop.f32.mrb[0].mxu0
        %v994 = vadd.f32 %v907, %v993
        %v995 = vpop.f32.mrb[0].mxu0
        %996 = vdwg.mxu0
        %v997 = vmax.f32 %v994, 0.0
        %v998 = vld [vmem:[#allocation2] sm:$0xff]
        %v999 = vld [vmem:[#allocation8] sm:$0xff]
        %v1000 = vld [vmem:[#allocation8 + $0x8] sm:$0xff]
        %v1001 = vld [vmem:[#allocation8 + $0x10] sm:$0xff]
        %v1002 = vld [vmem:[#allocation8 + $0x18] sm:$0xff]
        %v1003 = vld [vmem:[#allocation8 + $0x20] sm:$0xff]
        %v1004 = vld [vmem:[#allocation8 + $0x28] sm:$0xff]
        %v1005 = vld [vmem:[#allocation8 + $0x30] sm:$0xff]
        %v1006 = vld [vmem:[#allocation8 + $0x38] sm:$0xff]
        %v1007 = vld [vmem:[#allocation8 + $0x40] sm:$0xff]
        %v1008 = vld [vmem:[#allocation8 + $0x48] sm:$0xff]
        %v1009 = vld [vmem:[#allocation8 + $0x50] sm:$0xff]
        %v1010 = vld [vmem:[#allocation8 + $0x58] sm:$0xff]
        %v1011 = vld [vmem:[#allocation8 + $0x60] sm:$0xff]
        %v1012 = vld [vmem:[#allocation8 + $0x68] sm:$0xff]
        %v1013 = vld [vmem:[#allocation8 + $0x70] sm:$0xff]
        %v1014 = vld [vmem:[#allocation8 + $0x78] sm:$0xff]
        %1015 = vmatprep.subr.mxu0 0.0
        %v1016 = vand.u32 %v999, 4294901760
        %1017 = vmatpush1.msra.mxu0 %v1016
        %1018 = vmatprep.subr.mxu0 0.0
        %v1019 = vand.u32 %v1000, 4294901760
        %1020 = vmatpush1.msra.mxu0 %v1019
        %1021 = vmatprep.subr.mxu0 0.0
        %v1022 = vand.u32 %v1001, 4294901760
        %1023 = vmatpush1.msra.mxu0 %v1022
        %1024 = vmatprep.subr.mxu0 0.0
        %v1025 = vand.u32 %v1002, 4294901760
        %1026 = vmatpush1.msra.mxu0 %v1025
        %1027 = vmatprep.subr.mxu0 0.0
        %v1028 = vand.u32 %v1003, 4294901760
        %1029 = vmatpush1.msra.mxu0 %v1028
        %1030 = vmatprep.subr.mxu0 0.0
        %v1031 = vand.u32 %v1004, 4294901760
        %1032 = vmatpush1.msra.mxu0 %v1031
        %1033 = vmatprep.subr.mxu0 0.0
        %v1034 = vand.u32 %v1005, 4294901760
        %1035 = vmatpush1.msra.mxu0 %v1034
        %1036 = vmatprep.subr.mxu0 0.0
        %v1037 = vand.u32 %v1006, 4294901760
        %1038 = vmatpush1.msra.mxu0 %v1037
        %1039 = vmatprep.subr.mxu0 0.0
        %v1040 = vand.u32 %v1007, 4294901760
        %1041 = vmatpush1.msra.mxu0 %v1040
        %1042 = vmatprep.subr.mxu0 0.0
        %v1043 = vand.u32 %v1008, 4294901760
        %1044 = vmatpush1.msra.mxu0 %v1043
        %1045 = vmatprep.subr.mxu0 0.0
        %v1046 = vand.u32 %v1009, 4294901760
        %1047 = vmatpush1.msra.mxu0 %v1046
        %1048 = vmatprep.subr.mxu0 0.0
        %v1049 = vand.u32 %v1010, 4294901760
        %1050 = vmatpush1.msra.mxu0 %v1049
        %1051 = vmatprep.subr.mxu0 0.0
        %v1052 = vand.u32 %v1011, 4294901760
        %1053 = vmatpush1.msra.mxu0 %v1052
        %1054 = vmatprep.subr.mxu0 0.0
        %v1055 = vand.u32 %v1012, 4294901760
        %1056 = vmatpush1.msra.mxu0 %v1055
        %1057 = vmatprep.subr.mxu0 0.0
        %v1058 = vand.u32 %v1013, 4294901760
        %1059 = vmatpush1.msra.mxu0 %v1058
        %1060 = vmatprep.subr.mxu0 0.0
        %v1061 = vand.u32 %v1014, 4294901760
        %1062 = vmatpush1.msra.mxu0 %v1061
        %1063 = vmatprep.subr.mxu0 0.0
        %1064 = vmatpush1.msra.mxu0 0.0
        %1065 = vmatprep.subr.mxu0 0.0
        %1066 = vmatpush1.msra.mxu0 0.0
        %1067 = vmatprep.subr.mxu0 0.0
        %1068 = vmatpush1.msra.mxu0 0.0
        %1069 = vmatprep.subr.mxu0 0.0
        %1070 = vmatpush1.msra.mxu0 0.0
        %1071 = vmatprep.subr.mxu0 0.0
        %1072 = vmatpush1.msra.mxu0 0.0
        %1073 = vmatprep.subr.mxu0 0.0
        %1074 = vmatpush1.msra.mxu0 0.0
        %1075 = vmatprep.subr.mxu0 0.0
        %1076 = vmatpush1.msra.mxu0 0.0
        %1077 = vmatprep.subr.mxu0 0.0
        %1078 = vmatpush1.msra.mxu0 0.0
        %1079 = vmatprep.subr.mxu0 0.0
        %1080 = vmatpush1.msra.mxu0 0.0
        %1081 = vmatprep.subr.mxu0 0.0
        %1082 = vmatpush1.msra.mxu0 0.0
        %1083 = vmatprep.subr.mxu0 0.0
        %1084 = vmatpush1.msra.mxu0 0.0
        %1085 = vmatprep.subr.mxu0 0.0
        %1086 = vmatpush1.msra.mxu0 0.0
        %1087 = vmatprep.subr.mxu0 0.0
        %1088 = vmatpush1.msra.mxu0 0.0
        %1089 = vmatprep.subr.mxu0 0.0
        %1090 = vmatpush1.msra.mxu0 0.0
        %1091 = vmatprep.subr.mxu0 0.0
        %1092 = vmatpush1.msra.mxu0 0.0
        %1093 = vmatprep.subr.mxu0 0.0
        %1094 = vmatpush1.msra.mxu0 0.0
        %1095 = vmatprep.mubr.f32.mxu0 0.0
        %v1096 = vand.u32 %v997, 4294901760
        %v1097 = vsub.f32 %v997, %v1096
        %v1098 = vand.u32 %v1097, 4294901760
        %v1099 = vsub.f32 %v1097, %v1098
        %v1100 = vand.u32 %v1099, 4294901760
        %1101 = vmatmul.mubr.f32.gmra.mrb[0].mxu0 %v1100
        %v1102 = vpop.f32.mrb[0].mxu0
        %v1103 = vadd.f32 0.0, %v1102
        %v1104 = vpop.f32.mrb[0].mxu0
        %1105 = vdwg.mxu0
        %1106 = vmatprep.subr.mxu0 0.0
        %v1107 = vand.u32 %v999, 4294901760
        %v1108 = vsub.f32 %v999, %v1107
        %v1109 = vand.u32 %v1108, 4294901760
        %v1110 = vsub.f32 %v1108, %v1109
        %v1111 = vand.u32 %v1110, 4294901760
        %1112 = vmatpush1.msra.mxu0 %v1111
        %1113 = vmatprep.subr.mxu0 0.0
        %v1114 = vand.u32 %v1000, 4294901760
        %v1115 = vsub.f32 %v1000, %v1114
        %v1116 = vand.u32 %v1115, 4294901760
        %v1117 = vsub.f32 %v1115, %v1116
        %v1118 = vand.u32 %v1117, 4294901760
        %1119 = vmatpush1.msra.mxu0 %v1118
        %1120 = vmatprep.subr.mxu0 0.0
        %v1121 = vand.u32 %v1001, 4294901760
        %v1122 = vsub.f32 %v1001, %v1121
        %v1123 = vand.u32 %v1122, 4294901760
        %v1124 = vsub.f32 %v1122, %v1123
        %v1125 = vand.u32 %v1124, 4294901760
        %1126 = vmatpush1.msra.mxu0 %v1125
        %1127 = vmatprep.subr.mxu0 0.0
        %v1128 = vand.u32 %v1002, 4294901760
        %v1129 = vsub.f32 %v1002, %v1128
        %v1130 = vand.u32 %v1129, 4294901760
        %v1131 = vsub.f32 %v1129, %v1130
        %v1132 = vand.u32 %v1131, 4294901760
        %1133 = vmatpush1.msra.mxu0 %v1132
        %1134 = vmatprep.subr.mxu0 0.0
        %v1135 = vand.u32 %v1003, 4294901760
        %v1136 = vsub.f32 %v1003, %v1135
        %v1137 = vand.u32 %v1136, 4294901760
        %v1138 = vsub.f32 %v1136, %v1137
        %v1139 = vand.u32 %v1138, 4294901760
        %1140 = vmatpush1.msra.mxu0 %v1139
        %1141 = vmatprep.subr.mxu0 0.0
        %v1142 = vand.u32 %v1004, 4294901760
        %v1143 = vsub.f32 %v1004, %v1142
        %v1144 = vand.u32 %v1143, 4294901760
        %v1145 = vsub.f32 %v1143, %v1144
        %v1146 = vand.u32 %v1145, 4294901760
        %1147 = vmatpush1.msra.mxu0 %v1146
        %1148 = vmatprep.subr.mxu0 0.0
        %v1149 = vand.u32 %v1005, 4294901760
        %v1150 = vsub.f32 %v1005, %v1149
        %v1151 = vand.u32 %v1150, 4294901760
        %v1152 = vsub.f32 %v1150, %v1151
        %v1153 = vand.u32 %v1152, 4294901760
        %1154 = vmatpush1.msra.mxu0 %v1153
        %1155 = vmatprep.subr.mxu0 0.0
        %v1156 = vand.u32 %v1006, 4294901760
        %v1157 = vsub.f32 %v1006, %v1156
        %v1158 = vand.u32 %v1157, 4294901760
        %v1159 = vsub.f32 %v1157, %v1158
        %v1160 = vand.u32 %v1159, 4294901760
        %1161 = vmatpush1.msra.mxu0 %v1160
        %1162 = vmatprep.subr.mxu0 0.0
        %v1163 = vand.u32 %v1007, 4294901760
        %v1164 = vsub.f32 %v1007, %v1163
        %v1165 = vand.u32 %v1164, 4294901760
        %v1166 = vsub.f32 %v1164, %v1165
        %v1167 = vand.u32 %v1166, 4294901760
        %1168 = vmatpush1.msra.mxu0 %v1167
        %1169 = vmatprep.subr.mxu0 0.0
        %v1170 = vand.u32 %v1008, 4294901760
        %v1171 = vsub.f32 %v1008, %v1170
        %v1172 = vand.u32 %v1171, 4294901760
        %v1173 = vsub.f32 %v1171, %v1172
        %v1174 = vand.u32 %v1173, 4294901760
        %1175 = vmatpush1.msra.mxu0 %v1174
        %1176 = vmatprep.subr.mxu0 0.0
        %v1177 = vand.u32 %v1009, 4294901760
        %v1178 = vsub.f32 %v1009, %v1177
        %v1179 = vand.u32 %v1178, 4294901760
        %v1180 = vsub.f32 %v1178, %v1179
        %v1181 = vand.u32 %v1180, 4294901760
        %1182 = vmatpush1.msra.mxu0 %v1181
        %1183 = vmatprep.subr.mxu0 0.0
        %v1184 = vand.u32 %v1010, 4294901760
        %v1185 = vsub.f32 %v1010, %v1184
        %v1186 = vand.u32 %v1185, 4294901760
        %v1187 = vsub.f32 %v1185, %v1186
        %v1188 = vand.u32 %v1187, 4294901760
        %1189 = vmatpush1.msra.mxu0 %v1188
        %1190 = vmatprep.subr.mxu0 0.0
        %v1191 = vand.u32 %v1011, 4294901760
        %v1192 = vsub.f32 %v1011, %v1191
        %v1193 = vand.u32 %v1192, 4294901760
        %v1194 = vsub.f32 %v1192, %v1193
        %v1195 = vand.u32 %v1194, 4294901760
        %1196 = vmatpush1.msra.mxu0 %v1195
        %1197 = vmatprep.subr.mxu0 0.0
        %v1198 = vand.u32 %v1012, 4294901760
        %v1199 = vsub.f32 %v1012, %v1198
        %v1200 = vand.u32 %v1199, 4294901760
        %v1201 = vsub.f32 %v1199, %v1200
        %v1202 = vand.u32 %v1201, 4294901760
        %1203 = vmatpush1.msra.mxu0 %v1202
        %1204 = vmatprep.subr.mxu0 0.0
        %v1205 = vand.u32 %v1013, 4294901760
        %v1206 = vsub.f32 %v1013, %v1205
        %v1207 = vand.u32 %v1206, 4294901760
        %v1208 = vsub.f32 %v1206, %v1207
        %v1209 = vand.u32 %v1208, 4294901760
        %1210 = vmatpush1.msra.mxu0 %v1209
        %1211 = vmatprep.subr.mxu0 0.0
        %v1212 = vand.u32 %v1014, 4294901760
        %v1213 = vsub.f32 %v1014, %v1212
        %v1214 = vand.u32 %v1213, 4294901760
        %v1215 = vsub.f32 %v1213, %v1214
        %v1216 = vand.u32 %v1215, 4294901760
        %1217 = vmatpush1.msra.mxu0 %v1216
        %1218 = vmatprep.subr.mxu0 0.0
        %1219 = vmatpush1.msra.mxu0 0.0
        %1220 = vmatprep.subr.mxu0 0.0
        %1221 = vmatpush1.msra.mxu0 0.0
        %1222 = vmatprep.subr.mxu0 0.0
        %1223 = vmatpush1.msra.mxu0 0.0
        %1224 = vmatprep.subr.mxu0 0.0
        %1225 = vmatpush1.msra.mxu0 0.0
        %1226 = vmatprep.subr.mxu0 0.0
        %1227 = vmatpush1.msra.mxu0 0.0
        %1228 = vmatprep.subr.mxu0 0.0
        %1229 = vmatpush1.msra.mxu0 0.0
        %1230 = vmatprep.subr.mxu0 0.0
        %1231 = vmatpush1.msra.mxu0 0.0
        %1232 = vmatprep.subr.mxu0 0.0
        %1233 = vmatpush1.msra.mxu0 0.0
        %1234 = vmatprep.subr.mxu0 0.0
        %1235 = vmatpush1.msra.mxu0 0.0
        %1236 = vmatprep.subr.mxu0 0.0
        %1237 = vmatpush1.msra.mxu0 0.0
        %1238 = vmatprep.subr.mxu0 0.0
        %1239 = vmatpush1.msra.mxu0 0.0
        %1240 = vmatprep.subr.mxu0 0.0
        %1241 = vmatpush1.msra.mxu0 0.0
        %1242 = vmatprep.subr.mxu0 0.0
        %1243 = vmatpush1.msra.mxu0 0.0
        %1244 = vmatprep.subr.mxu0 0.0
        %1245 = vmatpush1.msra.mxu0 0.0
        %1246 = vmatprep.subr.mxu0 0.0
        %1247 = vmatpush1.msra.mxu0 0.0
        %1248 = vmatprep.subr.mxu0 0.0
        %1249 = vmatpush1.msra.mxu0 0.0
        %1250 = vmatprep.mubr.f32.mxu0 0.0
        %v1251 = vand.u32 %v997, 4294901760
        %1252 = vmatmul.mubr.f32.gmra.mrb[0].mxu0 %v1251
        %v1253 = vpop.f32.mrb[0].mxu0
        %v1254 = vadd.f32 %v1103, %v1253
        %v1255 = vpop.f32.mrb[0].mxu0
        %1256 = vdwg.mxu0
        %1257 = vmatprep.subr.mxu0 0.0
        %v1258 = vand.u32 %v999, 4294901760
        %v1259 = vsub.f32 %v999, %v1258
        %1260 = vmatpush1.msra.mxu0 %v1259
        %1261 = vmatprep.subr.mxu0 0.0
        %v1262 = vand.u32 %v1000, 4294901760
        %v1263 = vsub.f32 %v1000, %v1262
        %1264 = vmatpush1.msra.mxu0 %v1263
        %1265 = vmatprep.subr.mxu0 0.0
        %v1266 = vand.u32 %v1001, 4294901760
        %v1267 = vsub.f32 %v1001, %v1266
        %1268 = vmatpush1.msra.mxu0 %v1267
        %1269 = vmatprep.subr.mxu0 0.0
        %v1270 = vand.u32 %v1002, 4294901760
        %v1271 = vsub.f32 %v1002, %v1270
        %1272 = vmatpush1.msra.mxu0 %v1271
        %1273 = vmatprep.subr.mxu0 0.0
        %v1274 = vand.u32 %v1003, 4294901760
        %v1275 = vsub.f32 %v1003, %v1274
        %1276 = vmatpush1.msra.mxu0 %v1275
        %1277 = vmatprep.subr.mxu0 0.0
        %v1278 = vand.u32 %v1004, 4294901760
        %v1279 = vsub.f32 %v1004, %v1278
        %1280 = vmatpush1.msra.mxu0 %v1279
        %1281 = vmatprep.subr.mxu0 0.0
        %v1282 = vand.u32 %v1005, 4294901760
        %v1283 = vsub.f32 %v1005, %v1282
        %1284 = vmatpush1.msra.mxu0 %v1283
        %1285 = vmatprep.subr.mxu0 0.0
        %v1286 = vand.u32 %v1006, 4294901760
        %v1287 = vsub.f32 %v1006, %v1286
        %1288 = vmatpush1.msra.mxu0 %v1287
        %1289 = vmatprep.subr.mxu0 0.0
        %v1290 = vand.u32 %v1007, 4294901760
        %v1291 = vsub.f32 %v1007, %v1290
        %1292 = vmatpush1.msra.mxu0 %v1291
        %1293 = vmatprep.subr.mxu0 0.0
        %v1294 = vand.u32 %v1008, 4294901760
        %v1295 = vsub.f32 %v1008, %v1294
        %1296 = vmatpush1.msra.mxu0 %v1295
        %1297 = vmatprep.subr.mxu0 0.0
        %v1298 = vand.u32 %v1009, 4294901760
        %v1299 = vsub.f32 %v1009, %v1298
        %1300 = vmatpush1.msra.mxu0 %v1299
        %1301 = vmatprep.subr.mxu0 0.0
        %v1302 = vand.u32 %v1010, 4294901760
        %v1303 = vsub.f32 %v1010, %v1302
        %1304 = vmatpush1.msra.mxu0 %v1303
        %1305 = vmatprep.subr.mxu0 0.0
        %v1306 = vand.u32 %v1011, 4294901760
        %v1307 = vsub.f32 %v1011, %v1306
        %1308 = vmatpush1.msra.mxu0 %v1307
        %1309 = vmatprep.subr.mxu0 0.0
        %v1310 = vand.u32 %v1012, 4294901760
        %v1311 = vsub.f32 %v1012, %v1310
        %1312 = vmatpush1.msra.mxu0 %v1311
        %1313 = vmatprep.subr.mxu0 0.0
        %v1314 = vand.u32 %v1013, 4294901760
        %v1315 = vsub.f32 %v1013, %v1314
        %1316 = vmatpush1.msra.mxu0 %v1315
        %1317 = vmatprep.subr.mxu0 0.0
        %v1318 = vand.u32 %v1014, 4294901760
        %v1319 = vsub.f32 %v1014, %v1318
        %1320 = vmatpush1.msra.mxu0 %v1319
        %1321 = vmatprep.subr.mxu0 0.0
        %1322 = vmatpush1.msra.mxu0 0.0
        %1323 = vmatprep.subr.mxu0 0.0
        %1324 = vmatpush1.msra.mxu0 0.0
        %1325 = vmatprep.subr.mxu0 0.0
        %1326 = vmatpush1.msra.mxu0 0.0
        %1327 = vmatprep.subr.mxu0 0.0
        %1328 = vmatpush1.msra.mxu0 0.0
        %1329 = vmatprep.subr.mxu0 0.0
        %1330 = vmatpush1.msra.mxu0 0.0
        %1331 = vmatprep.subr.mxu0 0.0
        %1332 = vmatpush1.msra.mxu0 0.0
        %1333 = vmatprep.subr.mxu0 0.0
        %1334 = vmatpush1.msra.mxu0 0.0
        %1335 = vmatprep.subr.mxu0 0.0
        %1336 = vmatpush1.msra.mxu0 0.0
        %1337 = vmatprep.subr.mxu0 0.0
        %1338 = vmatpush1.msra.mxu0 0.0
        %1339 = vmatprep.subr.mxu0 0.0
        %1340 = vmatpush1.msra.mxu0 0.0
        %1341 = vmatprep.subr.mxu0 0.0
        %1342 = vmatpush1.msra.mxu0 0.0
        %1343 = vmatprep.subr.mxu0 0.0
        %1344 = vmatpush1.msra.mxu0 0.0
        %1345 = vmatprep.subr.mxu0 0.0
        %1346 = vmatpush1.msra.mxu0 0.0
        %1347 = vmatprep.subr.mxu0 0.0
        %1348 = vmatpush1.msra.mxu0 0.0
        %1349 = vmatprep.subr.mxu0 0.0
        %1350 = vmatpush1.msra.mxu0 0.0
        %1351 = vmatprep.subr.mxu0 0.0
        %1352 = vmatpush1.msra.mxu0 0.0
        %1353 = vmatprep.mubr.f32.mxu0 0.0
        %v1354 = vand.u32 %v997, 4294901760
        %v1355 = vsub.f32 %v997, %v1354
        %1356 = vmatmul.mubr.f32.gmra.mrb[0].mxu0 %v1355
        %v1357 = vpop.f32.mrb[0].mxu0
        %v1358 = vadd.f32 %v1254, %v1357
        %v1359 = vpop.f32.mrb[0].mxu0
        %1360 = vdwg.mxu0
        %1361 = vmatprep.subr.mxu0 0.0
        %v1362 = vand.u32 %v999, 4294901760
        %1363 = vmatpush1.msra.mxu0 %v1362
        %1364 = vmatprep.subr.mxu0 0.0
        %v1365 = vand.u32 %v1000, 4294901760
        %1366 = vmatpush1.msra.mxu0 %v1365
        %1367 = vmatprep.subr.mxu0 0.0
        %v1368 = vand.u32 %v1001, 4294901760
        %1369 = vmatpush1.msra.mxu0 %v1368
        %1370 = vmatprep.subr.mxu0 0.0
        %v1371 = vand.u32 %v1002, 4294901760
        %1372 = vmatpush1.msra.mxu0 %v1371
        %1373 = vmatprep.subr.mxu0 0.0
        %v1374 = vand.u32 %v1003, 4294901760
        %1375 = vmatpush1.msra.mxu0 %v1374
        %1376 = vmatprep.subr.mxu0 0.0
        %v1377 = vand.u32 %v1004, 4294901760
        %1378 = vmatpush1.msra.mxu0 %v1377
        %1379 = vmatprep.subr.mxu0 0.0
        %v1380 = vand.u32 %v1005, 4294901760
        %1381 = vmatpush1.msra.mxu0 %v1380
        %1382 = vmatprep.subr.mxu0 0.0
        %v1383 = vand.u32 %v1006, 4294901760
        %1384 = vmatpush1.msra.mxu0 %v1383
        %1385 = vmatprep.subr.mxu0 0.0
        %v1386 = vand.u32 %v1007, 4294901760
        %1387 = vmatpush1.msra.mxu0 %v1386
        %1388 = vmatprep.subr.mxu0 0.0
        %v1389 = vand.u32 %v1008, 4294901760
        %1390 = vmatpush1.msra.mxu0 %v1389
        %1391 = vmatprep.subr.mxu0 0.0
        %v1392 = vand.u32 %v1009, 4294901760
        %1393 = vmatpush1.msra.mxu0 %v1392
        %1394 = vmatprep.subr.mxu0 0.0
        %v1395 = vand.u32 %v1010, 4294901760
        %1396 = vmatpush1.msra.mxu0 %v1395
        %1397 = vmatprep.subr.mxu0 0.0
        %v1398 = vand.u32 %v1011, 4294901760
        %1399 = vmatpush1.msra.mxu0 %v1398
        %1400 = vmatprep.subr.mxu0 0.0
        %v1401 = vand.u32 %v1012, 4294901760
        %1402 = vmatpush1.msra.mxu0 %v1401
        %1403 = vmatprep.subr.mxu0 0.0
        %v1404 = vand.u32 %v1013, 4294901760
        %1405 = vmatpush1.msra.mxu0 %v1404
        %1406 = vmatprep.subr.mxu0 0.0
        %v1407 = vand.u32 %v1014, 4294901760
        %1408 = vmatpush1.msra.mxu0 %v1407
        %1409 = vmatprep.subr.mxu0 0.0
        %1410 = vmatpush1.msra.mxu0 0.0
        %1411 = vmatprep.subr.mxu0 0.0
        %1412 = vmatpush1.msra.mxu0 0.0
        %1413 = vmatprep.subr.mxu0 0.0
        %1414 = vmatpush1.msra.mxu0 0.0
        %1415 = vmatprep.subr.mxu0 0.0
        %1416 = vmatpush1.msra.mxu0 0.0
        %1417 = vmatprep.subr.mxu0 0.0
        %1418 = vmatpush1.msra.mxu0 0.0
        %1419 = vmatprep.subr.mxu0 0.0
        %1420 = vmatpush1.msra.mxu0 0.0
        %1421 = vmatprep.subr.mxu0 0.0
        %1422 = vmatpush1.msra.mxu0 0.0
        %1423 = vmatprep.subr.mxu0 0.0
        %1424 = vmatpush1.msra.mxu0 0.0
        %1425 = vmatprep.subr.mxu0 0.0
        %1426 = vmatpush1.msra.mxu0 0.0
        %1427 = vmatprep.subr.mxu0 0.0
        %1428 = vmatpush1.msra.mxu0 0.0
        %1429 = vmatprep.subr.mxu0 0.0
        %1430 = vmatpush1.msra.mxu0 0.0
        %1431 = vmatprep.subr.mxu0 0.0
        %1432 = vmatpush1.msra.mxu0 0.0
        %1433 = vmatprep.subr.mxu0 0.0
        %1434 = vmatpush1.msra.mxu0 0.0
        %1435 = vmatprep.subr.mxu0 0.0
        %1436 = vmatpush1.msra.mxu0 0.0
        %1437 = vmatprep.subr.mxu0 0.0
        %1438 = vmatpush1.msra.mxu0 0.0
        %1439 = vmatprep.subr.mxu0 0.0
        %1440 = vmatpush1.msra.mxu0 0.0
        %1441 = vmatprep.mubr.f32.mxu0 0.0
        %v1442 = vand.u32 %v997, 4294901760
        %v1443 = vsub.f32 %v997, %v1442
        %v1444 = vand.u32 %v1443, 4294901760
        %1445 = vmatmul.mubr.f32.gmra.mrb[0].mxu0 %v1444
        %v1446 = vpop.f32.mrb[0].mxu0
        %v1447 = vadd.f32 %v1358, %v1446
        %v1448 = vpop.f32.mrb[0].mxu0
        %1449 = vdwg.mxu0
        %1450 = vmatprep.subr.mxu0 0.0
        %v1451 = vand.u32 %v999, 4294901760
        %v1452 = vsub.f32 %v999, %v1451
        %v1453 = vand.u32 %v1452, 4294901760
        %1454 = vmatpush1.msra.mxu0 %v1453
        %1455 = vmatprep.subr.mxu0 0.0
        %v1456 = vand.u32 %v1000, 4294901760
        %v1457 = vsub.f32 %v1000, %v1456
        %v1458 = vand.u32 %v1457, 4294901760
        %1459 = vmatpush1.msra.mxu0 %v1458
        %1460 = vmatprep.subr.mxu0 0.0
        %v1461 = vand.u32 %v1001, 4294901760
        %v1462 = vsub.f32 %v1001, %v1461
        %v1463 = vand.u32 %v1462, 4294901760
        %1464 = vmatpush1.msra.mxu0 %v1463
        %1465 = vmatprep.subr.mxu0 0.0
        %v1466 = vand.u32 %v1002, 4294901760
        %v1467 = vsub.f32 %v1002, %v1466
        %v1468 = vand.u32 %v1467, 4294901760
        %1469 = vmatpush1.msra.mxu0 %v1468
        %1470 = vmatprep.subr.mxu0 0.0
        %v1471 = vand.u32 %v1003, 4294901760
        %v1472 = vsub.f32 %v1003, %v1471
        %v1473 = vand.u32 %v1472, 4294901760
        %1474 = vmatpush1.msra.mxu0 %v1473
        %1475 = vmatprep.subr.mxu0 0.0
        %v1476 = vand.u32 %v1004, 4294901760
        %v1477 = vsub.f32 %v1004, %v1476
        %v1478 = vand.u32 %v1477, 4294901760
        %1479 = vmatpush1.msra.mxu0 %v1478
        %1480 = vmatprep.subr.mxu0 0.0
        %v1481 = vand.u32 %v1005, 4294901760
        %v1482 = vsub.f32 %v1005, %v1481
        %v1483 = vand.u32 %v1482, 4294901760
        %1484 = vmatpush1.msra.mxu0 %v1483
        %1485 = vmatprep.subr.mxu0 0.0
        %v1486 = vand.u32 %v1006, 4294901760
        %v1487 = vsub.f32 %v1006, %v1486
        %v1488 = vand.u32 %v1487, 4294901760
        %1489 = vmatpush1.msra.mxu0 %v1488
        %1490 = vmatprep.subr.mxu0 0.0
        %v1491 = vand.u32 %v1007, 4294901760
        %v1492 = vsub.f32 %v1007, %v1491
        %v1493 = vand.u32 %v1492, 4294901760
        %1494 = vmatpush1.msra.mxu0 %v1493
        %1495 = vmatprep.subr.mxu0 0.0
        %v1496 = vand.u32 %v1008, 4294901760
        %v1497 = vsub.f32 %v1008, %v1496
        %v1498 = vand.u32 %v1497, 4294901760
        %1499 = vmatpush1.msra.mxu0 %v1498
        %1500 = vmatprep.subr.mxu0 0.0
        %v1501 = vand.u32 %v1009, 4294901760
        %v1502 = vsub.f32 %v1009, %v1501
        %v1503 = vand.u32 %v1502, 4294901760
        %1504 = vmatpush1.msra.mxu0 %v1503
        %1505 = vmatprep.subr.mxu0 0.0
        %v1506 = vand.u32 %v1010, 4294901760
        %v1507 = vsub.f32 %v1010, %v1506
        %v1508 = vand.u32 %v1507, 4294901760
        %1509 = vmatpush1.msra.mxu0 %v1508
        %1510 = vmatprep.subr.mxu0 0.0
        %v1511 = vand.u32 %v1011, 4294901760
        %v1512 = vsub.f32 %v1011, %v1511
        %v1513 = vand.u32 %v1512, 4294901760
        %1514 = vmatpush1.msra.mxu0 %v1513
        %1515 = vmatprep.subr.mxu0 0.0
        %v1516 = vand.u32 %v1012, 4294901760
        %v1517 = vsub.f32 %v1012, %v1516
        %v1518 = vand.u32 %v1517, 4294901760
        %1519 = vmatpush1.msra.mxu0 %v1518
        %1520 = vmatprep.subr.mxu0 0.0
        %v1521 = vand.u32 %v1013, 4294901760
        %v1522 = vsub.f32 %v1013, %v1521
        %v1523 = vand.u32 %v1522, 4294901760
        %1524 = vmatpush1.msra.mxu0 %v1523
        %1525 = vmatprep.subr.mxu0 0.0
        %v1526 = vand.u32 %v1014, 4294901760
        %v1527 = vsub.f32 %v1014, %v1526
        %v1528 = vand.u32 %v1527, 4294901760
        %1529 = vmatpush1.msra.mxu0 %v1528
        %1530 = vmatprep.subr.mxu0 0.0
        %1531 = vmatpush1.msra.mxu0 0.0
        %1532 = vmatprep.subr.mxu0 0.0
        %1533 = vmatpush1.msra.mxu0 0.0
        %1534 = vmatprep.subr.mxu0 0.0
        %1535 = vmatpush1.msra.mxu0 0.0
        %1536 = vmatprep.subr.mxu0 0.0
        %1537 = vmatpush1.msra.mxu0 0.0
        %1538 = vmatprep.subr.mxu0 0.0
        %1539 = vmatpush1.msra.mxu0 0.0
        %1540 = vmatprep.subr.mxu0 0.0
        %1541 = vmatpush1.msra.mxu0 0.0
        %1542 = vmatprep.subr.mxu0 0.0
        %1543 = vmatpush1.msra.mxu0 0.0
        %1544 = vmatprep.subr.mxu0 0.0
        %1545 = vmatpush1.msra.mxu0 0.0
        %1546 = vmatprep.subr.mxu0 0.0
        %1547 = vmatpush1.msra.mxu0 0.0
        %1548 = vmatprep.subr.mxu0 0.0
        %1549 = vmatpush1.msra.mxu0 0.0
        %1550 = vmatprep.subr.mxu0 0.0
        %1551 = vmatpush1.msra.mxu0 0.0
        %1552 = vmatprep.subr.mxu0 0.0
        %1553 = vmatpush1.msra.mxu0 0.0
        %1554 = vmatprep.subr.mxu0 0.0
        %1555 = vmatpush1.msra.mxu0 0.0
        %1556 = vmatprep.subr.mxu0 0.0
        %1557 = vmatpush1.msra.mxu0 0.0
        %1558 = vmatprep.subr.mxu0 0.0
        %1559 = vmatpush1.msra.mxu0 0.0
        %1560 = vmatprep.subr.mxu0 0.0
        %1561 = vmatpush1.msra.mxu0 0.0
        %1562 = vmatprep.mubr.f32.mxu0 0.0
        %v1563 = vand.u32 %v997, 4294901760
        %1564 = vmatmul.mubr.f32.gmra.mrb[0].mxu0 %v1563
        %v1565 = vpop.f32.mrb[0].mxu0
        %v1566 = vadd.f32 %v1447, %v1565
        %v1567 = vpop.f32.mrb[0].mxu0
        %1568 = vdwg.mxu0
        %1569 = vmatprep.subr.mxu0 0.0
        %v1570 = vand.u32 %v999, 4294901760
        %1571 = vmatpush1.msra.mxu0 %v1570
        %1572 = vmatprep.subr.mxu0 0.0
        %v1573 = vand.u32 %v1000, 4294901760
        %1574 = vmatpush1.msra.mxu0 %v1573
        %1575 = vmatprep.subr.mxu0 0.0
        %v1576 = vand.u32 %v1001, 4294901760
        %1577 = vmatpush1.msra.mxu0 %v1576
        %1578 = vmatprep.subr.mxu0 0.0
        %v1579 = vand.u32 %v1002, 4294901760
        %1580 = vmatpush1.msra.mxu0 %v1579
        %1581 = vmatprep.subr.mxu0 0.0
        %v1582 = vand.u32 %v1003, 4294901760
        %1583 = vmatpush1.msra.mxu0 %v1582
        %1584 = vmatprep.subr.mxu0 0.0
        %v1585 = vand.u32 %v1004, 4294901760
        %1586 = vmatpush1.msra.mxu0 %v1585
        %1587 = vmatprep.subr.mxu0 0.0
        %v1588 = vand.u32 %v1005, 4294901760
        %1589 = vmatpush1.msra.mxu0 %v1588
        %1590 = vmatprep.subr.mxu0 0.0
        %v1591 = vand.u32 %v1006, 4294901760
        %1592 = vmatpush1.msra.mxu0 %v1591
        %1593 = vmatprep.subr.mxu0 0.0
        %v1594 = vand.u32 %v1007, 4294901760
        %1595 = vmatpush1.msra.mxu0 %v1594
        %1596 = vmatprep.subr.mxu0 0.0
        %v1597 = vand.u32 %v1008, 4294901760
        %1598 = vmatpush1.msra.mxu0 %v1597
        %1599 = vmatprep.subr.mxu0 0.0
        %v1600 = vand.u32 %v1009, 4294901760
        %1601 = vmatpush1.msra.mxu0 %v1600
        %1602 = vmatprep.subr.mxu0 0.0
        %v1603 = vand.u32 %v1010, 4294901760
        %1604 = vmatpush1.msra.mxu0 %v1603
        %1605 = vmatprep.subr.mxu0 0.0
        %v1606 = vand.u32 %v1011, 4294901760
        %1607 = vmatpush1.msra.mxu0 %v1606
        %1608 = vmatprep.subr.mxu0 0.0
        %v1609 = vand.u32 %v1012, 4294901760
        %1610 = vmatpush1.msra.mxu0 %v1609
        %1611 = vmatprep.subr.mxu0 0.0
        %v1612 = vand.u32 %v1013, 4294901760
        %1613 = vmatpush1.msra.mxu0 %v1612
        %1614 = vmatprep.subr.mxu0 0.0
        %v1615 = vand.u32 %v1014, 4294901760
        %1616 = vmatpush1.msra.mxu0 %v1615
        %1617 = vmatprep.subr.mxu0 0.0
        %1618 = vmatpush1.msra.mxu0 0.0
        %1619 = vmatprep.subr.mxu0 0.0
        %1620 = vmatpush1.msra.mxu0 0.0
        %1621 = vmatprep.subr.mxu0 0.0
        %1622 = vmatpush1.msra.mxu0 0.0
        %1623 = vmatprep.subr.mxu0 0.0
        %1624 = vmatpush1.msra.mxu0 0.0
        %1625 = vmatprep.subr.mxu0 0.0
        %1626 = vmatpush1.msra.mxu0 0.0
        %1627 = vmatprep.subr.mxu0 0.0
        %1628 = vmatpush1.msra.mxu0 0.0
        %1629 = vmatprep.subr.mxu0 0.0
        %1630 = vmatpush1.msra.mxu0 0.0
        %1631 = vmatprep.subr.mxu0 0.0
        %1632 = vmatpush1.msra.mxu0 0.0
        %1633 = vmatprep.subr.mxu0 0.0
        %1634 = vmatpush1.msra.mxu0 0.0
        %1635 = vmatprep.subr.mxu0 0.0
        %1636 = vmatpush1.msra.mxu0 0.0
        %1637 = vmatprep.subr.mxu0 0.0
        %1638 = vmatpush1.msra.mxu0 0.0
        %1639 = vmatprep.subr.mxu0 0.0
        %1640 = vmatpush1.msra.mxu0 0.0
        %1641 = vmatprep.subr.mxu0 0.0
        %1642 = vmatpush1.msra.mxu0 0.0
        %1643 = vmatprep.subr.mxu0 0.0
        %1644 = vmatpush1.msra.mxu0 0.0
        %1645 = vmatprep.subr.mxu0 0.0
        %1646 = vmatpush1.msra.mxu0 0.0
        %1647 = vmatprep.subr.mxu0 0.0
        %1648 = vmatpush1.msra.mxu0 0.0
        %1649 = vmatprep.mubr.f32.mxu0 0.0
        %v1650 = vand.u32 %v997, 4294901760
        %1651 = vmatmul.mubr.f32.gmra.mrb[0].mxu0 %v1650
        %v1652 = vpop.f32.mrb[0].mxu0
        %v1653 = vadd.f32 %v1566, %v1652
        %v1654 = vpop.f32.mrb[0].mxu0
        %1655 = vdwg.mxu0
        %v1656 = vadd.f32 %v998, %v1653
        %1657 = vst [vmem:[#allocation2] sm:$0xff] %v1656
        %v1658 = vld [vmem:[#allocation2] sm:$0xff]
        %1659 = vadd.xlane.f32.xlu0 %v1658
        %v1660 = vpop.xlane.xlu0 %1659
        %v1661 = vmul.f32 %v1660, 0.03125
        %v1662 = vmul.f32 %v1658, %v1658
        %1663 = vadd.xlane.f32.xlu0 %v1662
        %v1664 = vpop.xlane.xlu0 %1663
        %v1665 = vmul.f32 %v1664, 0.03125
        %v1666 = vmul.f32 %v1661, %v1661
        %v1667 = vsub.f32 %v1665, %v1666
        %v1668 = vmax.f32 %v1667, 0.0
        %v1669 = vsub.f32 %v1658, %v1661
        %v1670 = vadd.f32 %v1668, 1e-05
        %v1671 = vrsqrt.pop %v1670
        %v1672 = vmul.f32 %v1669, %v1671
        %v1673 = vld [vmem:[%s5] sm:$0x1]
        %v1675 = vlaneseq
        %v1676 = vshrl.u32 %v1675, 7
        %v1677 = vsub.s32 0, %v1676
        %v1678 = vrot.slane %v1673, %v1677
        %v1680 = vmul.f32 %v1672, %v1678
        %v1681 = vld [vmem:[%s6] sm:$0x1]
        %v1683 = vlaneseq
        %v1684 = vshrl.u32 %v1683, 7
        %v1685 = vsub.s32 0, %v1684
        %v1686 = vrot.slane %v1681, %v1685
        %v1688 = vadd.f32 %v1680, %v1686
        %1689 = vst [vmem:[%s322] sm:$0xff] %v1688
        %s1690 = sand.u32 %s185, 1
        %s1691 = scalar_lea.sflag [#allocation5], %s1690
        %s1692 = sand.u32 %s185, 1
        %s1693 = smul.addr %s1692, 8
        %s1694 = scalar_lea.vmem [#allocation9], %s1693
        // Predicated region
        $region61: #{tpu_custom_call.1} parent=47 // pred_check
          %p1695 = pneg %p195
        $region62: #{tpu_custom_call.1} parent=47 // pred_check_branch
          %1697 = sbr.rel (%p1695) target = $region64
        $region63: #{tpu_custom_call.1} parent=47 // pred_region
          %s1699 = ssub.s32 128, 128
          %1700 = vsyncadd %s1691, %s1699
          %s1701 = smul.addr %s25, 128
          %s1702 = scalar_lea.hbm %s7, %s1701
          %s1704 = sshll.u32 %s1694, 4
          %s1705 = int_to_ptr.vmem [resolvable:$true] %s1704
          %1707 = dma.vmem_to_hbm [thread:$0]  %s1705, 128, %s1702, %s1691
        $region64: #{tpu_custom_call.1} parent=47 // pred_fallthru
          _
      $region48: #{tpu_custom_call.1} parent=5 // pred_fallthru
        _
      %p1708 = scmp.le.s32.totalorder 2, %s20
      // Predicated region
      $region65: #{tpu_custom_call.1} parent=5 // pred_check
        %p1709 = pneg %p1708
      $region66: #{tpu_custom_call.1} parent=5 // pred_check_branch
        %1711 = sbr.rel (%p1709) target = $region68
      $region67: #{tpu_custom_call.1} parent=5 // pred_region
        %s1712 = ssub.s32 %s20, 2
        // Predicated region
        $region69: #{tpu_custom_call.1} parent=67 // pred_check
          %p1713 = pneg %p201
        $region70: #{tpu_custom_call.1} parent=67 // pred_check_branch
          %1715 = sbr.rel (%p1713) target = $region72
        $region71: #{tpu_custom_call.1} parent=67 // pred_region
          %s1716 = sand.u32 %s186, 1
          %s1717 = scalar_lea.sflag [#allocation5], %s1716
          %s1718 = sand.u32 %s186, 1
          %s1719 = smul.addr %s1718, 8
          %s1720 = scalar_lea.vmem [#allocation9], %s1719
          %1721 = dma.done %s1717, 128
        $region72: #{tpu_custom_call.1} parent=67 // pred_fallthru
          _
      $region68: #{tpu_custom_call.1} parent=5 // pred_fallthru
        _
    $region6: #{tpu_custom_call.1} parent=1 // loop_footer
      %s24 = sadd.s32 1, %s20
    $region7: #{tpu_custom_call.1} parent=1 // loop_footer_branch
      %19 = sbr.rel target = $region3
    $region8: #{tpu_custom_call.1} parent=1 // loop_exit
      _
    %1722 = vsyncpa [#allocation4], 1
    %s1723 = scalar_lea.sflag [#allocation4], 1
    %1724 = vsyncpa %s1723, 1
    %1725 = vsyncpa [#allocation7], 1
    %1726 = vsyncpa [#allocation5], 1
    %s1727 = scalar_lea.sflag [#allocation5], 1
    %1728 = vsyncpa %s1727, 1

</llo_original>
